<compile_context>
chip_gen: v5e
topology: v5e:2x2
jax: 0.10.0
libtpu: 0.0.40
codegen_flags: <defaults>
</compile_context>

<pallas_src>
import functools

import jax
import jax.numpy as jnp
from jax.experimental import pallas as pl
from jax.experimental.pallas import tpu as pltpu


def _round_up(x: int, m: int) -> int:
    return ((x + m - 1) // m) * m


def _make_kernel(coeff: float):
    def kernel(x_ref, w1_ref, b1_ref, w2_ref, b2_ref, w3_ref, b3_ref, probs_ref):
        # Linear 1 + ReLU (Dropout = identity in eval mode). bf16 operands, f32 accum.
        h1 = jnp.dot(x_ref[...], w1_ref[...],
                     preferred_element_type=jnp.float32) + b1_ref[...]
        h1 = jnp.maximum(h1, 0.0).astype(w2_ref.dtype)
        # Linear 2 + ReLU.
        h2 = jnp.dot(h1, w2_ref[...],
                     preferred_element_type=jnp.float32) + b2_ref[...]
        h2 = jnp.maximum(h2, 0.0).astype(w3_ref.dtype)
        # Linear 3 -> logits (padded lanes carry a -1e30 bias -> probability 0).
        logits = jnp.dot(h2, w3_ref[...],
                         preferred_element_type=jnp.float32) + b3_ref[...]

        # TorchLeakySoftmax: p_i = exp(x_i) / (sum_k exp(x_k) + coeff).
        # Shift by max(row_max, 0): mathematically identical to the reference,
        # but exp(-shift) cannot overflow when all logits are strongly negative.
        m = jnp.max(logits, axis=-1, keepdims=True)
        shift = jnp.maximum(m, 0.0)
        num = jnp.exp(logits - shift)
        den = jnp.sum(num, axis=-1, keepdims=True)
        total = den + coeff * jnp.exp(-shift)
        inv = pl.reciprocal(total, approx=True)   # EUP slot, ~free
        probs_ref[...] = num * inv

    return kernel


@functools.partial(jax.jit, static_argnames=("output_dim", "block_batch"))
def classifier_auxiliary_forward(x, w1, b1, w2, b2, w3, b3, *, output_dim,
                                 block_batch=128):
    """x: (batch, in). Weights pre-transposed: w = (in, out), b = (1, out)."""
    batch, in_feature = x.shape
    hidden = w1.shape[1]
    out_pad = _round_up(output_dim, 128)

    # Batch tiling: rows per tile (multiple of 8), pad batch to a tile multiple.
    tb = min(block_batch, _round_up(batch, 8))
    padded_batch = _round_up(batch, tb)

    # bf16 weights / input (halves HBM weight traffic); biases stay f32.
    x_p = x.astype(jnp.bfloat16)
    if padded_batch != batch:
        x_p = jnp.pad(x_p, ((0, padded_batch - batch), (0, 0)))
    w1c = w1.astype(jnp.bfloat16)
    w2c = w2.astype(jnp.bfloat16)
    b1c = b1.reshape(1, hidden).astype(jnp.float32)
    b2c = b2.reshape(1, hidden).astype(jnp.float32)

    # Pad the last layer to a lane-dense (multiple of 128) output slab.
    w3c = jnp.zeros((hidden, out_pad), jnp.bfloat16).at[:, :output_dim].set(
        w3.astype(jnp.bfloat16))
    b3c = jnp.full((1, out_pad), -1e30, jnp.float32).at[:, :output_dim].set(
        b3.reshape(1, output_dim).astype(jnp.float32))

    grid = (padded_batch // tb,)
    row_spec = lambda i: (i, 0)     # activation / output tiles walk the batch
    fixed_spec = lambda i: (0, 0)   # weights stay VMEM-resident across tiles

    cost = pl.CostEstimate(
        flops=2 * padded_batch * (in_feature * hidden + hidden * hidden
                                  + hidden * out_pad),
        transcendentals=padded_batch * (out_pad + 2),
        bytes_accessed=(x_p.size + w1c.size + w2c.size + w3c.size) * 2
                       + (b1c.size + b2c.size + b3c.size) * 4
                       + padded_batch * out_pad * 4,
    )

    probs_pad = pl.pallas_call(
        _make_kernel(float(output_dim)),
        out_shape=jax.ShapeDtypeStruct((padded_batch, out_pad), jnp.float32),
        grid=grid,
        in_specs=[
            pl.BlockSpec((tb, in_feature), row_spec),
            pl.BlockSpec((in_feature, hidden), fixed_spec),
            pl.BlockSpec((1, hidden), fixed_spec),
            pl.BlockSpec((hidden, hidden), fixed_spec),
            pl.BlockSpec((1, hidden), fixed_spec),
            pl.BlockSpec((hidden, out_pad), fixed_spec),
            pl.BlockSpec((1, out_pad), fixed_spec),
        ],
        out_specs=pl.BlockSpec((tb, out_pad), row_spec),
        compiler_params=pltpu.CompilerParams(
            dimension_semantics=("parallel",)),
        cost_estimate=cost,
    )(x_p, w1c, b1c, w2c, b2c, w3c, b3c)

    probs = probs_pad[:batch, :output_dim]
    # mass = clamp(sum(softmax), 0, 1) computed outside the kernel (padded
    # columns contribute exactly 0, so this equals the module's value).
    mass = jnp.clip(jnp.sum(probs, axis=-1, keepdims=True), 0.0, 1.0)
    return probs, mass


def _ref_forward_bf16(x, w1, b1, w2, b2, w3, b3, output_dim):
    # Pure-JAX reference with the SAME bf16 casts / f32 accumulation as the kernel.
    f32 = jnp.float32
    bf16 = jnp.bfloat16
    h1 = jnp.maximum(jnp.dot(x.astype(bf16), w1.astype(bf16),
                             preferred_element_type=f32) + b1, 0.0)
    h2 = jnp.maximum(jnp.dot(h1.astype(bf16), w2.astype(bf16),
                             preferred_element_type=f32) + b2, 0.0)
    logits = jnp.dot(h2.astype(bf16), w3.astype(bf16),
                     preferred_element_type=f32) + b3
    m = jnp.max(logits, axis=-1, keepdims=True)
    shift = jnp.maximum(m, 0.0)
    num = jnp.exp(logits - shift)
    den = jnp.sum(num, axis=-1, keepdims=True)
    sm = num / (den + float(output_dim) * jnp.exp(-shift))
    return sm, jnp.clip(jnp.sum(sm, axis=-1, keepdims=True), 0.0, 1.0)


def _ref_forward_f32(x, w1, b1, w2, b2, w3, b3, output_dim):
    # Full-f32 reference matching the original PyTorch module exactly.
    h1 = jnp.maximum(x @ w1 + b1, 0.0)
    h2 = jnp.maximum(h1 @ w2 + b2, 0.0)
    logits = h2 @ w3 + b3
    m = jnp.max(logits, axis=-1, keepdims=True)
    num = jnp.exp(logits - m)
    den = jnp.sum(num, axis=-1, keepdims=True)
    sm = num / (den + float(output_dim) * jnp.exp(-m))
    return sm, jnp.clip(jnp.sum(sm, axis=-1, keepdims=True), 0.0, 1.0)


if __name__ == "__main__":
    # Shapes consistent with the module: hidden=1024 fixed by the module;
    # small in_feature / output_dim / batch for the demo.
    batch, in_feature, hidden, output_dim = 8, 32, 1024, 16

    key = jax.random.PRNGKey(0)
    kx, k1, k2, k3, kb1, kb2, kb3 = jax.random.split(key, 7)

    x = jax.random.normal(kx, (batch, in_feature), dtype=jnp.float32)

    # Deterministic parameter init (weights stored pre-transposed: (in, out)).
    w1 = jax.random.normal(k1, (in_feature, hidden), dtype=jnp.float32) * 0.05
    b1 = jax.random.normal(kb1, (1, hidden), dtype=jnp.float32) * 0.01
    w2 = jax.random.normal(k2, (hidden, hidden), dtype=jnp.float32) * 0.02
    b2 = jax.random.normal(kb2, (1, hidden), dtype=jnp.float32) * 0.01
    w3 = jax.random.normal(k3, (hidden, output_dim), dtype=jnp.float32) * 0.02
    b3 = jax.random.normal(kb3, (1, output_dim), dtype=jnp.float32) * 0.01

    probs, mass = classifier_auxiliary_forward(x, w1, b1, w2, b2, w3, b3,
                                               output_dim=output_dim)
    jax.block_until_ready((probs, mass))

    # Tight check against the bf16-matched pure-JAX reference.
    rp, rm = _ref_forward_bf16(x, w1, b1, w2, b2, w3, b3, output_dim)
    assert jnp.allclose(probs, rp, atol=1e-2, rtol=1e-2), \
        float(jnp.max(jnp.abs(probs - rp)))
    assert jnp.allclose(mass, rm, atol=1e-2, rtol=1e-2)

    # Loose check against the original full-f32 module semantics
    # (difference is only the intentional bf16 weight/activation cast).
    fp, fm = _ref_forward_f32(x, w1, b1, w2, b2, w3, b3, output_dim)
    assert jnp.allclose(probs, fp, atol=5e-2, rtol=5e-2)
    assert jnp.allclose(mass, fm, atol=5e-2, rtol=5e-2)

    print("KERNEL_OK")
</pallas_src>

<mosaic_0001>
module attributes {stable_mosaic.version = 11 : i64} {
  func.func @kernel(%arg0: i32, %arg1: memref<8x32xbf16, #tpu.memory_space<vmem>>, %arg2: memref<32x1024xbf16, #tpu.memory_space<vmem>>, %arg3: memref<1x1024xf32, #tpu.memory_space<vmem>>, %arg4: memref<1024x1024xbf16, #tpu.memory_space<vmem>>, %arg5: memref<1x1024xf32, #tpu.memory_space<vmem>>, %arg6: memref<1024x128xbf16, #tpu.memory_space<vmem>>, %arg7: memref<1x128xf32, #tpu.memory_space<vmem>>, %arg8: memref<8x128xf32, #tpu.memory_space<vmem>>) attributes {dimension_semantics = [#tpu.dimension_semantics<parallel>], iteration_bounds = array<i64: 1>, scalar_prefetch = 0 : i64, scratch_operands = 0 : i64, tpu.core_type = #tpu.core_type<tc>, window_params = [{transform_indices = @transform_0, window_bounds = array<i64: 8, 32>}, {pipeline_mode = #tpu.pipeline_mode<synchronous>, transform_indices = @transform_1, window_bounds = array<i64: 32, 1024>}, {pipeline_mode = #tpu.pipeline_mode<synchronous>, transform_indices = @transform_2, window_bounds = array<i64: 1, 1024>}, {pipeline_mode = #tpu.pipeline_mode<synchronous>, transform_indices = @transform_3, window_bounds = array<i64: 1024, 1024>}, {pipeline_mode = #tpu.pipeline_mode<synchronous>, transform_indices = @transform_4, window_bounds = array<i64: 1, 1024>}, {pipeline_mode = #tpu.pipeline_mode<synchronous>, transform_indices = @transform_5, window_bounds = array<i64: 1024, 128>}, {pipeline_mode = #tpu.pipeline_mode<synchronous>, transform_indices = @transform_6, window_bounds = array<i64: 1, 128>}, {transform_indices = @transform_7, window_bounds = array<i64: 8, 128>}]} {
    %c0 = arith.constant 0 : index
    %c0_0 = arith.constant 0 : index
    %0 = vector.load %arg1[%c0, %c0_0] : memref<8x32xbf16, #tpu.memory_space<vmem>>, vector<8x32xbf16>
    %c0_1 = arith.constant 0 : index
    %c0_2 = arith.constant 0 : index
    %1 = vector.load %arg2[%c0_1, %c0_2] : memref<32x1024xbf16, #tpu.memory_space<vmem>>, vector<32x1024xbf16>
    %cst = arith.constant dense<0.000000e+00> : vector<8x1024xf32>
    %2 = tpu.matmul %0, %1, %cst {dimension_numbers = #tpu.dot_dimension_numbers<[1], [0], [0], [1], [0, 0, 1, 1], [], []>} : vector<8x32xbf16>, vector<32x1024xbf16>, vector<8x1024xf32> -> vector<8x1024xf32>
    %c0_3 = arith.constant 0 : index
    %c0_4 = arith.constant 0 : index
    %3 = vector.load %arg3[%c0_3, %c0_4] : memref<1x1024xf32, #tpu.memory_space<vmem>>, vector<1x1024xf32>
    %4 = vector.broadcast %3 : vector<1x1024xf32> to vector<8x1024xf32>
    %5 = arith.addf %2, %4 : vector<8x1024xf32>
    %cst_5 = arith.constant 0.000000e+00 : f32
    %6 = vector.broadcast %cst_5 : f32 to vector<8x1024xf32>
    %7 = arith.maximumf %5, %6 : vector<8x1024xf32>
    %8 = arith.truncf %7 : vector<8x1024xf32> to vector<8x1024xbf16>
    %c0_6 = arith.constant 0 : index
    %c0_7 = arith.constant 0 : index
    %9 = vector.load %arg4[%c0_6, %c0_7] : memref<1024x1024xbf16, #tpu.memory_space<vmem>>, vector<1024x1024xbf16>
    %cst_8 = arith.constant dense<0.000000e+00> : vector<8x1024xf32>
    %10 = tpu.matmul %8, %9, %cst_8 {dimension_numbers = #tpu.dot_dimension_numbers<[1], [0], [0], [1], [0, 0, 1, 1], [], []>} : vector<8x1024xbf16>, vector<1024x1024xbf16>, vector<8x1024xf32> -> vector<8x1024xf32>
    %c0_9 = arith.constant 0 : index
    %c0_10 = arith.constant 0 : index
    %11 = vector.load %arg5[%c0_9, %c0_10] : memref<1x1024xf32, #tpu.memory_space<vmem>>, vector<1x1024xf32>
    %12 = vector.broadcast %11 : vector<1x1024xf32> to vector<8x1024xf32>
    %13 = arith.addf %10, %12 : vector<8x1024xf32>
    %cst_11 = arith.constant 0.000000e+00 : f32
    %14 = vector.broadcast %cst_11 : f32 to vector<8x1024xf32>
    %15 = arith.maximumf %13, %14 : vector<8x1024xf32>
    %16 = arith.truncf %15 : vector<8x1024xf32> to vector<8x1024xbf16>
    %c0_12 = arith.constant 0 : index
    %c0_13 = arith.constant 0 : index
    %17 = vector.load %arg6[%c0_12, %c0_13] : memref<1024x128xbf16, #tpu.memory_space<vmem>>, vector<1024x128xbf16>
    %cst_14 = arith.constant dense<0.000000e+00> : vector<8x128xf32>
    %18 = tpu.matmul %16, %17, %cst_14 {dimension_numbers = #tpu.dot_dimension_numbers<[1], [0], [0], [1], [0, 0, 1, 1], [], []>} : vector<8x1024xbf16>, vector<1024x128xbf16>, vector<8x128xf32> -> vector<8x128xf32>
    %c0_15 = arith.constant 0 : index
    %c0_16 = arith.constant 0 : index
    %19 = vector.load %arg7[%c0_15, %c0_16] : memref<1x128xf32, #tpu.memory_space<vmem>>, vector<1x128xf32>
    %20 = vector.broadcast %19 : vector<1x128xf32> to vector<8x128xf32>
    %21 = arith.addf %18, %20 : vector<8x128xf32>
    %cst_17 = arith.constant dense<0xFF800000> : vector<8xf32>
    %22 = vector.multi_reduction <maximumf>, %21, %cst_17 [1] : vector<8x128xf32> to vector<8xf32>
    %23 = vector.shape_cast %22 : vector<8xf32> to vector<8x1xf32>
    %cst_18 = arith.constant 0.000000e+00 : f32
    %24 = vector.broadcast %cst_18 : f32 to vector<8x1xf32>
    %25 = arith.maximumf %23, %24 : vector<8x1xf32>
    %26 = vector.broadcast %25 : vector<8x1xf32> to vector<8x128xf32>
    %27 = arith.subf %21, %26 : vector<8x128xf32>
    %28 = math.exp %27 : vector<8x128xf32>
    %cst_19 = arith.constant dense<0.000000e+00> : vector<8xf32>
    %29 = vector.multi_reduction <add>, %28, %cst_19 [1] : vector<8x128xf32> to vector<8xf32>
    %30 = vector.shape_cast %29 : vector<8xf32> to vector<8x1xf32>
    %cst_20 = arith.constant 0.000000e+00 : f32
    %31 = vector.broadcast %cst_20 : f32 to vector<8x1xf32>
    %32 = arith.subf %31, %25 : vector<8x1xf32>
    %33 = math.exp %32 : vector<8x1xf32>
    %cst_21 = arith.constant 1.600000e+01 : f32
    %34 = vector.broadcast %cst_21 : f32 to vector<8x1xf32>
    %35 = arith.mulf %34, %33 : vector<8x1xf32>
    %36 = arith.addf %30, %35 : vector<8x1xf32>
    %37 = tpu.reciprocal %36 {approx = true} : vector<8x1xf32> -> vector<8x1xf32>
    %38 = vector.broadcast %37 : vector<8x1xf32> to vector<8x128xf32>
    %39 = arith.mulf %28, %38 : vector<8x128xf32>
    %c0_22 = arith.constant 0 : index
    %c0_23 = arith.constant 0 : index
    %40 = vector.load %arg8[%c0_22, %c0_23] : memref<8x128xf32, #tpu.memory_space<vmem>>, vector<8x128xf32>
    tpu.vector_store %arg8[%c0_22, %c0_23], %39 {strides = array<i32>} : memref<8x128xf32, #tpu.memory_space<vmem>>, vector<8x128xf32>,
    return
  }
  func.func @transform_0(%arg0: i32) -> (i32, i32) {
    %c0_i32 = arith.constant 0 : i32
    %c0_i32_0 = arith.constant 0 : i32
    return %arg0, %c0_i32 : i32, i32
  }
  func.func @transform_1(%arg0: i32) -> (i32, i32) {
    %c0_i32 = arith.constant 0 : i32
    %c0_i32_0 = arith.constant 0 : i32
    %c0_i32_1 = arith.constant 0 : i32
    return %c0_i32, %c0_i32_0 : i32, i32
  }
  func.func @transform_2(%arg0: i32) -> (i32, i32) {
    %c0_i32 = arith.constant 0 : i32
    %c0_i32_0 = arith.constant 0 : i32
    %c0_i32_1 = arith.constant 0 : i32
    return %c0_i32, %c0_i32_0 : i32, i32
  }
  func.func @transform_3(%arg0: i32) -> (i32, i32) {
    %c0_i32 = arith.constant 0 : i32
    %c0_i32_0 = arith.constant 0 : i32
    %c0_i32_1 = arith.constant 0 : i32
    return %c0_i32, %c0_i32_0 : i32, i32
  }
  func.func @transform_4(%arg0: i32) -> (i32, i32) {
    %c0_i32 = arith.constant 0 : i32
    %c0_i32_0 = arith.constant 0 : i32
    %c0_i32_1 = arith.constant 0 : i32
    return %c0_i32, %c0_i32_0 : i32, i32
  }
  func.func @transform_5(%arg0: i32) -> (i32, i32) {
    %c0_i32 = arith.constant 0 : i32
    %c0_i32_0 = arith.constant 0 : i32
    %c0_i32_1 = arith.constant 0 : i32
    return %c0_i32, %c0_i32_0 : i32, i32
  }
  func.func @transform_6(%arg0: i32) -> (i32, i32) {
    %c0_i32 = arith.constant 0 : i32
    %c0_i32_0 = arith.constant 0 : i32
    %c0_i32_1 = arith.constant 0 : i32
    return %c0_i32, %c0_i32_0 : i32, i32
  }
  func.func @transform_7(%arg0: i32) -> (i32, i32) {
    %c0_i32 = arith.constant 0 : i32
    %c0_i32_0 = arith.constant 0 : i32
    return %arg0, %c0_i32 : i32, i32
  }
}

</mosaic_0001>

<llo_original>
// kernel: classifier_auxiliary_forward.1
$region0: #{classifier_auxiliary_forward.1}
  #allocation0 [shape = 'u32[]', space=smem, size = 0x4, offset = 0x4, fixed_abs, tag = 'smem constant byte address 0x4 - core index']
  #allocation1 [shape = 'u32[72,128]{1,0:T(1,128)}', space=vmem, size = 0x9000, scoped, tag = 'internal scratch']
  %s0 = inlined_call_operand.vmem [shape: bf16[8,32], index: 0, kind: input, shape index: {}]
  %s1 = inlined_call_operand.vmem [shape: bf16[32,1024], index: 1, kind: input, shape index: {}]
  %s2 = inlined_call_operand.vmem [shape: f32[1,1024], index: 2, kind: input, shape index: {}]
  %s3 = inlined_call_operand.vmem [shape: bf16[1024,1024], index: 3, kind: input, shape index: {}]
  %s4 = inlined_call_operand.vmem [shape: f32[1,1024], index: 4, kind: input, shape index: {}]
  %s5 = inlined_call_operand.vmem [shape: bf16[1024,128], index: 5, kind: input, shape index: {}]
  %s6 = inlined_call_operand.vmem [shape: f32[1,128], index: 6, kind: input, shape index: {}]
  %s7 = inlined_call_operand.vmem [shape: f32[8,128], index: 7, kind: output, shape index: {}]
  %s8 = sld [smem:[#allocation0]]
  $region38: #{classifier_auxiliary_forward.1} parent=0
    _
  %s10 = ssub.s32 1, %s8
  %s11 = scalar_select 0, %s10, %s8
  // Predicated region
  $region2: #{classifier_auxiliary_forward.1} parent=0 // pred_check
    _
  $region3: #{classifier_auxiliary_forward.1} parent=0 // pred_check_branch
    %13 = sbr.rel (0) target = $region5
  $region4: #{classifier_auxiliary_forward.1} parent=0 // pred_region
    _
  $region5: #{classifier_auxiliary_forward.1} parent=0 // pred_fallthru
    _
  // Predicated region
  $region6: #{classifier_auxiliary_forward.1} parent=0 // pred_check
    _
  $region7: #{classifier_auxiliary_forward.1} parent=0 // pred_check_branch
    %15 = sbr.rel (0) target = $region9
  $region8: #{classifier_auxiliary_forward.1} parent=0 // pred_region
    _
  $region9: #{classifier_auxiliary_forward.1} parent=0 // pred_fallthru
    _
  // Predicated region
  $region10: #{classifier_auxiliary_forward.1} parent=0 // pred_check
    _
  $region11: #{classifier_auxiliary_forward.1} parent=0 // pred_check_branch
    %17 = sbr.rel (0) target = $region13
  $region12: #{classifier_auxiliary_forward.1} parent=0 // pred_region
    _
  $region13: #{classifier_auxiliary_forward.1} parent=0 // pred_fallthru
    _
  // Predicated region
  $region14: #{classifier_auxiliary_forward.1} parent=0 // pred_check
    _
  $region15: #{classifier_auxiliary_forward.1} parent=0 // pred_check_branch
    %19 = sbr.rel (0) target = $region17
  $region16: #{classifier_auxiliary_forward.1} parent=0 // pred_region
    _
  $region17: #{classifier_auxiliary_forward.1} parent=0 // pred_fallthru
    _
  // Predicated region
  $region18: #{classifier_auxiliary_forward.1} parent=0 // pred_check
    _
  $region19: #{classifier_auxiliary_forward.1} parent=0 // pred_check_branch
    %21 = sbr.rel (0) target = $region21
  $region20: #{classifier_auxiliary_forward.1} parent=0 // pred_region
    _
  $region21: #{classifier_auxiliary_forward.1} parent=0 // pred_fallthru
    _
  // Predicated region
  $region22: #{classifier_auxiliary_forward.1} parent=0 // pred_check
    _
  $region23: #{classifier_auxiliary_forward.1} parent=0 // pred_check_branch
    %23 = sbr.rel (0) target = $region25
  $region24: #{classifier_auxiliary_forward.1} parent=0 // pred_region
    _
  $region25: #{classifier_auxiliary_forward.1} parent=0 // pred_fallthru
    _
  // Predicated region
  $region26: #{classifier_auxiliary_forward.1} parent=0 // pred_check
    _
  $region27: #{classifier_auxiliary_forward.1} parent=0 // pred_check_branch
    %25 = sbr.rel (0) target = $region29
  $region28: #{classifier_auxiliary_forward.1} parent=0 // pred_region
    _
  $region29: #{classifier_auxiliary_forward.1} parent=0 // pred_fallthru
    _
  %v27 = vld [vmem:[%s0] sm:$0xf]
  %v28 = vld [vmem:[%s1] sm:$0xff]
  %v29 = vld [vmem:[%s1 + $0x8] sm:$0xff]
  %v30 = vld [vmem:[%s1 + $0x10] sm:$0xff]
  %v31 = vld [vmem:[%s1 + $0x18] sm:$0xff]
  %v32 = vld [vmem:[%s1 + $0x20] sm:$0xff]
  %v33 = vld [vmem:[%s1 + $0x28] sm:$0xff]
  %v34 = vld [vmem:[%s1 + $0x30] sm:$0xff]
  %v35 = vld [vmem:[%s1 + $0x38] sm:$0xff]
  %v36 = vld [vmem:[%s1 + $0x40] sm:$0xff]
  %v37 = vld [vmem:[%s1 + $0x48] sm:$0xff]
  %v38 = vld [vmem:[%s1 + $0x50] sm:$0xff]
  %v39 = vld [vmem:[%s1 + $0x58] sm:$0xff]
  %v40 = vld [vmem:[%s1 + $0x60] sm:$0xff]
  %v41 = vld [vmem:[%s1 + $0x68] sm:$0xff]
  %v42 = vld [vmem:[%s1 + $0x70] sm:$0xff]
  %v43 = vld [vmem:[%s1 + $0x78] sm:$0xff]
  %v44 = vld [vmem:[%s2] sm:$0xff]
  %v46 = vperm.slane %v44, 0
  %v47 = vperm.slane %v44, 1
  %v48 = vperm.slane %v44, 2
  %v49 = vperm.slane %v44, 3
  %v50 = vperm.slane %v44, 4
  %v51 = vperm.slane %v44, 5
  %v52 = vperm.slane %v44, 6
  %v53 = vperm.slane %v44, 7
  %v78 = vunpack.c.l.b16 %v28
  %v79 = vunpack.c.h.b16 %v28
  %v80 = vunpack.c.l.b16 %v29
  %v81 = vunpack.c.h.b16 %v29
  %v82 = vunpack.c.l.b16 %v30
  %v83 = vunpack.c.h.b16 %v30
  %v84 = vunpack.c.l.b16 %v31
  %v85 = vunpack.c.h.b16 %v31
  %v86 = vunpack.c.l.b16 %v32
  %v87 = vunpack.c.h.b16 %v32
  %v88 = vunpack.c.l.b16 %v33
  %v89 = vunpack.c.h.b16 %v33
  %v90 = vunpack.c.l.b16 %v34
  %v91 = vunpack.c.h.b16 %v34
  %v92 = vunpack.c.l.b16 %v35
  %v93 = vunpack.c.h.b16 %v35
  %v94 = vunpack.c.l.b16 %v36
  %v95 = vunpack.c.h.b16 %v36
  %v96 = vunpack.c.l.b16 %v37
  %v97 = vunpack.c.h.b16 %v37
  %v98 = vunpack.c.l.b16 %v38
  %v99 = vunpack.c.h.b16 %v38
  %v100 = vunpack.c.l.b16 %v39
  %v101 = vunpack.c.h.b16 %v39
  %v102 = vunpack.c.l.b16 %v40
  %v103 = vunpack.c.h.b16 %v40
  %v104 = vunpack.c.l.b16 %v41
  %v105 = vunpack.c.h.b16 %v41
  %v106 = vunpack.c.l.b16 %v42
  %v107 = vunpack.c.h.b16 %v42
  %v108 = vunpack.c.l.b16 %v43
  %v109 = vunpack.c.h.b16 %v43
  %v110 = vpack.c.b16 %v86, %v78
  %v111 = vpack.c.b16 %v87, %v79
  %v112 = vpack.c.b16 %v88, %v80
  %v113 = vpack.c.b16 %v89, %v81
  %v114 = vpack.c.b16 %v90, %v82
  %v115 = vpack.c.b16 %v91, %v83
  %v116 = vpack.c.b16 %v92, %v84
  %v117 = vpack.c.b16 %v93, %v85
  %v118 = vpack.c.b16 %v102, %v94
  %v119 = vpack.c.b16 %v103, %v95
  %v120 = vpack.c.b16 %v104, %v96
  %v121 = vpack.c.b16 %v105, %v97
  %v122 = vpack.c.b16 %v106, %v98
  %v123 = vpack.c.b16 %v107, %v99
  %v124 = vpack.c.b16 %v108, %v100
  %v125 = vpack.c.b16 %v109, %v101
  %vm142 = vcmask 261120
  %v144 = vsel %vm142, %v27, 0
  %146 = vmatpush.bf16.msra.mxu0 0
  %147 = vmatpush.bf16.msra.mxu0 0
  %148 = vmatpush.bf16.msra.mxu0 0
  %149 = vmatpush.bf16.msra.mxu0 0
  %150 = vmatpush.bf16.msra.mxu0 0
  %151 = vmatpush.bf16.msra.mxu0 0
  %152 = vmatpush.bf16.msra.mxu0 %v118
  %153 = vmatpush.bf16.msra.mxu0 %v110
  %154 = vmatmul.bf16.gmra.mxu0 %v144
  %v155 = vpop.f32.mrf.mxu0
  %v156 = vadd.f32 %v46, %v155
  %v157 = vpop.f32.mrf.mxu0
  %158 = vdwg.mxu0
  %159 = vmatpush.bf16.msra.mxu0 0
  %160 = vmatpush.bf16.msra.mxu0 0
  %161 = vmatpush.bf16.msra.mxu0 0
  %162 = vmatpush.bf16.msra.mxu0 0
  %163 = vmatpush.bf16.msra.mxu0 0
  %164 = vmatpush.bf16.msra.mxu0 0
  %165 = vmatpush.bf16.msra.mxu0 %v119
  %166 = vmatpush.bf16.msra.mxu0 %v111
  %167 = vmatmul.bf16.gmra.mxu0 %v144
  %v168 = vpop.f32.mrf.mxu0
  %v169 = vadd.f32 %v47, %v168
  %v170 = vpop.f32.mrf.mxu0
  %171 = vdwg.mxu0
  %172 = vmatpush.bf16.msra.mxu0 0
  %173 = vmatpush.bf16.msra.mxu0 0
  %174 = vmatpush.bf16.msra.mxu0 0
  %175 = vmatpush.bf16.msra.mxu0 0
  %176 = vmatpush.bf16.msra.mxu0 0
  %177 = vmatpush.bf16.msra.mxu0 0
  %178 = vmatpush.bf16.msra.mxu0 %v120
  %179 = vmatpush.bf16.msra.mxu0 %v112
  %180 = vmatmul.bf16.gmra.mxu0 %v144
  %v181 = vpop.f32.mrf.mxu0
  %v182 = vadd.f32 %v48, %v181
  %v183 = vpop.f32.mrf.mxu0
  %184 = vdwg.mxu0
  %185 = vmatpush.bf16.msra.mxu0 0
  %186 = vmatpush.bf16.msra.mxu0 0
  %187 = vmatpush.bf16.msra.mxu0 0
  %188 = vmatpush.bf16.msra.mxu0 0
  %189 = vmatpush.bf16.msra.mxu0 0
  %190 = vmatpush.bf16.msra.mxu0 0
  %191 = vmatpush.bf16.msra.mxu0 %v121
  %192 = vmatpush.bf16.msra.mxu0 %v113
  %193 = vmatmul.bf16.gmra.mxu0 %v144
  %v194 = vpop.f32.mrf.mxu0
  %v195 = vadd.f32 %v49, %v194
  %v196 = vpop.f32.mrf.mxu0
  %197 = vdwg.mxu0
  %198 = vmatpush.bf16.msra.mxu0 0
  %199 = vmatpush.bf16.msra.mxu0 0
  %200 = vmatpush.bf16.msra.mxu0 0
  %201 = vmatpush.bf16.msra.mxu0 0
  %202 = vmatpush.bf16.msra.mxu0 0
  %203 = vmatpush.bf16.msra.mxu0 0
  %204 = vmatpush.bf16.msra.mxu0 %v122
  %205 = vmatpush.bf16.msra.mxu0 %v114
  %206 = vmatmul.bf16.gmra.mxu0 %v144
  %v207 = vpop.f32.mrf.mxu0
  %v208 = vadd.f32 %v50, %v207
  %v209 = vpop.f32.mrf.mxu0
  %210 = vdwg.mxu0
  %211 = vmatpush.bf16.msra.mxu0 0
  %212 = vmatpush.bf16.msra.mxu0 0
  %213 = vmatpush.bf16.msra.mxu0 0
  %214 = vmatpush.bf16.msra.mxu0 0
  %215 = vmatpush.bf16.msra.mxu0 0
  %216 = vmatpush.bf16.msra.mxu0 0
  %217 = vmatpush.bf16.msra.mxu0 %v123
  %218 = vmatpush.bf16.msra.mxu0 %v115
  %219 = vmatmul.bf16.gmra.mxu0 %v144
  %v220 = vpop.f32.mrf.mxu0
  %v221 = vadd.f32 %v51, %v220
  %v222 = vpop.f32.mrf.mxu0
  %223 = vdwg.mxu0
  %224 = vmatpush.bf16.msra.mxu0 0
  %225 = vmatpush.bf16.msra.mxu0 0
  %226 = vmatpush.bf16.msra.mxu0 0
  %227 = vmatpush.bf16.msra.mxu0 0
  %228 = vmatpush.bf16.msra.mxu0 0
  %229 = vmatpush.bf16.msra.mxu0 0
  %230 = vmatpush.bf16.msra.mxu0 %v124
  %231 = vmatpush.bf16.msra.mxu0 %v116
  %232 = vmatmul.bf16.gmra.mxu0 %v144
  %v233 = vpop.f32.mrf.mxu0
  %v234 = vadd.f32 %v52, %v233
  %v235 = vpop.f32.mrf.mxu0
  %236 = vdwg.mxu0
  %237 = vmatpush.bf16.msra.mxu0 0
  %238 = vmatpush.bf16.msra.mxu0 0
  %239 = vmatpush.bf16.msra.mxu0 0
  %240 = vmatpush.bf16.msra.mxu0 0
  %241 = vmatpush.bf16.msra.mxu0 0
  %242 = vmatpush.bf16.msra.mxu0 0
  %243 = vmatpush.bf16.msra.mxu0 %v125
  %244 = vmatpush.bf16.msra.mxu0 %v117
  %245 = vmatmul.bf16.gmra.mxu0 %v144
  %v246 = vpop.f32.mrf.mxu0
  %v247 = vadd.f32 %v53, %v246
  %v248 = vpop.f32.mrf.mxu0
  %249 = vdwg.mxu0
  %v250 = vmax.f32 %v156, 0.0
  %v251 = vmax.f32 %v169, 0.0
  %v252 = vmax.f32 %v182, 0.0
  %v253 = vmax.f32 %v195, 0.0
  %v254 = vmax.f32 %v208, 0.0
  %v255 = vmax.f32 %v221, 0.0
  %v256 = vmax.f32 %v234, 0.0
  %v257 = vmax.f32 %v247, 0.0
  %v258 = vpack.c.bf16 %v250, %v250
  %v259 = vpack.c.bf16 %v251, %v251
  %v260 = vpack.c.bf16 %v252, %v252
  %v261 = vpack.c.bf16 %v253, %v253
  %v262 = vpack.c.bf16 %v254, %v254
  %v263 = vpack.c.bf16 %v255, %v255
  %v264 = vpack.c.bf16 %v256, %v256
  %v265 = vpack.c.bf16 %v257, %v257
  %v266 = vld [vmem:[%s3] sm:$0xff]
  %v267 = vld [vmem:[%s3 + $0x8] sm:$0xff]
  %v268 = vld [vmem:[%s3 + $0x10] sm:$0xff]
  %v269 = vld [vmem:[%s3 + $0x18] sm:$0xff]
  %v270 = vld [vmem:[%s3 + $0x20] sm:$0xff]
  %v271 = vld [vmem:[%s3 + $0x28] sm:$0xff]
  %v272 = vld [vmem:[%s3 + $0x30] sm:$0xff]
  %v273 = vld [vmem:[%s3 + $0x38] sm:$0xff]
  %v274 = vld [vmem:[%s3 + $0x40] sm:$0xff]
  %v275 = vld [vmem:[%s3 + $0x48] sm:$0xff]
  %v276 = vld [vmem:[%s3 + $0x50] sm:$0xff]
  %v277 = vld [vmem:[%s3 + $0x58] sm:$0xff]
  %v278 = vld [vmem:[%s3 + $0x60] sm:$0xff]
  %v279 = vld [vmem:[%s3 + $0x68] sm:$0xff]
  %v280 = vld [vmem:[%s3 + $0x70] sm:$0xff]
  %v281 = vld [vmem:[%s3 + $0x78] sm:$0xff]
  %v282 = vld [vmem:[%s3 + $0x80] sm:$0xff]
  %v283 = vld [vmem:[%s3 + $0x88] sm:$0xff]
  %v284 = vld [vmem:[%s3 + $0x90] sm:$0xff]
  %v285 = vld [vmem:[%s3 + $0x98] sm:$0xff]
  %v286 = vld [vmem:[%s3 + $0xa0] sm:$0xff]
  %v287 = vld [vmem:[%s3 + $0xa8] sm:$0xff]
  %v288 = vld [vmem:[%s3 + $0xb0] sm:$0xff]
  %v289 = vld [vmem:[%s3 + $0xb8] sm:$0xff]
  %v290 = vld [vmem:[%s3 + $0xc0] sm:$0xff]
  %v291 = vld [vmem:[%s3 + $0xc8] sm:$0xff]
  %v292 = vld [vmem:[%s3 + $0xd0] sm:$0xff]
  %v293 = vld [vmem:[%s3 + $0xd8] sm:$0xff]
  %v294 = vld [vmem:[%s3 + $0xe0] sm:$0xff]
  %v295 = vld [vmem:[%s3 + $0xe8] sm:$0xff]
  %v296 = vld [vmem:[%s3 + $0xf0] sm:$0xff]
  %v297 = vld [vmem:[%s3 + $0xf8] sm:$0xff]
  %v298 = vld [vmem:[%s3 + $0x100] sm:$0xff]
  %v299 = vld [vmem:[%s3 + $0x108] sm:$0xff]
  %v300 = vld [vmem:[%s3 + $0x110] sm:$0xff]
  %v301 = vld [vmem:[%s3 + $0x118] sm:$0xff]
  %v302 = vld [vmem:[%s3 + $0x120] sm:$0xff]
  %v303 = vld [vmem:[%s3 + $0x128] sm:$0xff]
  %v304 = vld [vmem:[%s3 + $0x130] sm:$0xff]
  %v305 = vld [vmem:[%s3 + $0x138] sm:$0xff]
  %v306 = vld [vmem:[%s3 + $0x140] sm:$0xff]
  %v307 = vld [vmem:[%s3 + $0x148] sm:$0xff]
  %v308 = vld [vmem:[%s3 + $0x150] sm:$0xff]
  %v309 = vld [vmem:[%s3 + $0x158] sm:$0xff]
  %v310 = vld [vmem:[%s3 + $0x160] sm:$0xff]
  %v311 = vld [vmem:[%s3 + $0x168] sm:$0xff]
  %v312 = vld [vmem:[%s3 + $0x170] sm:$0xff]
  %v313 = vld [vmem:[%s3 + $0x178] sm:$0xff]
  %v314 = vld [vmem:[%s3 + $0x180] sm:$0xff]
  %v315 = vld [vmem:[%s3 + $0x188] sm:$0xff]
  %v316 = vld [vmem:[%s3 + $0x190] sm:$0xff]
  %v317 = vld [vmem:[%s3 + $0x198] sm:$0xff]
  %v318 = vld [vmem:[%s3 + $0x1a0] sm:$0xff]
  %v319 = vld [vmem:[%s3 + $0x1a8] sm:$0xff]
  %v320 = vld [vmem:[%s3 + $0x1b0] sm:$0xff]
  %v321 = vld [vmem:[%s3 + $0x1b8] sm:$0xff]
  %v322 = vld [vmem:[%s3 + $0x1c0] sm:$0xff]
  %v323 = vld [vmem:[%s3 + $0x1c8] sm:$0xff]
  %v324 = vld [vmem:[%s3 + $0x1d0] sm:$0xff]
  %v325 = vld [vmem:[%s3 + $0x1d8] sm:$0xff]
  %v326 = vld [vmem:[%s3 + $0x1e0] sm:$0xff]
  %v327 = vld [vmem:[%s3 + $0x1e8] sm:$0xff]
  %v328 = vld [vmem:[%s3 + $0x1f0] sm:$0xff]
  %v329 = vld [vmem:[%s3 + $0x1f8] sm:$0xff]
  %v330 = vld [vmem:[%s3 + $0x200] sm:$0xff]
  %v331 = vld [vmem:[%s3 + $0x208] sm:$0xff]
  %v332 = vld [vmem:[%s3 + $0x210] sm:$0xff]
  %v333 = vld [vmem:[%s3 + $0x218] sm:$0xff]
  %v334 = vld [vmem:[%s3 + $0x220] sm:$0xff]
  %v335 = vld [vmem:[%s3 + $0x228] sm:$0xff]
  %v336 = vld [vmem:[%s3 + $0x230] sm:$0xff]
  %v337 = vld [vmem:[%s3 + $0x238] sm:$0xff]
  %v338 = vld [vmem:[%s3 + $0x240] sm:$0xff]
  %v339 = vld [vmem:[%s3 + $0x248] sm:$0xff]
  %v340 = vld [vmem:[%s3 + $0x250] sm:$0xff]
  %v341 = vld [vmem:[%s3 + $0x258] sm:$0xff]
  %v342 = vld [vmem:[%s3 + $0x260] sm:$0xff]
  %v343 = vld [vmem:[%s3 + $0x268] sm:$0xff]
  %v344 = vld [vmem:[%s3 + $0x270] sm:$0xff]
  %v345 = vld [vmem:[%s3 + $0x278] sm:$0xff]
  %v346 = vld [vmem:[%s3 + $0x280] sm:$0xff]
  %v347 = vld [vmem:[%s3 + $0x288] sm:$0xff]
  %v348 = vld [vmem:[%s3 + $0x290] sm:$0xff]
  %v349 = vld [vmem:[%s3 + $0x298] sm:$0xff]
  %v350 = vld [vmem:[%s3 + $0x2a0] sm:$0xff]
  %v351 = vld [vmem:[%s3 + $0x2a8] sm:$0xff]
  %v352 = vld [vmem:[%s3 + $0x2b0] sm:$0xff]
  %v353 = vld [vmem:[%s3 + $0x2b8] sm:$0xff]
  %v354 = vld [vmem:[%s3 + $0x2c0] sm:$0xff]
  %v355 = vld [vmem:[%s3 + $0x2c8] sm:$0xff]
  %v356 = vld [vmem:[%s3 + $0x2d0] sm:$0xff]
  %v357 = vld [vmem:[%s3 + $0x2d8] sm:$0xff]
  %v358 = vld [vmem:[%s3 + $0x2e0] sm:$0xff]
  %v359 = vld [vmem:[%s3 + $0x2e8] sm:$0xff]
  %v360 = vld [vmem:[%s3 + $0x2f0] sm:$0xff]
  %v361 = vld [vmem:[%s3 + $0x2f8] sm:$0xff]
  %v362 = vld [vmem:[%s3 + $0x300] sm:$0xff]
  %v363 = vld [vmem:[%s3 + $0x308] sm:$0xff]
  %v364 = vld [vmem:[%s3 + $0x310] sm:$0xff]
  %v365 = vld [vmem:[%s3 + $0x318] sm:$0xff]
  %v366 = vld [vmem:[%s3 + $0x320] sm:$0xff]
  %v367 = vld [vmem:[%s3 + $0x328] sm:$0xff]
  %v368 = vld [vmem:[%s3 + $0x330] sm:$0xff]
  %v369 = vld [vmem:[%s3 + $0x338] sm:$0xff]
  %v370 = vld [vmem:[%s3 + $0x340] sm:$0xff]
  %v371 = vld [vmem:[%s3 + $0x348] sm:$0xff]
  %v372 = vld [vmem:[%s3 + $0x350] sm:$0xff]
  %v373 = vld [vmem:[%s3 + $0x358] sm:$0xff]
  %v374 = vld [vmem:[%s3 + $0x360] sm:$0xff]
  %v375 = vld [vmem:[%s3 + $0x368] sm:$0xff]
  %v376 = vld [vmem:[%s3 + $0x370] sm:$0xff]
  %v377 = vld [vmem:[%s3 + $0x378] sm:$0xff]
  %v378 = vld [vmem:[%s3 + $0x380] sm:$0xff]
  %v379 = vld [vmem:[%s3 + $0x388] sm:$0xff]
  %v380 = vld [vmem:[%s3 + $0x390] sm:$0xff]
  %v381 = vld [vmem:[%s3 + $0x398] sm:$0xff]
  %v382 = vld [vmem:[%s3 + $0x3a0] sm:$0xff]
  %v383 = vld [vmem:[%s3 + $0x3a8] sm:$0xff]
  %v384 = vld [vmem:[%s3 + $0x3b0] sm:$0xff]
  %v385 = vld [vmem:[%s3 + $0x3b8] sm:$0xff]
  %v386 = vld [vmem:[%s3 + $0x3c0] sm:$0xff]
  %v387 = vld [vmem:[%s3 + $0x3c8] sm:$0xff]
  %v388 = vld [vmem:[%s3 + $0x3d0] sm:$0xff]
  %v389 = vld [vmem:[%s3 + $0x3d8] sm:$0xff]
  %v390 = vld [vmem:[%s3 + $0x3e0] sm:$0xff]
  %v391 = vld [vmem:[%s3 + $0x3e8] sm:$0xff]
  %v392 = vld [vmem:[%s3 + $0x3f0] sm:$0xff]
  %v393 = vld [vmem:[%s3 + $0x3f8] sm:$0xff]
  %v394 = vld [vmem:[%s3 + $0x400] sm:$0xff]
  %v395 = vld [vmem:[%s3 + $0x408] sm:$0xff]
  %v396 = vld [vmem:[%s3 + $0x410] sm:$0xff]
  %v397 = vld [vmem:[%s3 + $0x418] sm:$0xff]
  %v398 = vld [vmem:[%s3 + $0x420] sm:$0xff]
  %v399 = vld [vmem:[%s3 + $0x428] sm:$0xff]
  %v400 = vld [vmem:[%s3 + $0x430] sm:$0xff]
  %v401 = vld [vmem:[%s3 + $0x438] sm:$0xff]
  %v402 = vld [vmem:[%s3 + $0x440] sm:$0xff]
  %v403 = vld [vmem:[%s3 + $0x448] sm:$0xff]
  %v404 = vld [vmem:[%s3 + $0x450] sm:$0xff]
  %v405 = vld [vmem:[%s3 + $0x458] sm:$0xff]
  %v406 = vld [vmem:[%s3 + $0x460] sm:$0xff]
  %v407 = vld [vmem:[%s3 + $0x468] sm:$0xff]
  %v408 = vld [vmem:[%s3 + $0x470] sm:$0xff]
  %v409 = vld [vmem:[%s3 + $0x478] sm:$0xff]
  %v410 = vld [vmem:[%s3 + $0x480] sm:$0xff]
  %v411 = vld [vmem:[%s3 + $0x488] sm:$0xff]
  %v412 = vld [vmem:[%s3 + $0x490] sm:$0xff]
  %v413 = vld [vmem:[%s3 + $0x498] sm:$0xff]
  %v414 = vld [vmem:[%s3 + $0x4a0] sm:$0xff]
  %v415 = vld [vmem:[%s3 + $0x4a8] sm:$0xff]
  %v416 = vld [vmem:[%s3 + $0x4b0] sm:$0xff]
  %v417 = vld [vmem:[%s3 + $0x4b8] sm:$0xff]
  %v418 = vld [vmem:[%s3 + $0x4c0] sm:$0xff]
  %v419 = vld [vmem:[%s3 + $0x4c8] sm:$0xff]
  %v420 = vld [vmem:[%s3 + $0x4d0] sm:$0xff]
  %v421 = vld [vmem:[%s3 + $0x4d8] sm:$0xff]
  %v422 = vld [vmem:[%s3 + $0x4e0] sm:$0xff]
  %v423 = vld [vmem:[%s3 + $0x4e8] sm:$0xff]
  %v424 = vld [vmem:[%s3 + $0x4f0] sm:$0xff]
  %v425 = vld [vmem:[%s3 + $0x4f8] sm:$0xff]
  %v426 = vld [vmem:[%s3 + $0x500] sm:$0xff]
  %v427 = vld [vmem:[%s3 + $0x508] sm:$0xff]
  %v428 = vld [vmem:[%s3 + $0x510] sm:$0xff]
  %v429 = vld [vmem:[%s3 + $0x518] sm:$0xff]
  %v430 = vld [vmem:[%s3 + $0x520] sm:$0xff]
  %v431 = vld [vmem:[%s3 + $0x528] sm:$0xff]
  %v432 = vld [vmem:[%s3 + $0x530] sm:$0xff]
  %v433 = vld [vmem:[%s3 + $0x538] sm:$0xff]
  %v434 = vld [vmem:[%s3 + $0x540] sm:$0xff]
  %v435 = vld [vmem:[%s3 + $0x548] sm:$0xff]
  %v436 = vld [vmem:[%s3 + $0x550] sm:$0xff]
  %v437 = vld [vmem:[%s3 + $0x558] sm:$0xff]
  %v438 = vld [vmem:[%s3 + $0x560] sm:$0xff]
  %v439 = vld [vmem:[%s3 + $0x568] sm:$0xff]
  %v440 = vld [vmem:[%s3 + $0x570] sm:$0xff]
  %v441 = vld [vmem:[%s3 + $0x578] sm:$0xff]
  %v442 = vld [vmem:[%s3 + $0x580] sm:$0xff]
  %v443 = vld [vmem:[%s3 + $0x588] sm:$0xff]
  %v444 = vld [vmem:[%s3 + $0x590] sm:$0xff]
  %v445 = vld [vmem:[%s3 + $0x598] sm:$0xff]
  %v446 = vld [vmem:[%s3 + $0x5a0] sm:$0xff]
  %v447 = vld [vmem:[%s3 + $0x5a8] sm:$0xff]
  %v448 = vld [vmem:[%s3 + $0x5b0] sm:$0xff]
  %v449 = vld [vmem:[%s3 + $0x5b8] sm:$0xff]
  %v450 = vld [vmem:[%s3 + $0x5c0] sm:$0xff]
  %v451 = vld [vmem:[%s3 + $0x5c8] sm:$0xff]
  %v452 = vld [vmem:[%s3 + $0x5d0] sm:$0xff]
  %v453 = vld [vmem:[%s3 + $0x5d8] sm:$0xff]
  %v454 = vld [vmem:[%s3 + $0x5e0] sm:$0xff]
  %v455 = vld [vmem:[%s3 + $0x5e8] sm:$0xff]
  %v456 = vld [vmem:[%s3 + $0x5f0] sm:$0xff]
  %v457 = vld [vmem:[%s3 + $0x5f8] sm:$0xff]
  %v458 = vld [vmem:[%s3 + $0x600] sm:$0xff]
  %v459 = vld [vmem:[%s3 + $0x608] sm:$0xff]
  %v460 = vld [vmem:[%s3 + $0x610] sm:$0xff]
  %v461 = vld [vmem:[%s3 + $0x618] sm:$0xff]
  %v462 = vld [vmem:[%s3 + $0x620] sm:$0xff]
  %v463 = vld [vmem:[%s3 + $0x628] sm:$0xff]
  %v464 = vld [vmem:[%s3 + $0x630] sm:$0xff]
  %v465 = vld [vmem:[%s3 + $0x638] sm:$0xff]
  %v466 = vld [vmem:[%s3 + $0x640] sm:$0xff]
  %v467 = vld [vmem:[%s3 + $0x648] sm:$0xff]
  %v468 = vld [vmem:[%s3 + $0x650] sm:$0xff]
  %v469 = vld [vmem:[%s3 + $0x658] sm:$0xff]
  %v470 = vld [vmem:[%s3 + $0x660] sm:$0xff]
  %v471 = vld [vmem:[%s3 + $0x668] sm:$0xff]
  %v472 = vld [vmem:[%s3 + $0x670] sm:$0xff]
  %v473 = vld [vmem:[%s3 + $0x678] sm:$0xff]
  %v474 = vld [vmem:[%s3 + $0x680] sm:$0xff]
  %v475 = vld [vmem:[%s3 + $0x688] sm:$0xff]
  %v476 = vld [vmem:[%s3 + $0x690] sm:$0xff]
  %v477 = vld [vmem:[%s3 + $0x698] sm:$0xff]
  %v478 = vld [vmem:[%s3 + $0x6a0] sm:$0xff]
  %v479 = vld [vmem:[%s3 + $0x6a8] sm:$0xff]
  %v480 = vld [vmem:[%s3 + $0x6b0] sm:$0xff]
  %v481 = vld [vmem:[%s3 + $0x6b8] sm:$0xff]
  %v482 = vld [vmem:[%s3 + $0x6c0] sm:$0xff]
  %v483 = vld [vmem:[%s3 + $0x6c8] sm:$0xff]
  %v484 = vld [vmem:[%s3 + $0x6d0] sm:$0xff]
  %v485 = vld [vmem:[%s3 + $0x6d8] sm:$0xff]
  %v486 = vld [vmem:[%s3 + $0x6e0] sm:$0xff]
  %v487 = vld [vmem:[%s3 + $0x6e8] sm:$0xff]
  %v488 = vld [vmem:[%s3 + $0x6f0] sm:$0xff]
  %v489 = vld [vmem:[%s3 + $0x6f8] sm:$0xff]
  %v490 = vld [vmem:[%s3 + $0x700] sm:$0xff]
  %v491 = vld [vmem:[%s3 + $0x708] sm:$0xff]
  %v492 = vld [vmem:[%s3 + $0x710] sm:$0xff]
  %v493 = vld [vmem:[%s3 + $0x718] sm:$0xff]
  %v494 = vld [vmem:[%s3 + $0x720] sm:$0xff]
  %v495 = vld [vmem:[%s3 + $0x728] sm:$0xff]
  %v496 = vld [vmem:[%s3 + $0x730] sm:$0xff]
  %v497 = vld [vmem:[%s3 + $0x738] sm:$0xff]
  %v498 = vld [vmem:[%s3 + $0x740] sm:$0xff]
  %v499 = vld [vmem:[%s3 + $0x748] sm:$0xff]
  %v500 = vld [vmem:[%s3 + $0x750] sm:$0xff]
  %v501 = vld [vmem:[%s3 + $0x758] sm:$0xff]
  %v502 = vld [vmem:[%s3 + $0x760] sm:$0xff]
  %v503 = vld [vmem:[%s3 + $0x768] sm:$0xff]
  %v504 = vld [vmem:[%s3 + $0x770] sm:$0xff]
  %v505 = vld [vmem:[%s3 + $0x778] sm:$0xff]
  %v506 = vld [vmem:[%s3 + $0x780] sm:$0xff]
  %v507 = vld [vmem:[%s3 + $0x788] sm:$0xff]
  %v508 = vld [vmem:[%s3 + $0x790] sm:$0xff]
  %v509 = vld [vmem:[%s3 + $0x798] sm:$0xff]
  %v510 = vld [vmem:[%s3 + $0x7a0] sm:$0xff]
  %v511 = vld [vmem:[%s3 + $0x7a8] sm:$0xff]
  %v512 = vld [vmem:[%s3 + $0x7b0] sm:$0xff]
  %v513 = vld [vmem:[%s3 + $0x7b8] sm:$0xff]
  %v514 = vld [vmem:[%s3 + $0x7c0] sm:$0xff]
  %v515 = vld [vmem:[%s3 + $0x7c8] sm:$0xff]
  %v516 = vld [vmem:[%s3 + $0x7d0] sm:$0xff]
  %v517 = vld [vmem:[%s3 + $0x7d8] sm:$0xff]
  %v518 = vld [vmem:[%s3 + $0x7e0] sm:$0xff]
  %v519 = vld [vmem:[%s3 + $0x7e8] sm:$0xff]
  %v520 = vld [vmem:[%s3 + $0x7f0] sm:$0xff]
  %v521 = vld [vmem:[%s3 + $0x7f8] sm:$0xff]
  %v522 = vld [vmem:[%s3 + $0x800] sm:$0xff]
  %v523 = vld [vmem:[%s3 + $0x808] sm:$0xff]
  %v524 = vld [vmem:[%s3 + $0x810] sm:$0xff]
  %v525 = vld [vmem:[%s3 + $0x818] sm:$0xff]
  %v526 = vld [vmem:[%s3 + $0x820] sm:$0xff]
  %v527 = vld [vmem:[%s3 + $0x828] sm:$0xff]
  %v528 = vld [vmem:[%s3 + $0x830] sm:$0xff]
  %v529 = vld [vmem:[%s3 + $0x838] sm:$0xff]
  %v530 = vld [vmem:[%s3 + $0x840] sm:$0xff]
  %v531 = vld [vmem:[%s3 + $0x848] sm:$0xff]
  %v532 = vld [vmem:[%s3 + $0x850] sm:$0xff]
  %v533 = vld [vmem:[%s3 + $0x858] sm:$0xff]
  %v534 = vld [vmem:[%s3 + $0x860] sm:$0xff]
  %v535 = vld [vmem:[%s3 + $0x868] sm:$0xff]
  %v536 = vld [vmem:[%s3 + $0x870] sm:$0xff]
  %v537 = vld [vmem:[%s3 + $0x878] sm:$0xff]
  %v538 = vld [vmem:[%s3 + $0x880] sm:$0xff]
  %v539 = vld [vmem:[%s3 + $0x888] sm:$0xff]
  %v540 = vld [vmem:[%s3 + $0x890] sm:$0xff]
  %v541 = vld [vmem:[%s3 + $0x898] sm:$0xff]
  %v542 = vld [vmem:[%s3 + $0x8a0] sm:$0xff]
  %v543 = vld [vmem:[%s3 + $0x8a8] sm:$0xff]
  %v544 = vld [vmem:[%s3 + $0x8b0] sm:$0xff]
  %v545 = vld [vmem:[%s3 + $0x8b8] sm:$0xff]
  %v546 = vld [vmem:[%s3 + $0x8c0] sm:$0xff]
  %v547 = vld [vmem:[%s3 + $0x8c8] sm:$0xff]
  %v548 = vld [vmem:[%s3 + $0x8d0] sm:$0xff]
  %v549 = vld [vmem:[%s3 + $0x8d8] sm:$0xff]
  %v550 = vld [vmem:[%s3 + $0x8e0] sm:$0xff]
  %v551 = vld [vmem:[%s3 + $0x8e8] sm:$0xff]
  %v552 = vld [vmem:[%s3 + $0x8f0] sm:$0xff]
  %v553 = vld [vmem:[%s3 + $0x8f8] sm:$0xff]
  %v554 = vld [vmem:[%s3 + $0x900] sm:$0xff]
  %v555 = vld [vmem:[%s3 + $0x908] sm:$0xff]
  %v556 = vld [vmem:[%s3 + $0x910] sm:$0xff]
  %v557 = vld [vmem:[%s3 + $0x918] sm:$0xff]
  %v558 = vld [vmem:[%s3 + $0x920] sm:$0xff]
  %v559 = vld [vmem:[%s3 + $0x928] sm:$0xff]
  %v560 = vld [vmem:[%s3 + $0x930] sm:$0xff]
  %v561 = vld [vmem:[%s3 + $0x938] sm:$0xff]
  %v562 = vld [vmem:[%s3 + $0x940] sm:$0xff]
  %v563 = vld [vmem:[%s3 + $0x948] sm:$0xff]
  %v564 = vld [vmem:[%s3 + $0x950] sm:$0xff]
  %v565 = vld [vmem:[%s3 + $0x958] sm:$0xff]
  %v566 = vld [vmem:[%s3 + $0x960] sm:$0xff]
  %v567 = vld [vmem:[%s3 + $0x968] sm:$0xff]
  %v568 = vld [vmem:[%s3 + $0x970] sm:$0xff]
  %v569 = vld [vmem:[%s3 + $0x978] sm:$0xff]
  %v570 = vld [vmem:[%s3 + $0x980] sm:$0xff]
  %v571 = vld [vmem:[%s3 + $0x988] sm:$0xff]
  %v572 = vld [vmem:[%s3 + $0x990] sm:$0xff]
  %v573 = vld [vmem:[%s3 + $0x998] sm:$0xff]
  %v574 = vld [vmem:[%s3 + $0x9a0] sm:$0xff]
  %v575 = vld [vmem:[%s3 + $0x9a8] sm:$0xff]
  %v576 = vld [vmem:[%s3 + $0x9b0] sm:$0xff]
  %v577 = vld [vmem:[%s3 + $0x9b8] sm:$0xff]
  %v578 = vld [vmem:[%s3 + $0x9c0] sm:$0xff]
  %v579 = vld [vmem:[%s3 + $0x9c8] sm:$0xff]
  %v580 = vld [vmem:[%s3 + $0x9d0] sm:$0xff]
  %v581 = vld [vmem:[%s3 + $0x9d8] sm:$0xff]
  %v582 = vld [vmem:[%s3 + $0x9e0] sm:$0xff]
  %v583 = vld [vmem:[%s3 + $0x9e8] sm:$0xff]
  %v584 = vld [vmem:[%s3 + $0x9f0] sm:$0xff]
  %v585 = vld [vmem:[%s3 + $0x9f8] sm:$0xff]
  %v586 = vld [vmem:[%s3 + $0xa00] sm:$0xff]
  %v587 = vld [vmem:[%s3 + $0xa08] sm:$0xff]
  %v588 = vld [vmem:[%s3 + $0xa10] sm:$0xff]
  %v589 = vld [vmem:[%s3 + $0xa18] sm:$0xff]
  %v590 = vld [vmem:[%s3 + $0xa20] sm:$0xff]
  %v591 = vld [vmem:[%s3 + $0xa28] sm:$0xff]
  %v592 = vld [vmem:[%s3 + $0xa30] sm:$0xff]
  %v593 = vld [vmem:[%s3 + $0xa38] sm:$0xff]
  %v594 = vld [vmem:[%s3 + $0xa40] sm:$0xff]
  %v595 = vld [vmem:[%s3 + $0xa48] sm:$0xff]
  %v596 = vld [vmem:[%s3 + $0xa50] sm:$0xff]
  %v597 = vld [vmem:[%s3 + $0xa58] sm:$0xff]
  %v598 = vld [vmem:[%s3 + $0xa60] sm:$0xff]
  %v599 = vld [vmem:[%s3 + $0xa68] sm:$0xff]
  %v600 = vld [vmem:[%s3 + $0xa70] sm:$0xff]
  %v601 = vld [vmem:[%s3 + $0xa78] sm:$0xff]
  %v602 = vld [vmem:[%s3 + $0xa80] sm:$0xff]
  %v603 = vld [vmem:[%s3 + $0xa88] sm:$0xff]
  %v604 = vld [vmem:[%s3 + $0xa90] sm:$0xff]
  %v605 = vld [vmem:[%s3 + $0xa98] sm:$0xff]
  %v606 = vld [vmem:[%s3 + $0xaa0] sm:$0xff]
  %v607 = vld [vmem:[%s3 + $0xaa8] sm:$0xff]
  %v608 = vld [vmem:[%s3 + $0xab0] sm:$0xff]
  %v609 = vld [vmem:[%s3 + $0xab8] sm:$0xff]
  %v610 = vld [vmem:[%s3 + $0xac0] sm:$0xff]
  %v611 = vld [vmem:[%s3 + $0xac8] sm:$0xff]
  %v612 = vld [vmem:[%s3 + $0xad0] sm:$0xff]
  %v613 = vld [vmem:[%s3 + $0xad8] sm:$0xff]
  %v614 = vld [vmem:[%s3 + $0xae0] sm:$0xff]
  %v615 = vld [vmem:[%s3 + $0xae8] sm:$0xff]
  %v616 = vld [vmem:[%s3 + $0xaf0] sm:$0xff]
  %v617 = vld [vmem:[%s3 + $0xaf8] sm:$0xff]
  %v618 = vld [vmem:[%s3 + $0xb00] sm:$0xff]
  %v619 = vld [vmem:[%s3 + $0xb08] sm:$0xff]
  %v620 = vld [vmem:[%s3 + $0xb10] sm:$0xff]
  %v621 = vld [vmem:[%s3 + $0xb18] sm:$0xff]
  %v622 = vld [vmem:[%s3 + $0xb20] sm:$0xff]
  %v623 = vld [vmem:[%s3 + $0xb28] sm:$0xff]
  %v624 = vld [vmem:[%s3 + $0xb30] sm:$0xff]
  %v625 = vld [vmem:[%s3 + $0xb38] sm:$0xff]
  %v626 = vld [vmem:[%s3 + $0xb40] sm:$0xff]
  %v627 = vld [vmem:[%s3 + $0xb48] sm:$0xff]
  %v628 = vld [vmem:[%s3 + $0xb50] sm:$0xff]
  %v629 = vld [vmem:[%s3 + $0xb58] sm:$0xff]
  %v630 = vld [vmem:[%s3 + $0xb60] sm:$0xff]
  %v631 = vld [vmem:[%s3 + $0xb68] sm:$0xff]
  %v632 = vld [vmem:[%s3 + $0xb70] sm:$0xff]
  %v633 = vld [vmem:[%s3 + $0xb78] sm:$0xff]
  %v634 = vld [vmem:[%s3 + $0xb80] sm:$0xff]
  %v635 = vld [vmem:[%s3 + $0xb88] sm:$0xff]
  %v636 = vld [vmem:[%s3 + $0xb90] sm:$0xff]
  %v637 = vld [vmem:[%s3 + $0xb98] sm:$0xff]
  %v638 = vld [vmem:[%s3 + $0xba0] sm:$0xff]
  %v639 = vld [vmem:[%s3 + $0xba8] sm:$0xff]
  %v640 = vld [vmem:[%s3 + $0xbb0] sm:$0xff]
  %v641 = vld [vmem:[%s3 + $0xbb8] sm:$0xff]
  %v642 = vld [vmem:[%s3 + $0xbc0] sm:$0xff]
  %v643 = vld [vmem:[%s3 + $0xbc8] sm:$0xff]
  %v644 = vld [vmem:[%s3 + $0xbd0] sm:$0xff]
  %v645 = vld [vmem:[%s3 + $0xbd8] sm:$0xff]
  %v646 = vld [vmem:[%s3 + $0xbe0] sm:$0xff]
  %v647 = vld [vmem:[%s3 + $0xbe8] sm:$0xff]
  %v648 = vld [vmem:[%s3 + $0xbf0] sm:$0xff]
  %v649 = vld [vmem:[%s3 + $0xbf8] sm:$0xff]
  %v650 = vld [vmem:[%s3 + $0xc00] sm:$0xff]
  %v651 = vld [vmem:[%s3 + $0xc08] sm:$0xff]
  %v652 = vld [vmem:[%s3 + $0xc10] sm:$0xff]
  %v653 = vld [vmem:[%s3 + $0xc18] sm:$0xff]
  %v654 = vld [vmem:[%s3 + $0xc20] sm:$0xff]
  %v655 = vld [vmem:[%s3 + $0xc28] sm:$0xff]
  %v656 = vld [vmem:[%s3 + $0xc30] sm:$0xff]
  %v657 = vld [vmem:[%s3 + $0xc38] sm:$0xff]
  %v658 = vld [vmem:[%s3 + $0xc40] sm:$0xff]
  %v659 = vld [vmem:[%s3 + $0xc48] sm:$0xff]
  %v660 = vld [vmem:[%s3 + $0xc50] sm:$0xff]
  %v661 = vld [vmem:[%s3 + $0xc58] sm:$0xff]
  %v662 = vld [vmem:[%s3 + $0xc60] sm:$0xff]
  %v663 = vld [vmem:[%s3 + $0xc68] sm:$0xff]
  %v664 = vld [vmem:[%s3 + $0xc70] sm:$0xff]
  %v665 = vld [vmem:[%s3 + $0xc78] sm:$0xff]
  %v666 = vld [vmem:[%s3 + $0xc80] sm:$0xff]
  %v667 = vld [vmem:[%s3 + $0xc88] sm:$0xff]
  %v668 = vld [vmem:[%s3 + $0xc90] sm:$0xff]
  %v669 = vld [vmem:[%s3 + $0xc98] sm:$0xff]
  %v670 = vld [vmem:[%s3 + $0xca0] sm:$0xff]
  %v671 = vld [vmem:[%s3 + $0xca8] sm:$0xff]
  %v672 = vld [vmem:[%s3 + $0xcb0] sm:$0xff]
  %v673 = vld [vmem:[%s3 + $0xcb8] sm:$0xff]
  %v674 = vld [vmem:[%s3 + $0xcc0] sm:$0xff]
  %v675 = vld [vmem:[%s3 + $0xcc8] sm:$0xff]
  %v676 = vld [vmem:[%s3 + $0xcd0] sm:$0xff]
  %v677 = vld [vmem:[%s3 + $0xcd8] sm:$0xff]
  %v678 = vld [vmem:[%s3 + $0xce0] sm:$0xff]
  %v679 = vld [vmem:[%s3 + $0xce8] sm:$0xff]
  %v680 = vld [vmem:[%s3 + $0xcf0] sm:$0xff]
  %v681 = vld [vmem:[%s3 + $0xcf8] sm:$0xff]
  %v682 = vld [vmem:[%s3 + $0xd00] sm:$0xff]
  %v683 = vld [vmem:[%s3 + $0xd08] sm:$0xff]
  %v684 = vld [vmem:[%s3 + $0xd10] sm:$0xff]
  %v685 = vld [vmem:[%s3 + $0xd18] sm:$0xff]
  %v686 = vld [vmem:[%s3 + $0xd20] sm:$0xff]
  %v687 = vld [vmem:[%s3 + $0xd28] sm:$0xff]
  %v688 = vld [vmem:[%s3 + $0xd30] sm:$0xff]
  %v689 = vld [vmem:[%s3 + $0xd38] sm:$0xff]
  %v690 = vld [vmem:[%s3 + $0xd40] sm:$0xff]
  %v691 = vld [vmem:[%s3 + $0xd48] sm:$0xff]
  %v692 = vld [vmem:[%s3 + $0xd50] sm:$0xff]
  %v693 = vld [vmem:[%s3 + $0xd58] sm:$0xff]
  %v694 = vld [vmem:[%s3 + $0xd60] sm:$0xff]
  %v695 = vld [vmem:[%s3 + $0xd68] sm:$0xff]
  %v696 = vld [vmem:[%s3 + $0xd70] sm:$0xff]
  %v697 = vld [vmem:[%s3 + $0xd78] sm:$0xff]
  %v698 = vld [vmem:[%s3 + $0xd80] sm:$0xff]
  %v699 = vld [vmem:[%s3 + $0xd88] sm:$0xff]
  %v700 = vld [vmem:[%s3 + $0xd90] sm:$0xff]
  %v701 = vld [vmem:[%s3 + $0xd98] sm:$0xff]
  %v702 = vld [vmem:[%s3 + $0xda0] sm:$0xff]
  %v703 = vld [vmem:[%s3 + $0xda8] sm:$0xff]
  %v704 = vld [vmem:[%s3 + $0xdb0] sm:$0xff]
  %v705 = vld [vmem:[%s3 + $0xdb8] sm:$0xff]
  %v706 = vld [vmem:[%s3 + $0xdc0] sm:$0xff]
  %v707 = vld [vmem:[%s3 + $0xdc8] sm:$0xff]
  %v708 = vld [vmem:[%s3 + $0xdd0] sm:$0xff]
  %v709 = vld [vmem:[%s3 + $0xdd8] sm:$0xff]
  %v710 = vld [vmem:[%s3 + $0xde0] sm:$0xff]
  %v711 = vld [vmem:[%s3 + $0xde8] sm:$0xff]
  %v712 = vld [vmem:[%s3 + $0xdf0] sm:$0xff]
  %v713 = vld [vmem:[%s3 + $0xdf8] sm:$0xff]
  %v714 = vld [vmem:[%s3 + $0xe00] sm:$0xff]
  %v715 = vld [vmem:[%s3 + $0xe08] sm:$0xff]
  %v716 = vld [vmem:[%s3 + $0xe10] sm:$0xff]
  %v717 = vld [vmem:[%s3 + $0xe18] sm:$0xff]
  %v718 = vld [vmem:[%s3 + $0xe20] sm:$0xff]
  %v719 = vld [vmem:[%s3 + $0xe28] sm:$0xff]
  %v720 = vld [vmem:[%s3 + $0xe30] sm:$0xff]
  %v721 = vld [vmem:[%s3 + $0xe38] sm:$0xff]
  %v722 = vld [vmem:[%s3 + $0xe40] sm:$0xff]
  %v723 = vld [vmem:[%s3 + $0xe48] sm:$0xff]
  %v724 = vld [vmem:[%s3 + $0xe50] sm:$0xff]
  %v725 = vld [vmem:[%s3 + $0xe58] sm:$0xff]
  %v726 = vld [vmem:[%s3 + $0xe60] sm:$0xff]
  %v727 = vld [vmem:[%s3 + $0xe68] sm:$0xff]
  %v728 = vld [vmem:[%s3 + $0xe70] sm:$0xff]
  %v729 = vld [vmem:[%s3 + $0xe78] sm:$0xff]
  %v730 = vld [vmem:[%s3 + $0xe80] sm:$0xff]
  %v731 = vld [vmem:[%s3 + $0xe88] sm:$0xff]
  %v732 = vld [vmem:[%s3 + $0xe90] sm:$0xff]
  %v733 = vld [vmem:[%s3 + $0xe98] sm:$0xff]
  %v734 = vld [vmem:[%s3 + $0xea0] sm:$0xff]
  %v735 = vld [vmem:[%s3 + $0xea8] sm:$0xff]
  %v736 = vld [vmem:[%s3 + $0xeb0] sm:$0xff]
  %v737 = vld [vmem:[%s3 + $0xeb8] sm:$0xff]
  %v738 = vld [vmem:[%s3 + $0xec0] sm:$0xff]
  %v739 = vld [vmem:[%s3 + $0xec8] sm:$0xff]
  %v740 = vld [vmem:[%s3 + $0xed0] sm:$0xff]
  %v741 = vld [vmem:[%s3 + $0xed8] sm:$0xff]
  %v742 = vld [vmem:[%s3 + $0xee0] sm:$0xff]
  %v743 = vld [vmem:[%s3 + $0xee8] sm:$0xff]
  %v744 = vld [vmem:[%s3 + $0xef0] sm:$0xff]
  %v745 = vld [vmem:[%s3 + $0xef8] sm:$0xff]
  %v746 = vld [vmem:[%s3 + $0xf00] sm:$0xff]
  %v747 = vld [vmem:[%s3 + $0xf08] sm:$0xff]
  %v748 = vld [vmem:[%s3 + $0xf10] sm:$0xff]
  %v749 = vld [vmem:[%s3 + $0xf18] sm:$0xff]
  %v750 = vld [vmem:[%s3 + $0xf20] sm:$0xff]
  %v751 = vld [vmem:[%s3 + $0xf28] sm:$0xff]
  %v752 = vld [vmem:[%s3 + $0xf30] sm:$0xff]
  %v753 = vld [vmem:[%s3 + $0xf38] sm:$0xff]
  %v754 = vld [vmem:[%s3 + $0xf40] sm:$0xff]
  %v755 = vld [vmem:[%s3 + $0xf48] sm:$0xff]
  %v756 = vld [vmem:[%s3 + $0xf50] sm:$0xff]
  %v757 = vld [vmem:[%s3 + $0xf58] sm:$0xff]
  %v758 = vld [vmem:[%s3 + $0xf60] sm:$0xff]
  %v759 = vld [vmem:[%s3 + $0xf68] sm:$0xff]
  %v760 = vld [vmem:[%s3 + $0xf70] sm:$0xff]
  %v761 = vld [vmem:[%s3 + $0xf78] sm:$0xff]
  %v762 = vld [vmem:[%s3 + $0xf80] sm:$0xff]
  %v763 = vld [vmem:[%s3 + $0xf88] sm:$0xff]
  %v764 = vld [vmem:[%s3 + $0xf90] sm:$0xff]
  %v765 = vld [vmem:[%s3 + $0xf98] sm:$0xff]
  %v766 = vld [vmem:[%s3 + $0xfa0] sm:$0xff]
  %v767 = vld [vmem:[%s3 + $0xfa8] sm:$0xff]
  %v768 = vld [vmem:[%s3 + $0xfb0] sm:$0xff]
  %v769 = vld [vmem:[%s3 + $0xfb8] sm:$0xff]
  %v770 = vld [vmem:[%s3 + $0xfc0] sm:$0xff]
  %v771 = vld [vmem:[%s3 + $0xfc8] sm:$0xff]
  %v772 = vld [vmem:[%s3 + $0xfd0] sm:$0xff]
  %v773 = vld [vmem:[%s3 + $0xfd8] sm:$0xff]
  %v774 = vld [vmem:[%s3 + $0xfe0] sm:$0xff]
  %v775 = vld [vmem:[%s3 + $0xfe8] sm:$0xff]
  %v776 = vld [vmem:[%s3 + $0xff0] sm:$0xff]
  %v777 = vld [vmem:[%s3 + $0xff8] sm:$0xff]
  %v778 = vld [vmem:[%s4] sm:$0xff]
  %v780 = vperm.slane %v778, 0
  %v781 = vperm.slane %v778, 1
  %v782 = vperm.slane %v778, 2
  %v783 = vperm.slane %v778, 3
  %v784 = vperm.slane %v778, 4
  %v785 = vperm.slane %v778, 5
  %v786 = vperm.slane %v778, 6
  %v787 = vperm.slane %v778, 7
  %v1308 = vunpack.c.l.b16 %v266
  %v1309 = vunpack.c.h.b16 %v266
  %v1310 = vunpack.c.l.b16 %v267
  %v1311 = vunpack.c.h.b16 %v267
  %v1312 = vunpack.c.l.b16 %v268
  %v1313 = vunpack.c.h.b16 %v268
  %v1314 = vunpack.c.l.b16 %v269
  %v1315 = vunpack.c.h.b16 %v269
  %v1316 = vunpack.c.l.b16 %v270
  %v1317 = vunpack.c.h.b16 %v270
  %v1318 = vunpack.c.l.b16 %v271
  %v1319 = vunpack.c.h.b16 %v271
  %v1320 = vunpack.c.l.b16 %v272
  %v1321 = vunpack.c.h.b16 %v272
  %v1322 = vunpack.c.l.b16 %v273
  %v1323 = vunpack.c.h.b16 %v273
  %v1324 = vunpack.c.l.b16 %v274
  %v1325 = vunpack.c.h.b16 %v274
  %v1326 = vunpack.c.l.b16 %v275
  %v1327 = vunpack.c.h.b16 %v275
  %v1328 = vunpack.c.l.b16 %v276
  %v1329 = vunpack.c.h.b16 %v276
  %v1330 = vunpack.c.l.b16 %v277
  %v1331 = vunpack.c.h.b16 %v277
  %v1332 = vunpack.c.l.b16 %v278
  %v1333 = vunpack.c.h.b16 %v278
  %v1334 = vunpack.c.l.b16 %v279
  %v1335 = vunpack.c.h.b16 %v279
  %v1336 = vunpack.c.l.b16 %v280
  %v1337 = vunpack.c.h.b16 %v280
  %v1338 = vunpack.c.l.b16 %v281
  %v1339 = vunpack.c.h.b16 %v281
  %v1340 = vunpack.c.l.b16 %v282
  %v1341 = vunpack.c.h.b16 %v282
  %v1342 = vunpack.c.l.b16 %v283
  %v1343 = vunpack.c.h.b16 %v283
  %v1344 = vunpack.c.l.b16 %v284
  %v1345 = vunpack.c.h.b16 %v284
  %v1346 = vunpack.c.l.b16 %v285
  %v1347 = vunpack.c.h.b16 %v285
  %v1348 = vunpack.c.l.b16 %v286
  %v1349 = vunpack.c.h.b16 %v286
  %v1350 = vunpack.c.l.b16 %v287
  %v1351 = vunpack.c.h.b16 %v287
  %v1352 = vunpack.c.l.b16 %v288
  %v1353 = vunpack.c.h.b16 %v288
  %v1354 = vunpack.c.l.b16 %v289
  %v1355 = vunpack.c.h.b16 %v289
  %v1356 = vunpack.c.l.b16 %v290
  %v1357 = vunpack.c.h.b16 %v290
  %v1358 = vunpack.c.l.b16 %v291
  %v1359 = vunpack.c.h.b16 %v291
  %v1360 = vunpack.c.l.b16 %v292
  %v1361 = vunpack.c.h.b16 %v292
  %v1362 = vunpack.c.l.b16 %v293
  %v1363 = vunpack.c.h.b16 %v293
  %v1364 = vunpack.c.l.b16 %v294
  %v1365 = vunpack.c.h.b16 %v294
  %v1366 = vunpack.c.l.b16 %v295
  %v1367 = vunpack.c.h.b16 %v295
  %v1368 = vunpack.c.l.b16 %v296
  %v1369 = vunpack.c.h.b16 %v296
  %v1370 = vunpack.c.l.b16 %v297
  %v1371 = vunpack.c.h.b16 %v297
  %v1372 = vunpack.c.l.b16 %v298
  %v1373 = vunpack.c.h.b16 %v298
  %v1374 = vunpack.c.l.b16 %v299
  %v1375 = vunpack.c.h.b16 %v299
  %v1376 = vunpack.c.l.b16 %v300
  %v1377 = vunpack.c.h.b16 %v300
  %v1378 = vunpack.c.l.b16 %v301
  %v1379 = vunpack.c.h.b16 %v301
  %v1380 = vunpack.c.l.b16 %v302
  %v1381 = vunpack.c.h.b16 %v302
  %v1382 = vunpack.c.l.b16 %v303
  %v1383 = vunpack.c.h.b16 %v303
  %v1384 = vunpack.c.l.b16 %v304
  %v1385 = vunpack.c.h.b16 %v304
  %v1386 = vunpack.c.l.b16 %v305
  %v1387 = vunpack.c.h.b16 %v305
  %v1388 = vunpack.c.l.b16 %v306
  %v1389 = vunpack.c.h.b16 %v306
  %v1390 = vunpack.c.l.b16 %v307
  %v1391 = vunpack.c.h.b16 %v307
  %v1392 = vunpack.c.l.b16 %v308
  %v1393 = vunpack.c.h.b16 %v308
  %v1394 = vunpack.c.l.b16 %v309
  %v1395 = vunpack.c.h.b16 %v309
  %v1396 = vunpack.c.l.b16 %v310
  %v1397 = vunpack.c.h.b16 %v310
  %v1398 = vunpack.c.l.b16 %v311
  %v1399 = vunpack.c.h.b16 %v311
  %v1400 = vunpack.c.l.b16 %v312
  %v1401 = vunpack.c.h.b16 %v312
  %v1402 = vunpack.c.l.b16 %v313
  %v1403 = vunpack.c.h.b16 %v313
  %v1404 = vunpack.c.l.b16 %v314
  %v1405 = vunpack.c.h.b16 %v314
  %v1406 = vunpack.c.l.b16 %v315
  %v1407 = vunpack.c.h.b16 %v315
  %v1408 = vunpack.c.l.b16 %v316
  %v1409 = vunpack.c.h.b16 %v316
  %v1410 = vunpack.c.l.b16 %v317
  %v1411 = vunpack.c.h.b16 %v317
  %v1412 = vunpack.c.l.b16 %v318
  %v1413 = vunpack.c.h.b16 %v318
  %v1414 = vunpack.c.l.b16 %v319
  %v1415 = vunpack.c.h.b16 %v319
  %v1416 = vunpack.c.l.b16 %v320
  %v1417 = vunpack.c.h.b16 %v320
  %v1418 = vunpack.c.l.b16 %v321
  %v1419 = vunpack.c.h.b16 %v321
  %v1420 = vunpack.c.l.b16 %v322
  %v1421 = vunpack.c.h.b16 %v322
  %v1422 = vunpack.c.l.b16 %v323
  %v1423 = vunpack.c.h.b16 %v323
  %v1424 = vunpack.c.l.b16 %v324
  %v1425 = vunpack.c.h.b16 %v324
  %v1426 = vunpack.c.l.b16 %v325
  %v1427 = vunpack.c.h.b16 %v325
  %v1428 = vunpack.c.l.b16 %v326
  %v1429 = vunpack.c.h.b16 %v326
  %v1430 = vunpack.c.l.b16 %v327
  %v1431 = vunpack.c.h.b16 %v327
  %v1432 = vunpack.c.l.b16 %v328
  %v1433 = vunpack.c.h.b16 %v328
  %v1434 = vunpack.c.l.b16 %v329
  %v1435 = vunpack.c.h.b16 %v329
  %v1436 = vunpack.c.l.b16 %v330
  %v1437 = vunpack.c.h.b16 %v330
  %v1438 = vunpack.c.l.b16 %v331
  %v1439 = vunpack.c.h.b16 %v331
  %v1440 = vunpack.c.l.b16 %v332
  %v1441 = vunpack.c.h.b16 %v332
  %v1442 = vunpack.c.l.b16 %v333
  %v1443 = vunpack.c.h.b16 %v333
  %v1444 = vunpack.c.l.b16 %v334
  %v1445 = vunpack.c.h.b16 %v334
  %v1446 = vunpack.c.l.b16 %v335
  %v1447 = vunpack.c.h.b16 %v335
  %v1448 = vunpack.c.l.b16 %v336
  %v1449 = vunpack.c.h.b16 %v336
  %v1450 = vunpack.c.l.b16 %v337
  %v1451 = vunpack.c.h.b16 %v337
  %v1452 = vunpack.c.l.b16 %v338
  %v1453 = vunpack.c.h.b16 %v338
  %v1454 = vunpack.c.l.b16 %v339
  %v1455 = vunpack.c.h.b16 %v339
  %v1456 = vunpack.c.l.b16 %v340
  %v1457 = vunpack.c.h.b16 %v340
  %v1458 = vunpack.c.l.b16 %v341
  %v1459 = vunpack.c.h.b16 %v341
  %v1460 = vunpack.c.l.b16 %v342
  %v1461 = vunpack.c.h.b16 %v342
  %v1462 = vunpack.c.l.b16 %v343
  %v1463 = vunpack.c.h.b16 %v343
  %v1464 = vunpack.c.l.b16 %v344
  %v1465 = vunpack.c.h.b16 %v344
  %v1466 = vunpack.c.l.b16 %v345
  %v1467 = vunpack.c.h.b16 %v345
  %v1468 = vunpack.c.l.b16 %v346
  %v1469 = vunpack.c.h.b16 %v346
  %v1470 = vunpack.c.l.b16 %v347
  %v1471 = vunpack.c.h.b16 %v347
  %v1472 = vunpack.c.l.b16 %v348
  %v1473 = vunpack.c.h.b16 %v348
  %v1474 = vunpack.c.l.b16 %v349
  %v1475 = vunpack.c.h.b16 %v349
  %v1476 = vunpack.c.l.b16 %v350
  %v1477 = vunpack.c.h.b16 %v350
  %v1478 = vunpack.c.l.b16 %v351
  %v1479 = vunpack.c.h.b16 %v351
  %v1480 = vunpack.c.l.b16 %v352
  %v1481 = vunpack.c.h.b16 %v352
  %v1482 = vunpack.c.l.b16 %v353
  %v1483 = vunpack.c.h.b16 %v353
  %v1484 = vunpack.c.l.b16 %v354
  %v1485 = vunpack.c.h.b16 %v354
  %v1486 = vunpack.c.l.b16 %v355
  %v1487 = vunpack.c.h.b16 %v355
  %v1488 = vunpack.c.l.b16 %v356
  %v1489 = vunpack.c.h.b16 %v356
  %v1490 = vunpack.c.l.b16 %v357
  %v1491 = vunpack.c.h.b16 %v357
  %v1492 = vunpack.c.l.b16 %v358
  %v1493 = vunpack.c.h.b16 %v358
  %v1494 = vunpack.c.l.b16 %v359
  %v1495 = vunpack.c.h.b16 %v359
  %v1496 = vunpack.c.l.b16 %v360
  %v1497 = vunpack.c.h.b16 %v360
  %v1498 = vunpack.c.l.b16 %v361
  %v1499 = vunpack.c.h.b16 %v361
  %v1500 = vunpack.c.l.b16 %v362
  %v1501 = vunpack.c.h.b16 %v362
  %v1502 = vunpack.c.l.b16 %v363
  %v1503 = vunpack.c.h.b16 %v363
  %v1504 = vunpack.c.l.b16 %v364
  %v1505 = vunpack.c.h.b16 %v364
  %v1506 = vunpack.c.l.b16 %v365
  %v1507 = vunpack.c.h.b16 %v365
  %v1508 = vunpack.c.l.b16 %v366
  %v1509 = vunpack.c.h.b16 %v366
  %v1510 = vunpack.c.l.b16 %v367
  %v1511 = vunpack.c.h.b16 %v367
  %v1512 = vunpack.c.l.b16 %v368
  %v1513 = vunpack.c.h.b16 %v368
  %v1514 = vunpack.c.l.b16 %v369
  %v1515 = vunpack.c.h.b16 %v369
  %v1516 = vunpack.c.l.b16 %v370
  %v1517 = vunpack.c.h.b16 %v370
  %v1518 = vunpack.c.l.b16 %v371
  %v1519 = vunpack.c.h.b16 %v371
  %v1520 = vunpack.c.l.b16 %v372
  %v1521 = vunpack.c.h.b16 %v372
  %v1522 = vunpack.c.l.b16 %v373
  %v1523 = vunpack.c.h.b16 %v373
  %v1524 = vunpack.c.l.b16 %v374
  %v1525 = vunpack.c.h.b16 %v374
  %v1526 = vunpack.c.l.b16 %v375
  %v1527 = vunpack.c.h.b16 %v375
  %v1528 = vunpack.c.l.b16 %v376
  %v1529 = vunpack.c.h.b16 %v376
  %v1530 = vunpack.c.l.b16 %v377
  %v1531 = vunpack.c.h.b16 %v377
  %v1532 = vunpack.c.l.b16 %v378
  %v1533 = vunpack.c.h.b16 %v378
  %v1534 = vunpack.c.l.b16 %v379
  %v1535 = vunpack.c.h.b16 %v379
  %v1536 = vunpack.c.l.b16 %v380
  %v1537 = vunpack.c.h.b16 %v380
  %v1538 = vunpack.c.l.b16 %v381
  %v1539 = vunpack.c.h.b16 %v381
  %v1540 = vunpack.c.l.b16 %v382
  %v1541 = vunpack.c.h.b16 %v382
  %v1542 = vunpack.c.l.b16 %v383
  %v1543 = vunpack.c.h.b16 %v383
  %v1544 = vunpack.c.l.b16 %v384
  %v1545 = vunpack.c.h.b16 %v384
  %v1546 = vunpack.c.l.b16 %v385
  %v1547 = vunpack.c.h.b16 %v385
  %v1548 = vunpack.c.l.b16 %v386
  %v1549 = vunpack.c.h.b16 %v386
  %v1550 = vunpack.c.l.b16 %v387
  %v1551 = vunpack.c.h.b16 %v387
  %v1552 = vunpack.c.l.b16 %v388
  %v1553 = vunpack.c.h.b16 %v388
  %v1554 = vunpack.c.l.b16 %v389
  %v1555 = vunpack.c.h.b16 %v389
  %v1556 = vunpack.c.l.b16 %v390
  %v1557 = vunpack.c.h.b16 %v390
  %v1558 = vunpack.c.l.b16 %v391
  %v1559 = vunpack.c.h.b16 %v391
  %v1560 = vunpack.c.l.b16 %v392
  %v1561 = vunpack.c.h.b16 %v392
  %v1562 = vunpack.c.l.b16 %v393
  %v1563 = vunpack.c.h.b16 %v393
  %v1564 = vunpack.c.l.b16 %v394
  %v1565 = vunpack.c.h.b16 %v394
  %v1566 = vunpack.c.l.b16 %v395
  %v1567 = vunpack.c.h.b16 %v395
  %v1568 = vunpack.c.l.b16 %v396
  %v1569 = vunpack.c.h.b16 %v396
  %v1570 = vunpack.c.l.b16 %v397
  %v1571 = vunpack.c.h.b16 %v397
  %v1572 = vunpack.c.l.b16 %v398
  %v1573 = vunpack.c.h.b16 %v398
  %v1574 = vunpack.c.l.b16 %v399
  %v1575 = vunpack.c.h.b16 %v399
  %v1576 = vunpack.c.l.b16 %v400
  %v1577 = vunpack.c.h.b16 %v400
  %v1578 = vunpack.c.l.b16 %v401
  %v1579 = vunpack.c.h.b16 %v401
  %v1580 = vunpack.c.l.b16 %v402
  %v1581 = vunpack.c.h.b16 %v402
  %v1582 = vunpack.c.l.b16 %v403
  %v1583 = vunpack.c.h.b16 %v403
  %v1584 = vunpack.c.l.b16 %v404
  %v1585 = vunpack.c.h.b16 %v404
  %v1586 = vunpack.c.l.b16 %v405
  %v1587 = vunpack.c.h.b16 %v405
  %v1588 = vunpack.c.l.b16 %v406
  %v1589 = vunpack.c.h.b16 %v406
  %v1590 = vunpack.c.l.b16 %v407
  %v1591 = vunpack.c.h.b16 %v407
  %v1592 = vunpack.c.l.b16 %v408
  %v1593 = vunpack.c.h.b16 %v408
  %v1594 = vunpack.c.l.b16 %v409
  %v1595 = vunpack.c.h.b16 %v409
  %v1596 = vunpack.c.l.b16 %v410
  %v1597 = vunpack.c.h.b16 %v410
  %v1598 = vunpack.c.l.b16 %v411
  %v1599 = vunpack.c.h.b16 %v411
  %v1600 = vunpack.c.l.b16 %v412
  %v1601 = vunpack.c.h.b16 %v412
  %v1602 = vunpack.c.l.b16 %v413
  %v1603 = vunpack.c.h.b16 %v413
  %v1604 = vunpack.c.l.b16 %v414
  %v1605 = vunpack.c.h.b16 %v414
  %v1606 = vunpack.c.l.b16 %v415
  %v1607 = vunpack.c.h.b16 %v415
  %v1608 = vunpack.c.l.b16 %v416
  %v1609 = vunpack.c.h.b16 %v416
  %v1610 = vunpack.c.l.b16 %v417
  %v1611 = vunpack.c.h.b16 %v417
  %v1612 = vunpack.c.l.b16 %v418
  %v1613 = vunpack.c.h.b16 %v418
  %v1614 = vunpack.c.l.b16 %v419
  %v1615 = vunpack.c.h.b16 %v419
  %v1616 = vunpack.c.l.b16 %v420
  %v1617 = vunpack.c.h.b16 %v420
  %v1618 = vunpack.c.l.b16 %v421
  %v1619 = vunpack.c.h.b16 %v421
  %v1620 = vunpack.c.l.b16 %v422
  %v1621 = vunpack.c.h.b16 %v422
  %v1622 = vunpack.c.l.b16 %v423
  %v1623 = vunpack.c.h.b16 %v423
  %v1624 = vunpack.c.l.b16 %v424
  %v1625 = vunpack.c.h.b16 %v424
  %v1626 = vunpack.c.l.b16 %v425
  %v1627 = vunpack.c.h.b16 %v425
  %v1628 = vunpack.c.l.b16 %v426
  %v1629 = vunpack.c.h.b16 %v426
  %v1630 = vunpack.c.l.b16 %v427
  %v1631 = vunpack.c.h.b16 %v427
  %v1632 = vunpack.c.l.b16 %v428
  %v1633 = vunpack.c.h.b16 %v428
  %v1634 = vunpack.c.l.b16 %v429
  %v1635 = vunpack.c.h.b16 %v429
  %v1636 = vunpack.c.l.b16 %v430
  %v1637 = vunpack.c.h.b16 %v430
  %v1638 = vunpack.c.l.b16 %v431
  %v1639 = vunpack.c.h.b16 %v431
  %v1640 = vunpack.c.l.b16 %v432
  %v1641 = vunpack.c.h.b16 %v432
  %v1642 = vunpack.c.l.b16 %v433
  %v1643 = vunpack.c.h.b16 %v433
  %v1644 = vunpack.c.l.b16 %v434
  %v1645 = vunpack.c.h.b16 %v434
  %v1646 = vunpack.c.l.b16 %v435
  %v1647 = vunpack.c.h.b16 %v435
  %v1648 = vunpack.c.l.b16 %v436
  %v1649 = vunpack.c.h.b16 %v436
  %v1650 = vunpack.c.l.b16 %v437
  %v1651 = vunpack.c.h.b16 %v437
  %v1652 = vunpack.c.l.b16 %v438
  %v1653 = vunpack.c.h.b16 %v438
  %v1654 = vunpack.c.l.b16 %v439
  %v1655 = vunpack.c.h.b16 %v439
  %v1656 = vunpack.c.l.b16 %v440
  %v1657 = vunpack.c.h.b16 %v440
  %v1658 = vunpack.c.l.b16 %v441
  %v1659 = vunpack.c.h.b16 %v441
  %v1660 = vunpack.c.l.b16 %v442
  %v1661 = vunpack.c.h.b16 %v442
  %v1662 = vunpack.c.l.b16 %v443
  %v1663 = vunpack.c.h.b16 %v443
  %v1664 = vunpack.c.l.b16 %v444
  %v1665 = vunpack.c.h.b16 %v444
  %v1666 = vunpack.c.l.b16 %v445
  %v1667 = vunpack.c.h.b16 %v445
  %v1668 = vunpack.c.l.b16 %v446
  %v1669 = vunpack.c.h.b16 %v446
  %v1670 = vunpack.c.l.b16 %v447
  %v1671 = vunpack.c.h.b16 %v447
  %v1672 = vunpack.c.l.b16 %v448
  %v1673 = vunpack.c.h.b16 %v448
  %v1674 = vunpack.c.l.b16 %v449
  %v1675 = vunpack.c.h.b16 %v449
  %v1676 = vunpack.c.l.b16 %v450
  %v1677 = vunpack.c.h.b16 %v450
  %v1678 = vunpack.c.l.b16 %v451
  %v1679 = vunpack.c.h.b16 %v451
  %v1680 = vunpack.c.l.b16 %v452
  %v1681 = vunpack.c.h.b16 %v452
  %v1682 = vunpack.c.l.b16 %v453
  %v1683 = vunpack.c.h.b16 %v453
  %v1684 = vunpack.c.l.b16 %v454
  %v1685 = vunpack.c.h.b16 %v454
  %v1686 = vunpack.c.l.b16 %v455
  %v1687 = vunpack.c.h.b16 %v455
  %v1688 = vunpack.c.l.b16 %v456
  %v1689 = vunpack.c.h.b16 %v456
  %v1690 = vunpack.c.l.b16 %v457
  %v1691 = vunpack.c.h.b16 %v457
  %v1692 = vunpack.c.l.b16 %v458
  %v1693 = vunpack.c.h.b16 %v458
  %v1694 = vunpack.c.l.b16 %v459
  %v1695 = vunpack.c.h.b16 %v459
  %v1696 = vunpack.c.l.b16 %v460
  %v1697 = vunpack.c.h.b16 %v460
  %v1698 = vunpack.c.l.b16 %v461
  %v1699 = vunpack.c.h.b16 %v461
  %v1700 = vunpack.c.l.b16 %v462
  %v1701 = vunpack.c.h.b16 %v462
  %v1702 = vunpack.c.l.b16 %v463
  %v1703 = vunpack.c.h.b16 %v463
  %v1704 = vunpack.c.l.b16 %v464
  %v1705 = vunpack.c.h.b16 %v464
  %v1706 = vunpack.c.l.b16 %v465
  %v1707 = vunpack.c.h.b16 %v465
  %v1708 = vunpack.c.l.b16 %v466
  %v1709 = vunpack.c.h.b16 %v466
  %v1710 = vunpack.c.l.b16 %v467
  %v1711 = vunpack.c.h.b16 %v467
  %v1712 = vunpack.c.l.b16 %v468
  %v1713 = vunpack.c.h.b16 %v468
  %v1714 = vunpack.c.l.b16 %v469
  %v1715 = vunpack.c.h.b16 %v469
  %v1716 = vunpack.c.l.b16 %v470
  %v1717 = vunpack.c.h.b16 %v470
  %v1718 = vunpack.c.l.b16 %v471
  %v1719 = vunpack.c.h.b16 %v471
  %v1720 = vunpack.c.l.b16 %v472
  %v1721 = vunpack.c.h.b16 %v472
  %v1722 = vunpack.c.l.b16 %v473
  %v1723 = vunpack.c.h.b16 %v473
  %v1724 = vunpack.c.l.b16 %v474
  %v1725 = vunpack.c.h.b16 %v474
  %v1726 = vunpack.c.l.b16 %v475
  %v1727 = vunpack.c.h.b16 %v475
  %v1728 = vunpack.c.l.b16 %v476
  %v1729 = vunpack.c.h.b16 %v476
  %v1730 = vunpack.c.l.b16 %v477
  %v1731 = vunpack.c.h.b16 %v477
  %v1732 = vunpack.c.l.b16 %v478
  %v1733 = vunpack.c.h.b16 %v478
  %v1734 = vunpack.c.l.b16 %v479
  %v1735 = vunpack.c.h.b16 %v479
  %v1736 = vunpack.c.l.b16 %v480
  %v1737 = vunpack.c.h.b16 %v480
  %v1738 = vunpack.c.l.b16 %v481
  %v1739 = vunpack.c.h.b16 %v481
  %v1740 = vunpack.c.l.b16 %v482
  %v1741 = vunpack.c.h.b16 %v482
  %v1742 = vunpack.c.l.b16 %v483
  %v1743 = vunpack.c.h.b16 %v483
  %v1744 = vunpack.c.l.b16 %v484
  %v1745 = vunpack.c.h.b16 %v484
  %v1746 = vunpack.c.l.b16 %v485
  %v1747 = vunpack.c.h.b16 %v485
  %v1748 = vunpack.c.l.b16 %v486
  %v1749 = vunpack.c.h.b16 %v486
  %v1750 = vunpack.c.l.b16 %v487
  %v1751 = vunpack.c.h.b16 %v487
  %v1752 = vunpack.c.l.b16 %v488
  %v1753 = vunpack.c.h.b16 %v488
  %v1754 = vunpack.c.l.b16 %v489
  %v1755 = vunpack.c.h.b16 %v489
  %v1756 = vunpack.c.l.b16 %v490
  %v1757 = vunpack.c.h.b16 %v490
  %v1758 = vunpack.c.l.b16 %v491
  %v1759 = vunpack.c.h.b16 %v491
  %v1760 = vunpack.c.l.b16 %v492
  %v1761 = vunpack.c.h.b16 %v492
  %v1762 = vunpack.c.l.b16 %v493
  %v1763 = vunpack.c.h.b16 %v493
  %v1764 = vunpack.c.l.b16 %v494
  %v1765 = vunpack.c.h.b16 %v494
  %v1766 = vunpack.c.l.b16 %v495
  %v1767 = vunpack.c.h.b16 %v495
  %v1768 = vunpack.c.l.b16 %v496
  %v1769 = vunpack.c.h.b16 %v496
  %v1770 = vunpack.c.l.b16 %v497
  %v1771 = vunpack.c.h.b16 %v497
  %v1772 = vunpack.c.l.b16 %v498
  %v1773 = vunpack.c.h.b16 %v498
  %v1774 = vunpack.c.l.b16 %v499
  %v1775 = vunpack.c.h.b16 %v499
  %v1776 = vunpack.c.l.b16 %v500
  %v1777 = vunpack.c.h.b16 %v500
  %v1778 = vunpack.c.l.b16 %v501
  %v1779 = vunpack.c.h.b16 %v501
  %v1780 = vunpack.c.l.b16 %v502
  %v1781 = vunpack.c.h.b16 %v502
  %v1782 = vunpack.c.l.b16 %v503
  %v1783 = vunpack.c.h.b16 %v503
  %v1784 = vunpack.c.l.b16 %v504
  %v1785 = vunpack.c.h.b16 %v504
  %v1786 = vunpack.c.l.b16 %v505
  %v1787 = vunpack.c.h.b16 %v505
  %v1788 = vunpack.c.l.b16 %v506
  %v1789 = vunpack.c.h.b16 %v506
  %v1790 = vunpack.c.l.b16 %v507
  %v1791 = vunpack.c.h.b16 %v507
  %v1792 = vunpack.c.l.b16 %v508
  %v1793 = vunpack.c.h.b16 %v508
  %v1794 = vunpack.c.l.b16 %v509
  %v1795 = vunpack.c.h.b16 %v509
  %v1796 = vunpack.c.l.b16 %v510
  %v1797 = vunpack.c.h.b16 %v510
  %v1798 = vunpack.c.l.b16 %v511
  %v1799 = vunpack.c.h.b16 %v511
  %v1800 = vunpack.c.l.b16 %v512
  %v1801 = vunpack.c.h.b16 %v512
  %v1802 = vunpack.c.l.b16 %v513
  %v1803 = vunpack.c.h.b16 %v513
  %v1804 = vunpack.c.l.b16 %v514
  %v1805 = vunpack.c.h.b16 %v514
  %v1806 = vunpack.c.l.b16 %v515
  %v1807 = vunpack.c.h.b16 %v515
  %v1808 = vunpack.c.l.b16 %v516
  %v1809 = vunpack.c.h.b16 %v516
  %v1810 = vunpack.c.l.b16 %v517
  %v1811 = vunpack.c.h.b16 %v517
  %v1812 = vunpack.c.l.b16 %v518
  %v1813 = vunpack.c.h.b16 %v518
  %v1814 = vunpack.c.l.b16 %v519
  %v1815 = vunpack.c.h.b16 %v519
  %v1816 = vunpack.c.l.b16 %v520
  %v1817 = vunpack.c.h.b16 %v520
  %v1818 = vunpack.c.l.b16 %v521
  %v1819 = vunpack.c.h.b16 %v521
  %v1820 = vunpack.c.l.b16 %v522
  %v1821 = vunpack.c.h.b16 %v522
  %v1822 = vunpack.c.l.b16 %v523
  %v1823 = vunpack.c.h.b16 %v523
  %v1824 = vunpack.c.l.b16 %v524
  %v1825 = vunpack.c.h.b16 %v524
  %v1826 = vunpack.c.l.b16 %v525
  %v1827 = vunpack.c.h.b16 %v525
  %v1828 = vunpack.c.l.b16 %v526
  %v1829 = vunpack.c.h.b16 %v526
  %v1830 = vunpack.c.l.b16 %v527
  %v1831 = vunpack.c.h.b16 %v527
  %v1832 = vunpack.c.l.b16 %v528
  %v1833 = vunpack.c.h.b16 %v528
  %v1834 = vunpack.c.l.b16 %v529
  %v1835 = vunpack.c.h.b16 %v529
  %v1836 = vunpack.c.l.b16 %v530
  %v1837 = vunpack.c.h.b16 %v530
  %v1838 = vunpack.c.l.b16 %v531
  %v1839 = vunpack.c.h.b16 %v531
  %v1840 = vunpack.c.l.b16 %v532
  %v1841 = vunpack.c.h.b16 %v532
  %v1842 = vunpack.c.l.b16 %v533
  %v1843 = vunpack.c.h.b16 %v533
  %v1844 = vunpack.c.l.b16 %v534
  %v1845 = vunpack.c.h.b16 %v534
  %v1846 = vunpack.c.l.b16 %v535
  %v1847 = vunpack.c.h.b16 %v535
  %v1848 = vunpack.c.l.b16 %v536
  %v1849 = vunpack.c.h.b16 %v536
  %v1850 = vunpack.c.l.b16 %v537
  %v1851 = vunpack.c.h.b16 %v537
  %v1852 = vunpack.c.l.b16 %v538
  %v1853 = vunpack.c.h.b16 %v538
  %v1854 = vunpack.c.l.b16 %v539
  %v1855 = vunpack.c.h.b16 %v539
  %v1856 = vunpack.c.l.b16 %v540
  %v1857 = vunpack.c.h.b16 %v540
  %v1858 = vunpack.c.l.b16 %v541
  %v1859 = vunpack.c.h.b16 %v541
  %v1860 = vunpack.c.l.b16 %v542
  %v1861 = vunpack.c.h.b16 %v542
  %v1862 = vunpack.c.l.b16 %v543
  %v1863 = vunpack.c.h.b16 %v543
  %v1864 = vunpack.c.l.b16 %v544
  %v1865 = vunpack.c.h.b16 %v544
  %v1866 = vunpack.c.l.b16 %v545
  %v1867 = vunpack.c.h.b16 %v545
  %v1868 = vunpack.c.l.b16 %v546
  %v1869 = vunpack.c.h.b16 %v546
  %v1870 = vunpack.c.l.b16 %v547
  %v1871 = vunpack.c.h.b16 %v547
  %v1872 = vunpack.c.l.b16 %v548
  %v1873 = vunpack.c.h.b16 %v548
  %v1874 = vunpack.c.l.b16 %v549
  %v1875 = vunpack.c.h.b16 %v549
  %v1876 = vunpack.c.l.b16 %v550
  %v1877 = vunpack.c.h.b16 %v550
  %v1878 = vunpack.c.l.b16 %v551
  %v1879 = vunpack.c.h.b16 %v551
  %v1880 = vunpack.c.l.b16 %v552
  %v1881 = vunpack.c.h.b16 %v552
  %v1882 = vunpack.c.l.b16 %v553
  %v1883 = vunpack.c.h.b16 %v553
  %v1884 = vunpack.c.l.b16 %v554
  %v1885 = vunpack.c.h.b16 %v554
  %v1886 = vunpack.c.l.b16 %v555
  %v1887 = vunpack.c.h.b16 %v555
  %v1888 = vunpack.c.l.b16 %v556
  %v1889 = vunpack.c.h.b16 %v556
  %v1890 = vunpack.c.l.b16 %v557
  %v1891 = vunpack.c.h.b16 %v557
  %v1892 = vunpack.c.l.b16 %v558
  %v1893 = vunpack.c.h.b16 %v558
  %v1894 = vunpack.c.l.b16 %v559
  %v1895 = vunpack.c.h.b16 %v559
  %v1896 = vunpack.c.l.b16 %v560
  %v1897 = vunpack.c.h.b16 %v560
  %v1898 = vunpack.c.l.b16 %v561
  %v1899 = vunpack.c.h.b16 %v561
  %v1900 = vunpack.c.l.b16 %v562
  %v1901 = vunpack.c.h.b16 %v562
  %v1902 = vunpack.c.l.b16 %v563
  %v1903 = vunpack.c.h.b16 %v563
  %v1904 = vunpack.c.l.b16 %v564
  %v1905 = vunpack.c.h.b16 %v564
  %v1906 = vunpack.c.l.b16 %v565
  %v1907 = vunpack.c.h.b16 %v565
  %v1908 = vunpack.c.l.b16 %v566
  %v1909 = vunpack.c.h.b16 %v566
  %v1910 = vunpack.c.l.b16 %v567
  %v1911 = vunpack.c.h.b16 %v567
  %v1912 = vunpack.c.l.b16 %v568
  %v1913 = vunpack.c.h.b16 %v568
  %v1914 = vunpack.c.l.b16 %v569
  %v1915 = vunpack.c.h.b16 %v569
  %v1916 = vunpack.c.l.b16 %v570
  %v1917 = vunpack.c.h.b16 %v570
  %v1918 = vunpack.c.l.b16 %v571
  %v1919 = vunpack.c.h.b16 %v571
  %v1920 = vunpack.c.l.b16 %v572
  %v1921 = vunpack.c.h.b16 %v572
  %v1922 = vunpack.c.l.b16 %v573
  %v1923 = vunpack.c.h.b16 %v573
  %v1924 = vunpack.c.l.b16 %v574
  %v1925 = vunpack.c.h.b16 %v574
  %v1926 = vunpack.c.l.b16 %v575
  %v1927 = vunpack.c.h.b16 %v575
  %v1928 = vunpack.c.l.b16 %v576
  %v1929 = vunpack.c.h.b16 %v576
  %v1930 = vunpack.c.l.b16 %v577
  %v1931 = vunpack.c.h.b16 %v577
  %v1932 = vunpack.c.l.b16 %v578
  %v1933 = vunpack.c.h.b16 %v578
  %v1934 = vunpack.c.l.b16 %v579
  %v1935 = vunpack.c.h.b16 %v579
  %v1936 = vunpack.c.l.b16 %v580
  %v1937 = vunpack.c.h.b16 %v580
  %v1938 = vunpack.c.l.b16 %v581
  %v1939 = vunpack.c.h.b16 %v581
  %v1940 = vunpack.c.l.b16 %v582
  %v1941 = vunpack.c.h.b16 %v582
  %v1942 = vunpack.c.l.b16 %v583
  %v1943 = vunpack.c.h.b16 %v583
  %v1944 = vunpack.c.l.b16 %v584
  %v1945 = vunpack.c.h.b16 %v584
  %v1946 = vunpack.c.l.b16 %v585
  %v1947 = vunpack.c.h.b16 %v585
  %v1948 = vunpack.c.l.b16 %v586
  %v1949 = vunpack.c.h.b16 %v586
  %v1950 = vunpack.c.l.b16 %v587
  %v1951 = vunpack.c.h.b16 %v587
  %v1952 = vunpack.c.l.b16 %v588
  %v1953 = vunpack.c.h.b16 %v588
  %v1954 = vunpack.c.l.b16 %v589
  %v1955 = vunpack.c.h.b16 %v589
  %v1956 = vunpack.c.l.b16 %v590
  %v1957 = vunpack.c.h.b16 %v590
  %v1958 = vunpack.c.l.b16 %v591
  %v1959 = vunpack.c.h.b16 %v591
  %v1960 = vunpack.c.l.b16 %v592
  %v1961 = vunpack.c.h.b16 %v592
  %v1962 = vunpack.c.l.b16 %v593
  %v1963 = vunpack.c.h.b16 %v593
  %v1964 = vunpack.c.l.b16 %v594
  %v1965 = vunpack.c.h.b16 %v594
  %v1966 = vunpack.c.l.b16 %v595
  %v1967 = vunpack.c.h.b16 %v595
  %v1968 = vunpack.c.l.b16 %v596
  %v1969 = vunpack.c.h.b16 %v596
  %v1970 = vunpack.c.l.b16 %v597
  %v1971 = vunpack.c.h.b16 %v597
  %v1972 = vunpack.c.l.b16 %v598
  %v1973 = vunpack.c.h.b16 %v598
  %v1974 = vunpack.c.l.b16 %v599
  %v1975 = vunpack.c.h.b16 %v599
  %v1976 = vunpack.c.l.b16 %v600
  %v1977 = vunpack.c.h.b16 %v600
  %v1978 = vunpack.c.l.b16 %v601
  %v1979 = vunpack.c.h.b16 %v601
  %v1980 = vunpack.c.l.b16 %v602
  %v1981 = vunpack.c.h.b16 %v602
  %v1982 = vunpack.c.l.b16 %v603
  %v1983 = vunpack.c.h.b16 %v603
  %v1984 = vunpack.c.l.b16 %v604
  %v1985 = vunpack.c.h.b16 %v604
  %v1986 = vunpack.c.l.b16 %v605
  %v1987 = vunpack.c.h.b16 %v605
  %v1988 = vunpack.c.l.b16 %v606
  %v1989 = vunpack.c.h.b16 %v606
  %v1990 = vunpack.c.l.b16 %v607
  %v1991 = vunpack.c.h.b16 %v607
  %v1992 = vunpack.c.l.b16 %v608
  %v1993 = vunpack.c.h.b16 %v608
  %v1994 = vunpack.c.l.b16 %v609
  %v1995 = vunpack.c.h.b16 %v609
  %v1996 = vunpack.c.l.b16 %v610
  %v1997 = vunpack.c.h.b16 %v610
  %v1998 = vunpack.c.l.b16 %v611
  %v1999 = vunpack.c.h.b16 %v611
  %v2000 = vunpack.c.l.b16 %v612
  %v2001 = vunpack.c.h.b16 %v612
  %v2002 = vunpack.c.l.b16 %v613
  %v2003 = vunpack.c.h.b16 %v613
  %v2004 = vunpack.c.l.b16 %v614
  %v2005 = vunpack.c.h.b16 %v614
  %v2006 = vunpack.c.l.b16 %v615
  %v2007 = vunpack.c.h.b16 %v615
  %v2008 = vunpack.c.l.b16 %v616
  %v2009 = vunpack.c.h.b16 %v616
  %v2010 = vunpack.c.l.b16 %v617
  %v2011 = vunpack.c.h.b16 %v617
  %v2012 = vunpack.c.l.b16 %v618
  %v2013 = vunpack.c.h.b16 %v618
  %v2014 = vunpack.c.l.b16 %v619
  %v2015 = vunpack.c.h.b16 %v619
  %v2016 = vunpack.c.l.b16 %v620
  %v2017 = vunpack.c.h.b16 %v620
  %v2018 = vunpack.c.l.b16 %v621
  %v2019 = vunpack.c.h.b16 %v621
  %v2020 = vunpack.c.l.b16 %v622
  %v2021 = vunpack.c.h.b16 %v622
  %v2022 = vunpack.c.l.b16 %v623
  %v2023 = vunpack.c.h.b16 %v623
  %v2024 = vunpack.c.l.b16 %v624
  %v2025 = vunpack.c.h.b16 %v624
  %v2026 = vunpack.c.l.b16 %v625
  %v2027 = vunpack.c.h.b16 %v625
  %v2028 = vunpack.c.l.b16 %v626
  %v2029 = vunpack.c.h.b16 %v626
  %v2030 = vunpack.c.l.b16 %v627
  %v2031 = vunpack.c.h.b16 %v627
  %v2032 = vunpack.c.l.b16 %v628
  %v2033 = vunpack.c.h.b16 %v628
  %v2034 = vunpack.c.l.b16 %v629
  %v2035 = vunpack.c.h.b16 %v629
  %v2036 = vunpack.c.l.b16 %v630
  %v2037 = vunpack.c.h.b16 %v630
  %v2038 = vunpack.c.l.b16 %v631
  %v2039 = vunpack.c.h.b16 %v631
  %v2040 = vunpack.c.l.b16 %v632
  %v2041 = vunpack.c.h.b16 %v632
  %v2042 = vunpack.c.l.b16 %v633
  %v2043 = vunpack.c.h.b16 %v633
  %v2044 = vunpack.c.l.b16 %v634
  %v2045 = vunpack.c.h.b16 %v634
  %v2046 = vunpack.c.l.b16 %v635
  %v2047 = vunpack.c.h.b16 %v635
  %v2048 = vunpack.c.l.b16 %v636
  %v2049 = vunpack.c.h.b16 %v636
  %v2050 = vunpack.c.l.b16 %v637
  %v2051 = vunpack.c.h.b16 %v637
  %v2052 = vunpack.c.l.b16 %v638
  %v2053 = vunpack.c.h.b16 %v638
  %v2054 = vunpack.c.l.b16 %v639
  %v2055 = vunpack.c.h.b16 %v639
  %v2056 = vunpack.c.l.b16 %v640
  %v2057 = vunpack.c.h.b16 %v640
  %v2058 = vunpack.c.l.b16 %v641
  %v2059 = vunpack.c.h.b16 %v641
  %v2060 = vunpack.c.l.b16 %v642
  %v2061 = vunpack.c.h.b16 %v642
  %v2062 = vunpack.c.l.b16 %v643
  %v2063 = vunpack.c.h.b16 %v643
  %v2064 = vunpack.c.l.b16 %v644
  %v2065 = vunpack.c.h.b16 %v644
  %v2066 = vunpack.c.l.b16 %v645
  %v2067 = vunpack.c.h.b16 %v645
  %v2068 = vunpack.c.l.b16 %v646
  %v2069 = vunpack.c.h.b16 %v646
  %v2070 = vunpack.c.l.b16 %v647
  %v2071 = vunpack.c.h.b16 %v647
  %v2072 = vunpack.c.l.b16 %v648
  %v2073 = vunpack.c.h.b16 %v648
  %v2074 = vunpack.c.l.b16 %v649
  %v2075 = vunpack.c.h.b16 %v649
  %v2076 = vunpack.c.l.b16 %v650
  %v2077 = vunpack.c.h.b16 %v650
  %v2078 = vunpack.c.l.b16 %v651
  %v2079 = vunpack.c.h.b16 %v651
  %v2080 = vunpack.c.l.b16 %v652
  %v2081 = vunpack.c.h.b16 %v652
  %v2082 = vunpack.c.l.b16 %v653
  %v2083 = vunpack.c.h.b16 %v653
  %v2084 = vunpack.c.l.b16 %v654
  %v2085 = vunpack.c.h.b16 %v654
  %v2086 = vunpack.c.l.b16 %v655
  %v2087 = vunpack.c.h.b16 %v655
  %v2088 = vunpack.c.l.b16 %v656
  %v2089 = vunpack.c.h.b16 %v656
  %v2090 = vunpack.c.l.b16 %v657
  %v2091 = vunpack.c.h.b16 %v657
  %v2092 = vunpack.c.l.b16 %v658
  %v2093 = vunpack.c.h.b16 %v658
  %v2094 = vunpack.c.l.b16 %v659
  %v2095 = vunpack.c.h.b16 %v659
  %v2096 = vunpack.c.l.b16 %v660
  %v2097 = vunpack.c.h.b16 %v660
  %v2098 = vunpack.c.l.b16 %v661
  %v2099 = vunpack.c.h.b16 %v661
  %v2100 = vunpack.c.l.b16 %v662
  %v2101 = vunpack.c.h.b16 %v662
  %v2102 = vunpack.c.l.b16 %v663
  %v2103 = vunpack.c.h.b16 %v663
  %v2104 = vunpack.c.l.b16 %v664
  %v2105 = vunpack.c.h.b16 %v664
  %v2106 = vunpack.c.l.b16 %v665
  %v2107 = vunpack.c.h.b16 %v665
  %v2108 = vunpack.c.l.b16 %v666
  %v2109 = vunpack.c.h.b16 %v666
  %v2110 = vunpack.c.l.b16 %v667
  %v2111 = vunpack.c.h.b16 %v667
  %v2112 = vunpack.c.l.b16 %v668
  %v2113 = vunpack.c.h.b16 %v668
  %v2114 = vunpack.c.l.b16 %v669
  %v2115 = vunpack.c.h.b16 %v669
  %v2116 = vunpack.c.l.b16 %v670
  %v2117 = vunpack.c.h.b16 %v670
  %v2118 = vunpack.c.l.b16 %v671
  %v2119 = vunpack.c.h.b16 %v671
  %v2120 = vunpack.c.l.b16 %v672
  %v2121 = vunpack.c.h.b16 %v672
  %v2122 = vunpack.c.l.b16 %v673
  %v2123 = vunpack.c.h.b16 %v673
  %v2124 = vunpack.c.l.b16 %v674
  %v2125 = vunpack.c.h.b16 %v674
  %v2126 = vunpack.c.l.b16 %v675
  %v2127 = vunpack.c.h.b16 %v675
  %v2128 = vunpack.c.l.b16 %v676
  %v2129 = vunpack.c.h.b16 %v676
  %v2130 = vunpack.c.l.b16 %v677
  %v2131 = vunpack.c.h.b16 %v677
  %v2132 = vunpack.c.l.b16 %v678
  %v2133 = vunpack.c.h.b16 %v678
  %v2134 = vunpack.c.l.b16 %v679
  %v2135 = vunpack.c.h.b16 %v679
  %v2136 = vunpack.c.l.b16 %v680
  %v2137 = vunpack.c.h.b16 %v680
  %v2138 = vunpack.c.l.b16 %v681
  %v2139 = vunpack.c.h.b16 %v681
  %v2140 = vunpack.c.l.b16 %v682
  %v2141 = vunpack.c.h.b16 %v682
  %v2142 = vunpack.c.l.b16 %v683
  %v2143 = vunpack.c.h.b16 %v683
  %v2144 = vunpack.c.l.b16 %v684
  %v2145 = vunpack.c.h.b16 %v684
  %v2146 = vunpack.c.l.b16 %v685
  %v2147 = vunpack.c.h.b16 %v685
  %v2148 = vunpack.c.l.b16 %v686
  %v2149 = vunpack.c.h.b16 %v686
  %v2150 = vunpack.c.l.b16 %v687
  %v2151 = vunpack.c.h.b16 %v687
  %v2152 = vunpack.c.l.b16 %v688
  %v2153 = vunpack.c.h.b16 %v688
  %v2154 = vunpack.c.l.b16 %v689
  %v2155 = vunpack.c.h.b16 %v689
  %v2156 = vunpack.c.l.b16 %v690
  %v2157 = vunpack.c.h.b16 %v690
  %v2158 = vunpack.c.l.b16 %v691
  %v2159 = vunpack.c.h.b16 %v691
  %v2160 = vunpack.c.l.b16 %v692
  %v2161 = vunpack.c.h.b16 %v692
  %v2162 = vunpack.c.l.b16 %v693
  %v2163 = vunpack.c.h.b16 %v693
  %v2164 = vunpack.c.l.b16 %v694
  %v2165 = vunpack.c.h.b16 %v694
  %v2166 = vunpack.c.l.b16 %v695
  %v2167 = vunpack.c.h.b16 %v695
  %v2168 = vunpack.c.l.b16 %v696
  %v2169 = vunpack.c.h.b16 %v696
  %v2170 = vunpack.c.l.b16 %v697
  %v2171 = vunpack.c.h.b16 %v697
  %v2172 = vunpack.c.l.b16 %v698
  %v2173 = vunpack.c.h.b16 %v698
  %v2174 = vunpack.c.l.b16 %v699
  %v2175 = vunpack.c.h.b16 %v699
  %v2176 = vunpack.c.l.b16 %v700
  %v2177 = vunpack.c.h.b16 %v700
  %v2178 = vunpack.c.l.b16 %v701
  %v2179 = vunpack.c.h.b16 %v701
  %v2180 = vunpack.c.l.b16 %v702
  %v2181 = vunpack.c.h.b16 %v702
  %v2182 = vunpack.c.l.b16 %v703
  %v2183 = vunpack.c.h.b16 %v703
  %v2184 = vunpack.c.l.b16 %v704
  %v2185 = vunpack.c.h.b16 %v704
  %v2186 = vunpack.c.l.b16 %v705
  %v2187 = vunpack.c.h.b16 %v705
  %v2188 = vunpack.c.l.b16 %v706
  %v2189 = vunpack.c.h.b16 %v706
  %v2190 = vunpack.c.l.b16 %v707
  %v2191 = vunpack.c.h.b16 %v707
  %v2192 = vunpack.c.l.b16 %v708
  %v2193 = vunpack.c.h.b16 %v708
  %v2194 = vunpack.c.l.b16 %v709
  %v2195 = vunpack.c.h.b16 %v709
  %v2196 = vunpack.c.l.b16 %v710
  %v2197 = vunpack.c.h.b16 %v710
  %v2198 = vunpack.c.l.b16 %v711
  %v2199 = vunpack.c.h.b16 %v711
  %v2200 = vunpack.c.l.b16 %v712
  %v2201 = vunpack.c.h.b16 %v712
  %v2202 = vunpack.c.l.b16 %v713
  %v2203 = vunpack.c.h.b16 %v713
  %v2204 = vunpack.c.l.b16 %v714
  %v2205 = vunpack.c.h.b16 %v714
  %v2206 = vunpack.c.l.b16 %v715
  %v2207 = vunpack.c.h.b16 %v715
  %v2208 = vunpack.c.l.b16 %v716
  %v2209 = vunpack.c.h.b16 %v716
  %v2210 = vunpack.c.l.b16 %v717
  %v2211 = vunpack.c.h.b16 %v717
  %v2212 = vunpack.c.l.b16 %v718
  %v2213 = vunpack.c.h.b16 %v718
  %v2214 = vunpack.c.l.b16 %v719
  %v2215 = vunpack.c.h.b16 %v719
  %v2216 = vunpack.c.l.b16 %v720
  %v2217 = vunpack.c.h.b16 %v720
  %v2218 = vunpack.c.l.b16 %v721
  %v2219 = vunpack.c.h.b16 %v721
  %v2220 = vunpack.c.l.b16 %v722
  %v2221 = vunpack.c.h.b16 %v722
  %v2222 = vunpack.c.l.b16 %v723
  %v2223 = vunpack.c.h.b16 %v723
  %v2224 = vunpack.c.l.b16 %v724
  %v2225 = vunpack.c.h.b16 %v724
  %v2226 = vunpack.c.l.b16 %v725
  %v2227 = vunpack.c.h.b16 %v725
  %v2228 = vunpack.c.l.b16 %v726
  %v2229 = vunpack.c.h.b16 %v726
  %v2230 = vunpack.c.l.b16 %v727
  %v2231 = vunpack.c.h.b16 %v727
  %v2232 = vunpack.c.l.b16 %v728
  %v2233 = vunpack.c.h.b16 %v728
  %v2234 = vunpack.c.l.b16 %v729
  %v2235 = vunpack.c.h.b16 %v729
  %v2236 = vunpack.c.l.b16 %v730
  %v2237 = vunpack.c.h.b16 %v730
  %v2238 = vunpack.c.l.b16 %v731
  %v2239 = vunpack.c.h.b16 %v731
  %v2240 = vunpack.c.l.b16 %v732
  %v2241 = vunpack.c.h.b16 %v732
  %v2242 = vunpack.c.l.b16 %v733
  %v2243 = vunpack.c.h.b16 %v733
  %v2244 = vunpack.c.l.b16 %v734
  %v2245 = vunpack.c.h.b16 %v734
  %v2246 = vunpack.c.l.b16 %v735
  %v2247 = vunpack.c.h.b16 %v735
  %v2248 = vunpack.c.l.b16 %v736
  %v2249 = vunpack.c.h.b16 %v736
  %v2250 = vunpack.c.l.b16 %v737
  %v2251 = vunpack.c.h.b16 %v737
  %v2252 = vunpack.c.l.b16 %v738
  %v2253 = vunpack.c.h.b16 %v738
  %v2254 = vunpack.c.l.b16 %v739
  %v2255 = vunpack.c.h.b16 %v739
  %v2256 = vunpack.c.l.b16 %v740
  %v2257 = vunpack.c.h.b16 %v740
  %v2258 = vunpack.c.l.b16 %v741
  %v2259 = vunpack.c.h.b16 %v741
  %v2260 = vunpack.c.l.b16 %v742
  %v2261 = vunpack.c.h.b16 %v742
  %v2262 = vunpack.c.l.b16 %v743
  %v2263 = vunpack.c.h.b16 %v743
  %v2264 = vunpack.c.l.b16 %v744
  %v2265 = vunpack.c.h.b16 %v744
  %v2266 = vunpack.c.l.b16 %v745
  %v2267 = vunpack.c.h.b16 %v745
  %v2268 = vunpack.c.l.b16 %v746
  %v2269 = vunpack.c.h.b16 %v746
  %v2270 = vunpack.c.l.b16 %v747
  %v2271 = vunpack.c.h.b16 %v747
  %v2272 = vunpack.c.l.b16 %v748
  %v2273 = vunpack.c.h.b16 %v748
  %v2274 = vunpack.c.l.b16 %v749
  %v2275 = vunpack.c.h.b16 %v749
  %v2276 = vunpack.c.l.b16 %v750
  %v2277 = vunpack.c.h.b16 %v750
  %v2278 = vunpack.c.l.b16 %v751
  %v2279 = vunpack.c.h.b16 %v751
  %v2280 = vunpack.c.l.b16 %v752
  %v2281 = vunpack.c.h.b16 %v752
  %v2282 = vunpack.c.l.b16 %v753
  %v2283 = vunpack.c.h.b16 %v753
  %v2284 = vunpack.c.l.b16 %v754
  %v2285 = vunpack.c.h.b16 %v754
  %v2286 = vunpack.c.l.b16 %v755
  %v2287 = vunpack.c.h.b16 %v755
  %v2288 = vunpack.c.l.b16 %v756
  %v2289 = vunpack.c.h.b16 %v756
  %v2290 = vunpack.c.l.b16 %v757
  %v2291 = vunpack.c.h.b16 %v757
  %v2292 = vunpack.c.l.b16 %v758
  %v2293 = vunpack.c.h.b16 %v758
  %v2294 = vunpack.c.l.b16 %v759
  %v2295 = vunpack.c.h.b16 %v759
  %v2296 = vunpack.c.l.b16 %v760
  %v2297 = vunpack.c.h.b16 %v760
  %v2298 = vunpack.c.l.b16 %v761
  %v2299 = vunpack.c.h.b16 %v761
  %v2300 = vunpack.c.l.b16 %v762
  %v2301 = vunpack.c.h.b16 %v762
  %v2302 = vunpack.c.l.b16 %v763
  %v2303 = vunpack.c.h.b16 %v763
  %v2304 = vunpack.c.l.b16 %v764
  %v2305 = vunpack.c.h.b16 %v764
  %v2306 = vunpack.c.l.b16 %v765
  %v2307 = vunpack.c.h.b16 %v765
  %v2308 = vunpack.c.l.b16 %v766
  %v2309 = vunpack.c.h.b16 %v766
  %v2310 = vunpack.c.l.b16 %v767
  %v2311 = vunpack.c.h.b16 %v767
  %v2312 = vunpack.c.l.b16 %v768
  %v2313 = vunpack.c.h.b16 %v768
  %v2314 = vunpack.c.l.b16 %v769
  %v2315 = vunpack.c.h.b16 %v769
  %v2316 = vunpack.c.l.b16 %v770
  %v2317 = vunpack.c.h.b16 %v770
  %v2318 = vunpack.c.l.b16 %v771
  %v2319 = vunpack.c.h.b16 %v771
  %v2320 = vunpack.c.l.b16 %v772
  %v2321 = vunpack.c.h.b16 %v772
  %v2322 = vunpack.c.l.b16 %v773
  %v2323 = vunpack.c.h.b16 %v773
  %v2324 = vunpack.c.l.b16 %v774
  %v2325 = vunpack.c.h.b16 %v774
  %v2326 = vunpack.c.l.b16 %v775
  %v2327 = vunpack.c.h.b16 %v775
  %v2328 = vunpack.c.l.b16 %v776
  %v2329 = vunpack.c.h.b16 %v776
  %v2330 = vunpack.c.l.b16 %v777
  %v2331 = vunpack.c.h.b16 %v777
  %v2332 = vpack.c.b16 %v1316, %v1308
  %v2333 = vpack.c.b16 %v1317, %v1309
  %v2334 = vpack.c.b16 %v1318, %v1310
  %v2335 = vpack.c.b16 %v1319, %v1311
  %v2336 = vpack.c.b16 %v1320, %v1312
  %v2337 = vpack.c.b16 %v1321, %v1313
  %v2338 = vpack.c.b16 %v1322, %v1314
  %v2339 = vpack.c.b16 %v1323, %v1315
  %v2340 = vpack.c.b16 %v1332, %v1324
  %v2341 = vpack.c.b16 %v1333, %v1325
  %v2342 = vpack.c.b16 %v1334, %v1326
  %v2343 = vpack.c.b16 %v1335, %v1327
  %v2344 = vpack.c.b16 %v1336, %v1328
  %v2345 = vpack.c.b16 %v1337, %v1329
  %v2346 = vpack.c.b16 %v1338, %v1330
  %v2347 = vpack.c.b16 %v1339, %v1331
  %v2348 = vpack.c.b16 %v1348, %v1340
  %v2349 = vpack.c.b16 %v1349, %v1341
  %v2350 = vpack.c.b16 %v1350, %v1342
  %v2351 = vpack.c.b16 %v1351, %v1343
  %v2352 = vpack.c.b16 %v1352, %v1344
  %v2353 = vpack.c.b16 %v1353, %v1345
  %v2354 = vpack.c.b16 %v1354, %v1346
  %v2355 = vpack.c.b16 %v1355, %v1347
  %v2356 = vpack.c.b16 %v1364, %v1356
  %v2357 = vpack.c.b16 %v1365, %v1357
  %v2358 = vpack.c.b16 %v1366, %v1358
  %v2359 = vpack.c.b16 %v1367, %v1359
  %v2360 = vpack.c.b16 %v1368, %v1360
  %v2361 = vpack.c.b16 %v1369, %v1361
  %v2362 = vpack.c.b16 %v1370, %v1362
  %v2363 = vpack.c.b16 %v1371, %v1363
  %v2364 = vpack.c.b16 %v1380, %v1372
  %v2365 = vpack.c.b16 %v1381, %v1373
  %v2366 = vpack.c.b16 %v1382, %v1374
  %v2367 = vpack.c.b16 %v1383, %v1375
  %v2368 = vpack.c.b16 %v1384, %v1376
  %v2369 = vpack.c.b16 %v1385, %v1377
  %v2370 = vpack.c.b16 %v1386, %v1378
  %v2371 = vpack.c.b16 %v1387, %v1379
  %v2372 = vpack.c.b16 %v1396, %v1388
  %v2373 = vpack.c.b16 %v1397, %v1389
  %v2374 = vpack.c.b16 %v1398, %v1390
  %v2375 = vpack.c.b16 %v1399, %v1391
  %v2376 = vpack.c.b16 %v1400, %v1392
  %v2377 = vpack.c.b16 %v1401, %v1393
  %v2378 = vpack.c.b16 %v1402, %v1394
  %v2379 = vpack.c.b16 %v1403, %v1395
  %v2380 = vpack.c.b16 %v1412, %v1404
  %v2381 = vpack.c.b16 %v1413, %v1405
  %v2382 = vpack.c.b16 %v1414, %v1406
  %v2383 = vpack.c.b16 %v1415, %v1407
  %v2384 = vpack.c.b16 %v1416, %v1408
  %v2385 = vpack.c.b16 %v1417, %v1409
  %v2386 = vpack.c.b16 %v1418, %v1410
  %v2387 = vpack.c.b16 %v1419, %v1411
  %v2388 = vpack.c.b16 %v1428, %v1420
  %v2389 = vpack.c.b16 %v1429, %v1421
  %v2390 = vpack.c.b16 %v1430, %v1422
  %v2391 = vpack.c.b16 %v1431, %v1423
  %v2392 = vpack.c.b16 %v1432, %v1424
  %v2393 = vpack.c.b16 %v1433, %v1425
  %v2394 = vpack.c.b16 %v1434, %v1426
  %v2395 = vpack.c.b16 %v1435, %v1427
  %v2396 = vpack.c.b16 %v1444, %v1436
  %v2397 = vpack.c.b16 %v1445, %v1437
  %v2398 = vpack.c.b16 %v1446, %v1438
  %v2399 = vpack.c.b16 %v1447, %v1439
  %v2400 = vpack.c.b16 %v1448, %v1440
  %v2401 = vpack.c.b16 %v1449, %v1441
  %v2402 = vpack.c.b16 %v1450, %v1442
  %v2403 = vpack.c.b16 %v1451, %v1443
  %v2404 = vpack.c.b16 %v1460, %v1452
  %v2405 = vpack.c.b16 %v1461, %v1453
  %v2406 = vpack.c.b16 %v1462, %v1454
  %v2407 = vpack.c.b16 %v1463, %v1455
  %v2408 = vpack.c.b16 %v1464, %v1456
  %v2409 = vpack.c.b16 %v1465, %v1457
  %v2410 = vpack.c.b16 %v1466, %v1458
  %v2411 = vpack.c.b16 %v1467, %v1459
  %v2412 = vpack.c.b16 %v1476, %v1468
  %v2413 = vpack.c.b16 %v1477, %v1469
  %v2414 = vpack.c.b16 %v1478, %v1470
  %v2415 = vpack.c.b16 %v1479, %v1471
  %v2416 = vpack.c.b16 %v1480, %v1472
  %v2417 = vpack.c.b16 %v1481, %v1473
  %v2418 = vpack.c.b16 %v1482, %v1474
  %v2419 = vpack.c.b16 %v1483, %v1475
  %v2420 = vpack.c.b16 %v1492, %v1484
  %v2421 = vpack.c.b16 %v1493, %v1485
  %v2422 = vpack.c.b16 %v1494, %v1486
  %v2423 = vpack.c.b16 %v1495, %v1487
  %v2424 = vpack.c.b16 %v1496, %v1488
  %v2425 = vpack.c.b16 %v1497, %v1489
  %v2426 = vpack.c.b16 %v1498, %v1490
  %v2427 = vpack.c.b16 %v1499, %v1491
  %v2428 = vpack.c.b16 %v1508, %v1500
  %v2429 = vpack.c.b16 %v1509, %v1501
  %v2430 = vpack.c.b16 %v1510, %v1502
  %v2431 = vpack.c.b16 %v1511, %v1503
  %v2432 = vpack.c.b16 %v1512, %v1504
  %v2433 = vpack.c.b16 %v1513, %v1505
  %v2434 = vpack.c.b16 %v1514, %v1506
  %v2435 = vpack.c.b16 %v1515, %v1507
  %v2436 = vpack.c.b16 %v1524, %v1516
  %v2437 = vpack.c.b16 %v1525, %v1517
  %v2438 = vpack.c.b16 %v1526, %v1518
  %v2439 = vpack.c.b16 %v1527, %v1519
  %v2440 = vpack.c.b16 %v1528, %v1520
  %v2441 = vpack.c.b16 %v1529, %v1521
  %v2442 = vpack.c.b16 %v1530, %v1522
  %v2443 = vpack.c.b16 %v1531, %v1523
  %v2444 = vpack.c.b16 %v1540, %v1532
  %v2445 = vpack.c.b16 %v1541, %v1533
  %v2446 = vpack.c.b16 %v1542, %v1534
  %v2447 = vpack.c.b16 %v1543, %v1535
  %v2448 = vpack.c.b16 %v1544, %v1536
  %v2449 = vpack.c.b16 %v1545, %v1537
  %v2450 = vpack.c.b16 %v1546, %v1538
  %v2451 = vpack.c.b16 %v1547, %v1539
  %v2452 = vpack.c.b16 %v1556, %v1548
  %v2453 = vpack.c.b16 %v1557, %v1549
  %v2454 = vpack.c.b16 %v1558, %v1550
  %v2455 = vpack.c.b16 %v1559, %v1551
  %v2456 = vpack.c.b16 %v1560, %v1552
  %v2457 = vpack.c.b16 %v1561, %v1553
  %v2458 = vpack.c.b16 %v1562, %v1554
  %v2459 = vpack.c.b16 %v1563, %v1555
  %v2460 = vpack.c.b16 %v1572, %v1564
  %v2461 = vpack.c.b16 %v1573, %v1565
  %v2462 = vpack.c.b16 %v1574, %v1566
  %v2463 = vpack.c.b16 %v1575, %v1567
  %v2464 = vpack.c.b16 %v1576, %v1568
  %v2465 = vpack.c.b16 %v1577, %v1569
  %v2466 = vpack.c.b16 %v1578, %v1570
  %v2467 = vpack.c.b16 %v1579, %v1571
  %v2468 = vpack.c.b16 %v1588, %v1580
  %v2469 = vpack.c.b16 %v1589, %v1581
  %v2470 = vpack.c.b16 %v1590, %v1582
  %v2471 = vpack.c.b16 %v1591, %v1583
  %v2472 = vpack.c.b16 %v1592, %v1584
  %v2473 = vpack.c.b16 %v1593, %v1585
  %v2474 = vpack.c.b16 %v1594, %v1586
  %v2475 = vpack.c.b16 %v1595, %v1587
  %v2476 = vpack.c.b16 %v1604, %v1596
  %v2477 = vpack.c.b16 %v1605, %v1597
  %v2478 = vpack.c.b16 %v1606, %v1598
  %v2479 = vpack.c.b16 %v1607, %v1599
  %v2480 = vpack.c.b16 %v1608, %v1600
  %v2481 = vpack.c.b16 %v1609, %v1601
  %v2482 = vpack.c.b16 %v1610, %v1602
  %v2483 = vpack.c.b16 %v1611, %v1603
  %v2484 = vpack.c.b16 %v1620, %v1612
  %v2485 = vpack.c.b16 %v1621, %v1613
  %v2486 = vpack.c.b16 %v1622, %v1614
  %v2487 = vpack.c.b16 %v1623, %v1615
  %v2488 = vpack.c.b16 %v1624, %v1616
  %v2489 = vpack.c.b16 %v1625, %v1617
  %v2490 = vpack.c.b16 %v1626, %v1618
  %v2491 = vpack.c.b16 %v1627, %v1619
  %v2492 = vpack.c.b16 %v1636, %v1628
  %v2493 = vpack.c.b16 %v1637, %v1629
  %v2494 = vpack.c.b16 %v1638, %v1630
  %v2495 = vpack.c.b16 %v1639, %v1631
  %v2496 = vpack.c.b16 %v1640, %v1632
  %v2497 = vpack.c.b16 %v1641, %v1633
  %v2498 = vpack.c.b16 %v1642, %v1634
  %v2499 = vpack.c.b16 %v1643, %v1635
  %v2500 = vpack.c.b16 %v1652, %v1644
  %v2501 = vpack.c.b16 %v1653, %v1645
  %v2502 = vpack.c.b16 %v1654, %v1646
  %v2503 = vpack.c.b16 %v1655, %v1647
  %v2504 = vpack.c.b16 %v1656, %v1648
  %v2505 = vpack.c.b16 %v1657, %v1649
  %v2506 = vpack.c.b16 %v1658, %v1650
  %v2507 = vpack.c.b16 %v1659, %v1651
  %v2508 = vpack.c.b16 %v1668, %v1660
  %v2509 = vpack.c.b16 %v1669, %v1661
  %v2510 = vpack.c.b16 %v1670, %v1662
  %v2511 = vpack.c.b16 %v1671, %v1663
  %v2512 = vpack.c.b16 %v1672, %v1664
  %v2513 = vpack.c.b16 %v1673, %v1665
  %v2514 = vpack.c.b16 %v1674, %v1666
  %v2515 = vpack.c.b16 %v1675, %v1667
  %v2516 = vpack.c.b16 %v1684, %v1676
  %v2517 = vpack.c.b16 %v1685, %v1677
  %v2518 = vpack.c.b16 %v1686, %v1678
  %v2519 = vpack.c.b16 %v1687, %v1679
  %v2520 = vpack.c.b16 %v1688, %v1680
  %v2521 = vpack.c.b16 %v1689, %v1681
  %v2522 = vpack.c.b16 %v1690, %v1682
  %v2523 = vpack.c.b16 %v1691, %v1683
  %v2524 = vpack.c.b16 %v1700, %v1692
  %v2525 = vpack.c.b16 %v1701, %v1693
  %v2526 = vpack.c.b16 %v1702, %v1694
  %v2527 = vpack.c.b16 %v1703, %v1695
  %v2528 = vpack.c.b16 %v1704, %v1696
  %v2529 = vpack.c.b16 %v1705, %v1697
  %v2530 = vpack.c.b16 %v1706, %v1698
  %v2531 = vpack.c.b16 %v1707, %v1699
  %v2532 = vpack.c.b16 %v1716, %v1708
  %v2533 = vpack.c.b16 %v1717, %v1709
  %v2534 = vpack.c.b16 %v1718, %v1710
  %v2535 = vpack.c.b16 %v1719, %v1711
  %v2536 = vpack.c.b16 %v1720, %v1712
  %v2537 = vpack.c.b16 %v1721, %v1713
  %v2538 = vpack.c.b16 %v1722, %v1714
  %v2539 = vpack.c.b16 %v1723, %v1715
  %v2540 = vpack.c.b16 %v1732, %v1724
  %v2541 = vpack.c.b16 %v1733, %v1725
  %v2542 = vpack.c.b16 %v1734, %v1726
  %v2543 = vpack.c.b16 %v1735, %v1727
  %v2544 = vpack.c.b16 %v1736, %v1728
  %v2545 = vpack.c.b16 %v1737, %v1729
  %v2546 = vpack.c.b16 %v1738, %v1730
  %v2547 = vpack.c.b16 %v1739, %v1731
  %v2548 = vpack.c.b16 %v1748, %v1740
  %v2549 = vpack.c.b16 %v1749, %v1741
  %v2550 = vpack.c.b16 %v1750, %v1742
  %v2551 = vpack.c.b16 %v1751, %v1743
  %v2552 = vpack.c.b16 %v1752, %v1744
  %v2553 = vpack.c.b16 %v1753, %v1745
  %v2554 = vpack.c.b16 %v1754, %v1746
  %v2555 = vpack.c.b16 %v1755, %v1747
  %v2556 = vpack.c.b16 %v1764, %v1756
  %v2557 = vpack.c.b16 %v1765, %v1757
  %v2558 = vpack.c.b16 %v1766, %v1758
  %v2559 = vpack.c.b16 %v1767, %v1759
  %v2560 = vpack.c.b16 %v1768, %v1760
  %v2561 = vpack.c.b16 %v1769, %v1761
  %v2562 = vpack.c.b16 %v1770, %v1762
  %v2563 = vpack.c.b16 %v1771, %v1763
  %v2564 = vpack.c.b16 %v1780, %v1772
  %v2565 = vpack.c.b16 %v1781, %v1773
  %v2566 = vpack.c.b16 %v1782, %v1774
  %v2567 = vpack.c.b16 %v1783, %v1775
  %v2568 = vpack.c.b16 %v1784, %v1776
  %v2569 = vpack.c.b16 %v1785, %v1777
  %v2570 = vpack.c.b16 %v1786, %v1778
  %v2571 = vpack.c.b16 %v1787, %v1779
  %v2572 = vpack.c.b16 %v1796, %v1788
  %v2573 = vpack.c.b16 %v1797, %v1789
  %v2574 = vpack.c.b16 %v1798, %v1790
  %v2575 = vpack.c.b16 %v1799, %v1791
  %v2576 = vpack.c.b16 %v1800, %v1792
  %v2577 = vpack.c.b16 %v1801, %v1793
  %v2578 = vpack.c.b16 %v1802, %v1794
  %v2579 = vpack.c.b16 %v1803, %v1795
  %v2580 = vpack.c.b16 %v1812, %v1804
  %v2581 = vpack.c.b16 %v1813, %v1805
  %v2582 = vpack.c.b16 %v1814, %v1806
  %v2583 = vpack.c.b16 %v1815, %v1807
  %v2584 = vpack.c.b16 %v1816, %v1808
  %v2585 = vpack.c.b16 %v1817, %v1809
  %v2586 = vpack.c.b16 %v1818, %v1810
  %v2587 = vpack.c.b16 %v1819, %v1811
  %v2588 = vpack.c.b16 %v1828, %v1820
  %v2589 = vpack.c.b16 %v1829, %v1821
  %v2590 = vpack.c.b16 %v1830, %v1822
  %v2591 = vpack.c.b16 %v1831, %v1823
  %v2592 = vpack.c.b16 %v1832, %v1824
  %v2593 = vpack.c.b16 %v1833, %v1825
  %v2594 = vpack.c.b16 %v1834, %v1826
  %v2595 = vpack.c.b16 %v1835, %v1827
  %v2596 = vpack.c.b16 %v1844, %v1836
  %v2597 = vpack.c.b16 %v1845, %v1837
  %v2598 = vpack.c.b16 %v1846, %v1838
  %v2599 = vpack.c.b16 %v1847, %v1839
  %v2600 = vpack.c.b16 %v1848, %v1840
  %v2601 = vpack.c.b16 %v1849, %v1841
  %v2602 = vpack.c.b16 %v1850, %v1842
  %v2603 = vpack.c.b16 %v1851, %v1843
  %v2604 = vpack.c.b16 %v1860, %v1852
  %v2605 = vpack.c.b16 %v1861, %v1853
  %v2606 = vpack.c.b16 %v1862, %v1854
  %v2607 = vpack.c.b16 %v1863, %v1855
  %v2608 = vpack.c.b16 %v1864, %v1856
  %v2609 = vpack.c.b16 %v1865, %v1857
  %v2610 = vpack.c.b16 %v1866, %v1858
  %v2611 = vpack.c.b16 %v1867, %v1859
  %v2612 = vpack.c.b16 %v1876, %v1868
  %v2613 = vpack.c.b16 %v1877, %v1869
  %v2614 = vpack.c.b16 %v1878, %v1870
  %v2615 = vpack.c.b16 %v1879, %v1871
  %v2616 = vpack.c.b16 %v1880, %v1872
  %v2617 = vpack.c.b16 %v1881, %v1873
  %v2618 = vpack.c.b16 %v1882, %v1874
  %v2619 = vpack.c.b16 %v1883, %v1875
  %v2620 = vpack.c.b16 %v1892, %v1884
  %v2621 = vpack.c.b16 %v1893, %v1885
  %v2622 = vpack.c.b16 %v1894, %v1886
  %v2623 = vpack.c.b16 %v1895, %v1887
  %v2624 = vpack.c.b16 %v1896, %v1888
  %v2625 = vpack.c.b16 %v1897, %v1889
  %v2626 = vpack.c.b16 %v1898, %v1890
  %v2627 = vpack.c.b16 %v1899, %v1891
  %v2628 = vpack.c.b16 %v1908, %v1900
  %v2629 = vpack.c.b16 %v1909, %v1901
  %v2630 = vpack.c.b16 %v1910, %v1902
  %v2631 = vpack.c.b16 %v1911, %v1903
  %v2632 = vpack.c.b16 %v1912, %v1904
  %v2633 = vpack.c.b16 %v1913, %v1905
  %v2634 = vpack.c.b16 %v1914, %v1906
  %v2635 = vpack.c.b16 %v1915, %v1907
  %v2636 = vpack.c.b16 %v1924, %v1916
  %v2637 = vpack.c.b16 %v1925, %v1917
  %v2638 = vpack.c.b16 %v1926, %v1918
  %v2639 = vpack.c.b16 %v1927, %v1919
  %v2640 = vpack.c.b16 %v1928, %v1920
  %v2641 = vpack.c.b16 %v1929, %v1921
  %v2642 = vpack.c.b16 %v1930, %v1922
  %v2643 = vpack.c.b16 %v1931, %v1923
  %v2644 = vpack.c.b16 %v1940, %v1932
  %v2645 = vpack.c.b16 %v1941, %v1933
  %v2646 = vpack.c.b16 %v1942, %v1934
  %v2647 = vpack.c.b16 %v1943, %v1935
  %v2648 = vpack.c.b16 %v1944, %v1936
  %v2649 = vpack.c.b16 %v1945, %v1937
  %v2650 = vpack.c.b16 %v1946, %v1938
  %v2651 = vpack.c.b16 %v1947, %v1939
  %v2652 = vpack.c.b16 %v1956, %v1948
  %v2653 = vpack.c.b16 %v1957, %v1949
  %v2654 = vpack.c.b16 %v1958, %v1950
  %v2655 = vpack.c.b16 %v1959, %v1951
  %v2656 = vpack.c.b16 %v1960, %v1952
  %v2657 = vpack.c.b16 %v1961, %v1953
  %v2658 = vpack.c.b16 %v1962, %v1954
  %v2659 = vpack.c.b16 %v1963, %v1955
  %v2660 = vpack.c.b16 %v1972, %v1964
  %v2661 = vpack.c.b16 %v1973, %v1965
  %v2662 = vpack.c.b16 %v1974, %v1966
  %v2663 = vpack.c.b16 %v1975, %v1967
  %v2664 = vpack.c.b16 %v1976, %v1968
  %v2665 = vpack.c.b16 %v1977, %v1969
  %v2666 = vpack.c.b16 %v1978, %v1970
  %v2667 = vpack.c.b16 %v1979, %v1971
  %v2668 = vpack.c.b16 %v1988, %v1980
  %v2669 = vpack.c.b16 %v1989, %v1981
  %v2670 = vpack.c.b16 %v1990, %v1982
  %v2671 = vpack.c.b16 %v1991, %v1983
  %v2672 = vpack.c.b16 %v1992, %v1984
  %v2673 = vpack.c.b16 %v1993, %v1985
  %v2674 = vpack.c.b16 %v1994, %v1986
  %v2675 = vpack.c.b16 %v1995, %v1987
  %v2676 = vpack.c.b16 %v2004, %v1996
  %v2677 = vpack.c.b16 %v2005, %v1997
  %v2678 = vpack.c.b16 %v2006, %v1998
  %v2679 = vpack.c.b16 %v2007, %v1999
  %v2680 = vpack.c.b16 %v2008, %v2000
  %v2681 = vpack.c.b16 %v2009, %v2001
  %v2682 = vpack.c.b16 %v2010, %v2002
  %v2683 = vpack.c.b16 %v2011, %v2003
  %v2684 = vpack.c.b16 %v2020, %v2012
  %v2685 = vpack.c.b16 %v2021, %v2013
  %v2686 = vpack.c.b16 %v2022, %v2014
  %v2687 = vpack.c.b16 %v2023, %v2015
  %v2688 = vpack.c.b16 %v2024, %v2016
  %v2689 = vpack.c.b16 %v2025, %v2017
  %v2690 = vpack.c.b16 %v2026, %v2018
  %v2691 = vpack.c.b16 %v2027, %v2019
  %v2692 = vpack.c.b16 %v2036, %v2028
  %v2693 = vpack.c.b16 %v2037, %v2029
  %v2694 = vpack.c.b16 %v2038, %v2030
  %v2695 = vpack.c.b16 %v2039, %v2031
  %v2696 = vpack.c.b16 %v2040, %v2032
  %v2697 = vpack.c.b16 %v2041, %v2033
  %v2698 = vpack.c.b16 %v2042, %v2034
  %v2699 = vpack.c.b16 %v2043, %v2035
  %v2700 = vpack.c.b16 %v2052, %v2044
  %v2701 = vpack.c.b16 %v2053, %v2045
  %v2702 = vpack.c.b16 %v2054, %v2046
  %v2703 = vpack.c.b16 %v2055, %v2047
  %v2704 = vpack.c.b16 %v2056, %v2048
  %v2705 = vpack.c.b16 %v2057, %v2049
  %v2706 = vpack.c.b16 %v2058, %v2050
  %v2707 = vpack.c.b16 %v2059, %v2051
  %v2708 = vpack.c.b16 %v2068, %v2060
  %v2709 = vpack.c.b16 %v2069, %v2061
  %v2710 = vpack.c.b16 %v2070, %v2062
  %v2711 = vpack.c.b16 %v2071, %v2063
  %v2712 = vpack.c.b16 %v2072, %v2064
  %v2713 = vpack.c.b16 %v2073, %v2065
  %v2714 = vpack.c.b16 %v2074, %v2066
  %v2715 = vpack.c.b16 %v2075, %v2067
  %v2716 = vpack.c.b16 %v2084, %v2076
  %v2717 = vpack.c.b16 %v2085, %v2077
  %v2718 = vpack.c.b16 %v2086, %v2078
  %v2719 = vpack.c.b16 %v2087, %v2079
  %v2720 = vpack.c.b16 %v2088, %v2080
  %v2721 = vpack.c.b16 %v2089, %v2081
  %v2722 = vpack.c.b16 %v2090, %v2082
  %v2723 = vpack.c.b16 %v2091, %v2083
  %v2724 = vpack.c.b16 %v2100, %v2092
  %v2725 = vpack.c.b16 %v2101, %v2093
  %v2726 = vpack.c.b16 %v2102, %v2094
  %v2727 = vpack.c.b16 %v2103, %v2095
  %v2728 = vpack.c.b16 %v2104, %v2096
  %v2729 = vpack.c.b16 %v2105, %v2097
  %v2730 = vpack.c.b16 %v2106, %v2098
  %v2731 = vpack.c.b16 %v2107, %v2099
  %v2732 = vpack.c.b16 %v2116, %v2108
  %v2733 = vpack.c.b16 %v2117, %v2109
  %v2734 = vpack.c.b16 %v2118, %v2110
  %v2735 = vpack.c.b16 %v2119, %v2111
  %v2736 = vpack.c.b16 %v2120, %v2112
  %v2737 = vpack.c.b16 %v2121, %v2113
  %v2738 = vpack.c.b16 %v2122, %v2114
  %v2739 = vpack.c.b16 %v2123, %v2115
  %v2740 = vpack.c.b16 %v2132, %v2124
  %v2741 = vpack.c.b16 %v2133, %v2125
  %v2742 = vpack.c.b16 %v2134, %v2126
  %v2743 = vpack.c.b16 %v2135, %v2127
  %v2744 = vpack.c.b16 %v2136, %v2128
  %v2745 = vpack.c.b16 %v2137, %v2129
  %v2746 = vpack.c.b16 %v2138, %v2130
  %v2747 = vpack.c.b16 %v2139, %v2131
  %v2748 = vpack.c.b16 %v2148, %v2140
  %v2749 = vpack.c.b16 %v2149, %v2141
  %v2750 = vpack.c.b16 %v2150, %v2142
  %v2751 = vpack.c.b16 %v2151, %v2143
  %v2752 = vpack.c.b16 %v2152, %v2144
  %v2753 = vpack.c.b16 %v2153, %v2145
  %v2754 = vpack.c.b16 %v2154, %v2146
  %v2755 = vpack.c.b16 %v2155, %v2147
  %v2756 = vpack.c.b16 %v2164, %v2156
  %v2757 = vpack.c.b16 %v2165, %v2157
  %v2758 = vpack.c.b16 %v2166, %v2158
  %v2759 = vpack.c.b16 %v2167, %v2159
  %v2760 = vpack.c.b16 %v2168, %v2160
  %v2761 = vpack.c.b16 %v2169, %v2161
  %v2762 = vpack.c.b16 %v2170, %v2162
  %v2763 = vpack.c.b16 %v2171, %v2163
  %v2764 = vpack.c.b16 %v2180, %v2172
  %v2765 = vpack.c.b16 %v2181, %v2173
  %v2766 = vpack.c.b16 %v2182, %v2174
  %v2767 = vpack.c.b16 %v2183, %v2175
  %v2768 = vpack.c.b16 %v2184, %v2176
  %v2769 = vpack.c.b16 %v2185, %v2177
  %v2770 = vpack.c.b16 %v2186, %v2178
  %v2771 = vpack.c.b16 %v2187, %v2179
  %v2772 = vpack.c.b16 %v2196, %v2188
  %v2773 = vpack.c.b16 %v2197, %v2189
  %v2774 = vpack.c.b16 %v2198, %v2190
  %v2775 = vpack.c.b16 %v2199, %v2191
  %v2776 = vpack.c.b16 %v2200, %v2192
  %v2777 = vpack.c.b16 %v2201, %v2193
  %v2778 = vpack.c.b16 %v2202, %v2194
  %v2779 = vpack.c.b16 %v2203, %v2195
  %v2780 = vpack.c.b16 %v2212, %v2204
  %v2781 = vpack.c.b16 %v2213, %v2205
  %v2782 = vpack.c.b16 %v2214, %v2206
  %v2783 = vpack.c.b16 %v2215, %v2207
  %v2784 = vpack.c.b16 %v2216, %v2208
  %v2785 = vpack.c.b16 %v2217, %v2209
  %v2786 = vpack.c.b16 %v2218, %v2210
  %v2787 = vpack.c.b16 %v2219, %v2211
  %v2788 = vpack.c.b16 %v2228, %v2220
  %v2789 = vpack.c.b16 %v2229, %v2221
  %v2790 = vpack.c.b16 %v2230, %v2222
  %v2791 = vpack.c.b16 %v2231, %v2223
  %v2792 = vpack.c.b16 %v2232, %v2224
  %v2793 = vpack.c.b16 %v2233, %v2225
  %v2794 = vpack.c.b16 %v2234, %v2226
  %v2795 = vpack.c.b16 %v2235, %v2227
  %v2796 = vpack.c.b16 %v2244, %v2236
  %v2797 = vpack.c.b16 %v2245, %v2237
  %v2798 = vpack.c.b16 %v2246, %v2238
  %v2799 = vpack.c.b16 %v2247, %v2239
  %v2800 = vpack.c.b16 %v2248, %v2240
  %v2801 = vpack.c.b16 %v2249, %v2241
  %v2802 = vpack.c.b16 %v2250, %v2242
  %v2803 = vpack.c.b16 %v2251, %v2243
  %v2804 = vpack.c.b16 %v2260, %v2252
  %v2805 = vpack.c.b16 %v2261, %v2253
  %v2806 = vpack.c.b16 %v2262, %v2254
  %v2807 = vpack.c.b16 %v2263, %v2255
  %v2808 = vpack.c.b16 %v2264, %v2256
  %v2809 = vpack.c.b16 %v2265, %v2257
  %v2810 = vpack.c.b16 %v2266, %v2258
  %v2811 = vpack.c.b16 %v2267, %v2259
  %v2812 = vpack.c.b16 %v2276, %v2268
  %v2813 = vpack.c.b16 %v2277, %v2269
  %v2814 = vpack.c.b16 %v2278, %v2270
  %v2815 = vpack.c.b16 %v2279, %v2271
  %v2816 = vpack.c.b16 %v2280, %v2272
  %v2817 = vpack.c.b16 %v2281, %v2273
  %v2818 = vpack.c.b16 %v2282, %v2274
  %v2819 = vpack.c.b16 %v2283, %v2275
  %v2820 = vpack.c.b16 %v2292, %v2284
  %v2821 = vpack.c.b16 %v2293, %v2285
  %v2822 = vpack.c.b16 %v2294, %v2286
  %v2823 = vpack.c.b16 %v2295, %v2287
  %v2824 = vpack.c.b16 %v2296, %v2288
  %v2825 = vpack.c.b16 %v2297, %v2289
  %v2826 = vpack.c.b16 %v2298, %v2290
  %v2827 = vpack.c.b16 %v2299, %v2291
  %v2828 = vpack.c.b16 %v2308, %v2300
  %v2829 = vpack.c.b16 %v2309, %v2301
  %v2830 = vpack.c.b16 %v2310, %v2302
  %v2831 = vpack.c.b16 %v2311, %v2303
  %v2832 = vpack.c.b16 %v2312, %v2304
  %v2833 = vpack.c.b16 %v2313, %v2305
  %v2834 = vpack.c.b16 %v2314, %v2306
  %v2835 = vpack.c.b16 %v2315, %v2307
  %v2836 = vpack.c.b16 %v2324, %v2316
  %v2837 = vpack.c.b16 %v2325, %v2317
  %v2838 = vpack.c.b16 %v2326, %v2318
  %v2839 = vpack.c.b16 %v2327, %v2319
  %v2840 = vpack.c.b16 %v2328, %v2320
  %v2841 = vpack.c.b16 %v2329, %v2321
  %v2842 = vpack.c.b16 %v2330, %v2322
  %v2843 = vpack.c.b16 %v2331, %v2323
  %3356 = vmatpush.bf16.msra.mxu0 %v2388
  %3357 = vmatpush.bf16.msra.mxu0 %v2380
  %3358 = vmatpush.bf16.msra.mxu0 %v2372
  %3359 = vmatpush.bf16.msra.mxu0 %v2364
  %3360 = vmatpush.bf16.msra.mxu0 %v2356
  %3361 = vmatpush.bf16.msra.mxu0 %v2348
  %3362 = vmatpush.bf16.msra.mxu0 %v2340
  %3363 = vmatpush.bf16.msra.mxu0 %v2332
  %3364 = vmatmul.bf16.gmra.mxu0 %v258
  %v3365 = vpop.f32.mrf.mxu0
  %v3366 = vadd.f32 %v780, %v3365
  %v3367 = vpop.f32.mrf.mxu0
  %3368 = vdwg.mxu0
  %3369 = vmatpush.bf16.msra.mxu0 %v2452
  %3370 = vmatpush.bf16.msra.mxu0 %v2444
  %3371 = vmatpush.bf16.msra.mxu0 %v2436
  %3372 = vmatpush.bf16.msra.mxu0 %v2428
  %3373 = vmatpush.bf16.msra.mxu0 %v2420
  %3374 = vmatpush.bf16.msra.mxu0 %v2412
  %3375 = vmatpush.bf16.msra.mxu0 %v2404
  %3376 = vmatpush.bf16.msra.mxu0 %v2396
  %3377 = vmatmul.bf16.gmra.mxu0 %v259
  %v3378 = vpop.f32.mrf.mxu0
  %v3379 = vadd.f32 %v3366, %v3378
  %v3380 = vpop.f32.mrf.mxu0
  %3381 = vdwg.mxu0
  %3382 = vmatpush.bf16.msra.mxu0 %v2516
  %3383 = vmatpush.bf16.msra.mxu0 %v2508
  %3384 = vmatpush.bf16.msra.mxu0 %v2500
  %3385 = vmatpush.bf16.msra.mxu0 %v2492
  %3386 = vmatpush.bf16.msra.mxu0 %v2484
  %3387 = vmatpush.bf16.msra.mxu0 %v2476
  %3388 = vmatpush.bf16.msra.mxu0 %v2468
  %3389 = vmatpush.bf16.msra.mxu0 %v2460
  %3390 = vmatmul.bf16.gmra.mxu0 %v260
  %v3391 = vpop.f32.mrf.mxu0
  %v3392 = vadd.f32 %v3379, %v3391
  %v3393 = vpop.f32.mrf.mxu0
  %3394 = vdwg.mxu0
  %3395 = vmatpush.bf16.msra.mxu0 %v2580
  %3396 = vmatpush.bf16.msra.mxu0 %v2572
  %3397 = vmatpush.bf16.msra.mxu0 %v2564
  %3398 = vmatpush.bf16.msra.mxu0 %v2556
  %3399 = vmatpush.bf16.msra.mxu0 %v2548
  %3400 = vmatpush.bf16.msra.mxu0 %v2540
  %3401 = vmatpush.bf16.msra.mxu0 %v2532
  %3402 = vmatpush.bf16.msra.mxu0 %v2524
  %3403 = vmatmul.bf16.gmra.mxu0 %v261
  %v3404 = vpop.f32.mrf.mxu0
  %v3405 = vadd.f32 %v3392, %v3404
  %v3406 = vpop.f32.mrf.mxu0
  %3407 = vdwg.mxu0
  %3408 = vmatpush.bf16.msra.mxu0 %v2644
  %3409 = vmatpush.bf16.msra.mxu0 %v2636
  %3410 = vmatpush.bf16.msra.mxu0 %v2628
  %3411 = vmatpush.bf16.msra.mxu0 %v2620
  %3412 = vmatpush.bf16.msra.mxu0 %v2612
  %3413 = vmatpush.bf16.msra.mxu0 %v2604
  %3414 = vmatpush.bf16.msra.mxu0 %v2596
  %3415 = vmatpush.bf16.msra.mxu0 %v2588
  %3416 = vmatmul.bf16.gmra.mxu0 %v262
  %v3417 = vpop.f32.mrf.mxu0
  %v3418 = vadd.f32 %v3405, %v3417
  %v3419 = vpop.f32.mrf.mxu0
  %3420 = vdwg.mxu0
  %3421 = vmatpush.bf16.msra.mxu0 %v2708
  %3422 = vmatpush.bf16.msra.mxu0 %v2700
  %3423 = vmatpush.bf16.msra.mxu0 %v2692
  %3424 = vmatpush.bf16.msra.mxu0 %v2684
  %3425 = vmatpush.bf16.msra.mxu0 %v2676
  %3426 = vmatpush.bf16.msra.mxu0 %v2668
  %3427 = vmatpush.bf16.msra.mxu0 %v2660
  %3428 = vmatpush.bf16.msra.mxu0 %v2652
  %3429 = vmatmul.bf16.gmra.mxu0 %v263
  %v3430 = vpop.f32.mrf.mxu0
  %v3431 = vadd.f32 %v3418, %v3430
  %v3432 = vpop.f32.mrf.mxu0
  %3433 = vdwg.mxu0
  %3434 = vmatpush.bf16.msra.mxu0 %v2772
  %3435 = vmatpush.bf16.msra.mxu0 %v2764
  %3436 = vmatpush.bf16.msra.mxu0 %v2756
  %3437 = vmatpush.bf16.msra.mxu0 %v2748
  %3438 = vmatpush.bf16.msra.mxu0 %v2740
  %3439 = vmatpush.bf16.msra.mxu0 %v2732
  %3440 = vmatpush.bf16.msra.mxu0 %v2724
  %3441 = vmatpush.bf16.msra.mxu0 %v2716
  %3442 = vmatmul.bf16.gmra.mxu0 %v264
  %v3443 = vpop.f32.mrf.mxu0
  %v3444 = vadd.f32 %v3431, %v3443
  %v3445 = vpop.f32.mrf.mxu0
  %3446 = vdwg.mxu0
  %3447 = vmatpush.bf16.msra.mxu0 %v2836
  %3448 = vmatpush.bf16.msra.mxu0 %v2828
  %3449 = vmatpush.bf16.msra.mxu0 %v2820
  %3450 = vmatpush.bf16.msra.mxu0 %v2812
  %3451 = vmatpush.bf16.msra.mxu0 %v2804
  %3452 = vmatpush.bf16.msra.mxu0 %v2796
  %3453 = vmatpush.bf16.msra.mxu0 %v2788
  %3454 = vmatpush.bf16.msra.mxu0 %v2780
  %3455 = vmatmul.bf16.gmra.mxu0 %v265
  %v3456 = vpop.f32.mrf.mxu0
  %v3457 = vadd.f32 %v3444, %v3456
  %v3458 = vpop.f32.mrf.mxu0
  %3459 = vdwg.mxu0
  %3460 = vmatpush.bf16.msra.mxu0 %v2389
  %3461 = vmatpush.bf16.msra.mxu0 %v2381
  %3462 = vmatpush.bf16.msra.mxu0 %v2373
  %3463 = vmatpush.bf16.msra.mxu0 %v2365
  %3464 = vmatpush.bf16.msra.mxu0 %v2357
  %3465 = vmatpush.bf16.msra.mxu0 %v2349
  %3466 = vmatpush.bf16.msra.mxu0 %v2341
  %3467 = vmatpush.bf16.msra.mxu0 %v2333
  %3468 = vmatmul.bf16.gmra.mxu0 %v258
  %v3469 = vpop.f32.mrf.mxu0
  %v3470 = vadd.f32 %v781, %v3469
  %v3471 = vpop.f32.mrf.mxu0
  %3472 = vdwg.mxu0
  %3473 = vmatpush.bf16.msra.mxu0 %v2453
  %3474 = vmatpush.bf16.msra.mxu0 %v2445
  %3475 = vmatpush.bf16.msra.mxu0 %v2437
  %3476 = vmatpush.bf16.msra.mxu0 %v2429
  %3477 = vmatpush.bf16.msra.mxu0 %v2421
  %3478 = vmatpush.bf16.msra.mxu0 %v2413
  %3479 = vmatpush.bf16.msra.mxu0 %v2405
  %3480 = vmatpush.bf16.msra.mxu0 %v2397
  %3481 = vmatmul.bf16.gmra.mxu0 %v259
  %v3482 = vpop.f32.mrf.mxu0
  %v3483 = vadd.f32 %v3470, %v3482
  %v3484 = vpop.f32.mrf.mxu0
  %3485 = vdwg.mxu0
  %3486 = vmatpush.bf16.msra.mxu0 %v2517
  %3487 = vmatpush.bf16.msra.mxu0 %v2509
  %3488 = vmatpush.bf16.msra.mxu0 %v2501
  %3489 = vmatpush.bf16.msra.mxu0 %v2493
  %3490 = vmatpush.bf16.msra.mxu0 %v2485
  %3491 = vmatpush.bf16.msra.mxu0 %v2477
  %3492 = vmatpush.bf16.msra.mxu0 %v2469
  %3493 = vmatpush.bf16.msra.mxu0 %v2461
  %3494 = vmatmul.bf16.gmra.mxu0 %v260
  %v3495 = vpop.f32.mrf.mxu0
  %v3496 = vadd.f32 %v3483, %v3495
  %v3497 = vpop.f32.mrf.mxu0
  %3498 = vdwg.mxu0
  %3499 = vmatpush.bf16.msra.mxu0 %v2581
  %3500 = vmatpush.bf16.msra.mxu0 %v2573
  %3501 = vmatpush.bf16.msra.mxu0 %v2565
  %3502 = vmatpush.bf16.msra.mxu0 %v2557
  %3503 = vmatpush.bf16.msra.mxu0 %v2549
  %3504 = vmatpush.bf16.msra.mxu0 %v2541
  %3505 = vmatpush.bf16.msra.mxu0 %v2533
  %3506 = vmatpush.bf16.msra.mxu0 %v2525
  %3507 = vmatmul.bf16.gmra.mxu0 %v261
  %v3508 = vpop.f32.mrf.mxu0
  %v3509 = vadd.f32 %v3496, %v3508
  %v3510 = vpop.f32.mrf.mxu0
  %3511 = vdwg.mxu0
  %3512 = vmatpush.bf16.msra.mxu0 %v2645
  %3513 = vmatpush.bf16.msra.mxu0 %v2637
  %3514 = vmatpush.bf16.msra.mxu0 %v2629
  %3515 = vmatpush.bf16.msra.mxu0 %v2621
  %3516 = vmatpush.bf16.msra.mxu0 %v2613
  %3517 = vmatpush.bf16.msra.mxu0 %v2605
  %3518 = vmatpush.bf16.msra.mxu0 %v2597
  %3519 = vmatpush.bf16.msra.mxu0 %v2589
  %3520 = vmatmul.bf16.gmra.mxu0 %v262
  %v3521 = vpop.f32.mrf.mxu0
  %v3522 = vadd.f32 %v3509, %v3521
  %v3523 = vpop.f32.mrf.mxu0
  %3524 = vdwg.mxu0
  %3525 = vmatpush.bf16.msra.mxu0 %v2709
  %3526 = vmatpush.bf16.msra.mxu0 %v2701
  %3527 = vmatpush.bf16.msra.mxu0 %v2693
  %3528 = vmatpush.bf16.msra.mxu0 %v2685
  %3529 = vmatpush.bf16.msra.mxu0 %v2677
  %3530 = vmatpush.bf16.msra.mxu0 %v2669
  %3531 = vmatpush.bf16.msra.mxu0 %v2661
  %3532 = vmatpush.bf16.msra.mxu0 %v2653
  %3533 = vmatmul.bf16.gmra.mxu0 %v263
  %v3534 = vpop.f32.mrf.mxu0
  %v3535 = vadd.f32 %v3522, %v3534
  %v3536 = vpop.f32.mrf.mxu0
  %3537 = vdwg.mxu0
  %3538 = vmatpush.bf16.msra.mxu0 %v2773
  %3539 = vmatpush.bf16.msra.mxu0 %v2765
  %3540 = vmatpush.bf16.msra.mxu0 %v2757
  %3541 = vmatpush.bf16.msra.mxu0 %v2749
  %3542 = vmatpush.bf16.msra.mxu0 %v2741
  %3543 = vmatpush.bf16.msra.mxu0 %v2733
  %3544 = vmatpush.bf16.msra.mxu0 %v2725
  %3545 = vmatpush.bf16.msra.mxu0 %v2717
  %3546 = vmatmul.bf16.gmra.mxu0 %v264
  %v3547 = vpop.f32.mrf.mxu0
  %v3548 = vadd.f32 %v3535, %v3547
  %v3549 = vpop.f32.mrf.mxu0
  %3550 = vdwg.mxu0
  %3551 = vmatpush.bf16.msra.mxu0 %v2837
  %3552 = vmatpush.bf16.msra.mxu0 %v2829
  %3553 = vmatpush.bf16.msra.mxu0 %v2821
  %3554 = vmatpush.bf16.msra.mxu0 %v2813
  %3555 = vmatpush.bf16.msra.mxu0 %v2805
  %3556 = vmatpush.bf16.msra.mxu0 %v2797
  %3557 = vmatpush.bf16.msra.mxu0 %v2789
  %3558 = vmatpush.bf16.msra.mxu0 %v2781
  %3559 = vmatmul.bf16.gmra.mxu0 %v265
  %v3560 = vpop.f32.mrf.mxu0
  %v3561 = vadd.f32 %v3548, %v3560
  %v3562 = vpop.f32.mrf.mxu0
  %3563 = vdwg.mxu0
  %3564 = vmatpush.bf16.msra.mxu0 %v2390
  %3565 = vmatpush.bf16.msra.mxu0 %v2382
  %3566 = vmatpush.bf16.msra.mxu0 %v2374
  %3567 = vmatpush.bf16.msra.mxu0 %v2366
  %3568 = vmatpush.bf16.msra.mxu0 %v2358
  %3569 = vmatpush.bf16.msra.mxu0 %v2350
  %3570 = vmatpush.bf16.msra.mxu0 %v2342
  %3571 = vmatpush.bf16.msra.mxu0 %v2334
  %3572 = vmatmul.bf16.gmra.mxu0 %v258
  %v3573 = vpop.f32.mrf.mxu0
  %v3574 = vadd.f32 %v782, %v3573
  %v3575 = vpop.f32.mrf.mxu0
  %3576 = vdwg.mxu0
  %3577 = vmatpush.bf16.msra.mxu0 %v2454
  %3578 = vmatpush.bf16.msra.mxu0 %v2446
  %3579 = vmatpush.bf16.msra.mxu0 %v2438
  %3580 = vmatpush.bf16.msra.mxu0 %v2430
  %3581 = vmatpush.bf16.msra.mxu0 %v2422
  %3582 = vmatpush.bf16.msra.mxu0 %v2414
  %3583 = vmatpush.bf16.msra.mxu0 %v2406
  %3584 = vmatpush.bf16.msra.mxu0 %v2398
  %3585 = vmatmul.bf16.gmra.mxu0 %v259
  %v3586 = vpop.f32.mrf.mxu0
  %v3587 = vadd.f32 %v3574, %v3586
  %v3588 = vpop.f32.mrf.mxu0
  %3589 = vdwg.mxu0
  %3590 = vmatpush.bf16.msra.mxu0 %v2518
  %3591 = vmatpush.bf16.msra.mxu0 %v2510
  %3592 = vmatpush.bf16.msra.mxu0 %v2502
  %3593 = vmatpush.bf16.msra.mxu0 %v2494
  %3594 = vmatpush.bf16.msra.mxu0 %v2486
  %3595 = vmatpush.bf16.msra.mxu0 %v2478
  %3596 = vmatpush.bf16.msra.mxu0 %v2470
  %3597 = vmatpush.bf16.msra.mxu0 %v2462
  %3598 = vmatmul.bf16.gmra.mxu0 %v260
  %v3599 = vpop.f32.mrf.mxu0
  %v3600 = vadd.f32 %v3587, %v3599
  %v3601 = vpop.f32.mrf.mxu0
  %3602 = vdwg.mxu0
  %3603 = vmatpush.bf16.msra.mxu0 %v2582
  %3604 = vmatpush.bf16.msra.mxu0 %v2574
  %3605 = vmatpush.bf16.msra.mxu0 %v2566
  %3606 = vmatpush.bf16.msra.mxu0 %v2558
  %3607 = vmatpush.bf16.msra.mxu0 %v2550
  %3608 = vmatpush.bf16.msra.mxu0 %v2542
  %3609 = vmatpush.bf16.msra.mxu0 %v2534
  %3610 = vmatpush.bf16.msra.mxu0 %v2526
  %3611 = vmatmul.bf16.gmra.mxu0 %v261
  %v3612 = vpop.f32.mrf.mxu0
  %v3613 = vadd.f32 %v3600, %v3612
  %v3614 = vpop.f32.mrf.mxu0
  %3615 = vdwg.mxu0
  %3616 = vmatpush.bf16.msra.mxu0 %v2646
  %3617 = vmatpush.bf16.msra.mxu0 %v2638
  %3618 = vmatpush.bf16.msra.mxu0 %v2630
  %3619 = vmatpush.bf16.msra.mxu0 %v2622
  %3620 = vmatpush.bf16.msra.mxu0 %v2614
  %3621 = vmatpush.bf16.msra.mxu0 %v2606
  %3622 = vmatpush.bf16.msra.mxu0 %v2598
  %3623 = vmatpush.bf16.msra.mxu0 %v2590
  %3624 = vmatmul.bf16.gmra.mxu0 %v262
  %v3625 = vpop.f32.mrf.mxu0
  %v3626 = vadd.f32 %v3613, %v3625
  %v3627 = vpop.f32.mrf.mxu0
  %3628 = vdwg.mxu0
  %3629 = vmatpush.bf16.msra.mxu0 %v2710
  %3630 = vmatpush.bf16.msra.mxu0 %v2702
  %3631 = vmatpush.bf16.msra.mxu0 %v2694
  %3632 = vmatpush.bf16.msra.mxu0 %v2686
  %3633 = vmatpush.bf16.msra.mxu0 %v2678
  %3634 = vmatpush.bf16.msra.mxu0 %v2670
  %3635 = vmatpush.bf16.msra.mxu0 %v2662
  %3636 = vmatpush.bf16.msra.mxu0 %v2654
  %3637 = vmatmul.bf16.gmra.mxu0 %v263
  %v3638 = vpop.f32.mrf.mxu0
  %v3639 = vadd.f32 %v3626, %v3638
  %v3640 = vpop.f32.mrf.mxu0
  %3641 = vdwg.mxu0
  %3642 = vmatpush.bf16.msra.mxu0 %v2774
  %3643 = vmatpush.bf16.msra.mxu0 %v2766
  %3644 = vmatpush.bf16.msra.mxu0 %v2758
  %3645 = vmatpush.bf16.msra.mxu0 %v2750
  %3646 = vmatpush.bf16.msra.mxu0 %v2742
  %3647 = vmatpush.bf16.msra.mxu0 %v2734
  %3648 = vmatpush.bf16.msra.mxu0 %v2726
  %3649 = vmatpush.bf16.msra.mxu0 %v2718
  %3650 = vmatmul.bf16.gmra.mxu0 %v264
  %v3651 = vpop.f32.mrf.mxu0
  %v3652 = vadd.f32 %v3639, %v3651
  %v3653 = vpop.f32.mrf.mxu0
  %3654 = vdwg.mxu0
  %3655 = vmatpush.bf16.msra.mxu0 %v2838
  %3656 = vmatpush.bf16.msra.mxu0 %v2830
  %3657 = vmatpush.bf16.msra.mxu0 %v2822
  %3658 = vmatpush.bf16.msra.mxu0 %v2814
  %3659 = vmatpush.bf16.msra.mxu0 %v2806
  %3660 = vmatpush.bf16.msra.mxu0 %v2798
  %3661 = vmatpush.bf16.msra.mxu0 %v2790
  %3662 = vmatpush.bf16.msra.mxu0 %v2782
  %3663 = vmatmul.bf16.gmra.mxu0 %v265
  %v3664 = vpop.f32.mrf.mxu0
  %v3665 = vadd.f32 %v3652, %v3664
  %v3666 = vpop.f32.mrf.mxu0
  %3667 = vdwg.mxu0
  %3668 = vmatpush.bf16.msra.mxu0 %v2391
  %3669 = vmatpush.bf16.msra.mxu0 %v2383
  %3670 = vmatpush.bf16.msra.mxu0 %v2375
  %3671 = vmatpush.bf16.msra.mxu0 %v2367
  %3672 = vmatpush.bf16.msra.mxu0 %v2359
  %3673 = vmatpush.bf16.msra.mxu0 %v2351
  %3674 = vmatpush.bf16.msra.mxu0 %v2343
  %3675 = vmatpush.bf16.msra.mxu0 %v2335
  %3676 = vmatmul.bf16.gmra.mxu0 %v258
  %v3677 = vpop.f32.mrf.mxu0
  %v3678 = vadd.f32 %v783, %v3677
  %v3679 = vpop.f32.mrf.mxu0
  %3680 = vdwg.mxu0
  %3681 = vmatpush.bf16.msra.mxu0 %v2455
  %3682 = vmatpush.bf16.msra.mxu0 %v2447
  %3683 = vmatpush.bf16.msra.mxu0 %v2439
  %3684 = vmatpush.bf16.msra.mxu0 %v2431
  %3685 = vmatpush.bf16.msra.mxu0 %v2423
  %3686 = vmatpush.bf16.msra.mxu0 %v2415
  %3687 = vmatpush.bf16.msra.mxu0 %v2407
  %3688 = vmatpush.bf16.msra.mxu0 %v2399
  %3689 = vmatmul.bf16.gmra.mxu0 %v259
  %v3690 = vpop.f32.mrf.mxu0
  %v3691 = vadd.f32 %v3678, %v3690
  %v3692 = vpop.f32.mrf.mxu0
  %3693 = vdwg.mxu0
  %3694 = vmatpush.bf16.msra.mxu0 %v2519
  %3695 = vmatpush.bf16.msra.mxu0 %v2511
  %3696 = vmatpush.bf16.msra.mxu0 %v2503
  %3697 = vmatpush.bf16.msra.mxu0 %v2495
  %3698 = vmatpush.bf16.msra.mxu0 %v2487
  %3699 = vmatpush.bf16.msra.mxu0 %v2479
  %3700 = vmatpush.bf16.msra.mxu0 %v2471
  %3701 = vmatpush.bf16.msra.mxu0 %v2463
  %3702 = vmatmul.bf16.gmra.mxu0 %v260
  %v3703 = vpop.f32.mrf.mxu0
  %v3704 = vadd.f32 %v3691, %v3703
  %v3705 = vpop.f32.mrf.mxu0
  %3706 = vdwg.mxu0
  %3707 = vmatpush.bf16.msra.mxu0 %v2583
  %3708 = vmatpush.bf16.msra.mxu0 %v2575
  %3709 = vmatpush.bf16.msra.mxu0 %v2567
  %3710 = vmatpush.bf16.msra.mxu0 %v2559
  %3711 = vmatpush.bf16.msra.mxu0 %v2551
  %3712 = vmatpush.bf16.msra.mxu0 %v2543
  %3713 = vmatpush.bf16.msra.mxu0 %v2535
  %3714 = vmatpush.bf16.msra.mxu0 %v2527
  %3715 = vmatmul.bf16.gmra.mxu0 %v261
  %v3716 = vpop.f32.mrf.mxu0
  %v3717 = vadd.f32 %v3704, %v3716
  %v3718 = vpop.f32.mrf.mxu0
  %3719 = vdwg.mxu0
  %3720 = vmatpush.bf16.msra.mxu0 %v2647
  %3721 = vmatpush.bf16.msra.mxu0 %v2639
  %3722 = vmatpush.bf16.msra.mxu0 %v2631
  %3723 = vmatpush.bf16.msra.mxu0 %v2623
  %3724 = vmatpush.bf16.msra.mxu0 %v2615
  %3725 = vmatpush.bf16.msra.mxu0 %v2607
  %3726 = vmatpush.bf16.msra.mxu0 %v2599
  %3727 = vmatpush.bf16.msra.mxu0 %v2591
  %3728 = vmatmul.bf16.gmra.mxu0 %v262
  %v3729 = vpop.f32.mrf.mxu0
  %v3730 = vadd.f32 %v3717, %v3729
  %v3731 = vpop.f32.mrf.mxu0
  %3732 = vdwg.mxu0
  %3733 = vmatpush.bf16.msra.mxu0 %v2711
  %3734 = vmatpush.bf16.msra.mxu0 %v2703
  %3735 = vmatpush.bf16.msra.mxu0 %v2695
  %3736 = vmatpush.bf16.msra.mxu0 %v2687
  %3737 = vmatpush.bf16.msra.mxu0 %v2679
  %3738 = vmatpush.bf16.msra.mxu0 %v2671
  %3739 = vmatpush.bf16.msra.mxu0 %v2663
  %3740 = vmatpush.bf16.msra.mxu0 %v2655
  %3741 = vmatmul.bf16.gmra.mxu0 %v263
  %v3742 = vpop.f32.mrf.mxu0
  %v3743 = vadd.f32 %v3730, %v3742
  %v3744 = vpop.f32.mrf.mxu0
  %3745 = vdwg.mxu0
  %3746 = vmatpush.bf16.msra.mxu0 %v2775
  %3747 = vmatpush.bf16.msra.mxu0 %v2767
  %3748 = vmatpush.bf16.msra.mxu0 %v2759
  %3749 = vmatpush.bf16.msra.mxu0 %v2751
  %3750 = vmatpush.bf16.msra.mxu0 %v2743
  %3751 = vmatpush.bf16.msra.mxu0 %v2735
  %3752 = vmatpush.bf16.msra.mxu0 %v2727
  %3753 = vmatpush.bf16.msra.mxu0 %v2719
  %3754 = vmatmul.bf16.gmra.mxu0 %v264
  %v3755 = vpop.f32.mrf.mxu0
  %v3756 = vadd.f32 %v3743, %v3755
  %v3757 = vpop.f32.mrf.mxu0
  %3758 = vdwg.mxu0
  %3759 = vmatpush.bf16.msra.mxu0 %v2839
  %3760 = vmatpush.bf16.msra.mxu0 %v2831
  %3761 = vmatpush.bf16.msra.mxu0 %v2823
  %3762 = vmatpush.bf16.msra.mxu0 %v2815
  %3763 = vmatpush.bf16.msra.mxu0 %v2807
  %3764 = vmatpush.bf16.msra.mxu0 %v2799
  %3765 = vmatpush.bf16.msra.mxu0 %v2791
  %3766 = vmatpush.bf16.msra.mxu0 %v2783
  %3767 = vmatmul.bf16.gmra.mxu0 %v265
  %v3768 = vpop.f32.mrf.mxu0
  %v3769 = vadd.f32 %v3756, %v3768
  %v3770 = vpop.f32.mrf.mxu0
  %3771 = vdwg.mxu0
  %3772 = vmatpush.bf16.msra.mxu0 %v2392
  %3773 = vmatpush.bf16.msra.mxu0 %v2384
  %3774 = vmatpush.bf16.msra.mxu0 %v2376
  %3775 = vmatpush.bf16.msra.mxu0 %v2368
  %3776 = vmatpush.bf16.msra.mxu0 %v2360
  %3777 = vmatpush.bf16.msra.mxu0 %v2352
  %3778 = vmatpush.bf16.msra.mxu0 %v2344
  %3779 = vmatpush.bf16.msra.mxu0 %v2336
  %3780 = vmatmul.bf16.gmra.mxu0 %v258
  %v3781 = vpop.f32.mrf.mxu0
  %v3782 = vadd.f32 %v784, %v3781
  %v3783 = vpop.f32.mrf.mxu0
  %3784 = vdwg.mxu0
  %3785 = vmatpush.bf16.msra.mxu0 %v2456
  %3786 = vmatpush.bf16.msra.mxu0 %v2448
  %3787 = vmatpush.bf16.msra.mxu0 %v2440
  %3788 = vmatpush.bf16.msra.mxu0 %v2432
  %3789 = vmatpush.bf16.msra.mxu0 %v2424
  %3790 = vmatpush.bf16.msra.mxu0 %v2416
  %3791 = vmatpush.bf16.msra.mxu0 %v2408
  %3792 = vmatpush.bf16.msra.mxu0 %v2400
  %3793 = vmatmul.bf16.gmra.mxu0 %v259
  %v3794 = vpop.f32.mrf.mxu0
  %v3795 = vadd.f32 %v3782, %v3794
  %v3796 = vpop.f32.mrf.mxu0
  %3797 = vdwg.mxu0
  %3798 = vmatpush.bf16.msra.mxu0 %v2520
  %3799 = vmatpush.bf16.msra.mxu0 %v2512
  %3800 = vmatpush.bf16.msra.mxu0 %v2504
  %3801 = vmatpush.bf16.msra.mxu0 %v2496
  %3802 = vmatpush.bf16.msra.mxu0 %v2488
  %3803 = vmatpush.bf16.msra.mxu0 %v2480
  %3804 = vmatpush.bf16.msra.mxu0 %v2472
  %3805 = vmatpush.bf16.msra.mxu0 %v2464
  %3806 = vmatmul.bf16.gmra.mxu0 %v260
  %v3807 = vpop.f32.mrf.mxu0
  %v3808 = vadd.f32 %v3795, %v3807
  %v3809 = vpop.f32.mrf.mxu0
  %3810 = vdwg.mxu0
  %3811 = vmatpush.bf16.msra.mxu0 %v2584
  %3812 = vmatpush.bf16.msra.mxu0 %v2576
  %3813 = vmatpush.bf16.msra.mxu0 %v2568
  %3814 = vmatpush.bf16.msra.mxu0 %v2560
  %3815 = vmatpush.bf16.msra.mxu0 %v2552
  %3816 = vmatpush.bf16.msra.mxu0 %v2544
  %3817 = vmatpush.bf16.msra.mxu0 %v2536
  %3818 = vmatpush.bf16.msra.mxu0 %v2528
  %3819 = vmatmul.bf16.gmra.mxu0 %v261
  %v3820 = vpop.f32.mrf.mxu0
  %v3821 = vadd.f32 %v3808, %v3820
  %v3822 = vpop.f32.mrf.mxu0
  %3823 = vdwg.mxu0
  %3824 = vmatpush.bf16.msra.mxu0 %v2648
  %3825 = vmatpush.bf16.msra.mxu0 %v2640
  %3826 = vmatpush.bf16.msra.mxu0 %v2632
  %3827 = vmatpush.bf16.msra.mxu0 %v2624
  %3828 = vmatpush.bf16.msra.mxu0 %v2616
  %3829 = vmatpush.bf16.msra.mxu0 %v2608
  %3830 = vmatpush.bf16.msra.mxu0 %v2600
  %3831 = vmatpush.bf16.msra.mxu0 %v2592
  %3832 = vmatmul.bf16.gmra.mxu0 %v262
  %v3833 = vpop.f32.mrf.mxu0
  %v3834 = vadd.f32 %v3821, %v3833
  %v3835 = vpop.f32.mrf.mxu0
  %3836 = vdwg.mxu0
  %3837 = vmatpush.bf16.msra.mxu0 %v2712
  %3838 = vmatpush.bf16.msra.mxu0 %v2704
  %3839 = vmatpush.bf16.msra.mxu0 %v2696
  %3840 = vmatpush.bf16.msra.mxu0 %v2688
  %3841 = vmatpush.bf16.msra.mxu0 %v2680
  %3842 = vmatpush.bf16.msra.mxu0 %v2672
  %3843 = vmatpush.bf16.msra.mxu0 %v2664
  %3844 = vmatpush.bf16.msra.mxu0 %v2656
  %3845 = vmatmul.bf16.gmra.mxu0 %v263
  %v3846 = vpop.f32.mrf.mxu0
  %v3847 = vadd.f32 %v3834, %v3846
  %v3848 = vpop.f32.mrf.mxu0
  %3849 = vdwg.mxu0
  %3850 = vmatpush.bf16.msra.mxu0 %v2776
  %3851 = vmatpush.bf16.msra.mxu0 %v2768
  %3852 = vmatpush.bf16.msra.mxu0 %v2760
  %3853 = vmatpush.bf16.msra.mxu0 %v2752
  %3854 = vmatpush.bf16.msra.mxu0 %v2744
  %3855 = vmatpush.bf16.msra.mxu0 %v2736
  %3856 = vmatpush.bf16.msra.mxu0 %v2728
  %3857 = vmatpush.bf16.msra.mxu0 %v2720
  %3858 = vmatmul.bf16.gmra.mxu0 %v264
  %v3859 = vpop.f32.mrf.mxu0
  %v3860 = vadd.f32 %v3847, %v3859
  %v3861 = vpop.f32.mrf.mxu0
  %3862 = vdwg.mxu0
  %3863 = vmatpush.bf16.msra.mxu0 %v2840
  %3864 = vmatpush.bf16.msra.mxu0 %v2832
  %3865 = vmatpush.bf16.msra.mxu0 %v2824
  %3866 = vmatpush.bf16.msra.mxu0 %v2816
  %3867 = vmatpush.bf16.msra.mxu0 %v2808
  %3868 = vmatpush.bf16.msra.mxu0 %v2800
  %3869 = vmatpush.bf16.msra.mxu0 %v2792
  %3870 = vmatpush.bf16.msra.mxu0 %v2784
  %3871 = vmatmul.bf16.gmra.mxu0 %v265
  %v3872 = vpop.f32.mrf.mxu0
  %v3873 = vadd.f32 %v3860, %v3872
  %v3874 = vpop.f32.mrf.mxu0
  %3875 = vdwg.mxu0
  %3876 = vmatpush.bf16.msra.mxu0 %v2393
  %3877 = vmatpush.bf16.msra.mxu0 %v2385
  %3878 = vmatpush.bf16.msra.mxu0 %v2377
  %3879 = vmatpush.bf16.msra.mxu0 %v2369
  %3880 = vmatpush.bf16.msra.mxu0 %v2361
  %3881 = vmatpush.bf16.msra.mxu0 %v2353
  %3882 = vmatpush.bf16.msra.mxu0 %v2345
  %3883 = vmatpush.bf16.msra.mxu0 %v2337
  %3884 = vmatmul.bf16.gmra.mxu0 %v258
  %v3885 = vpop.f32.mrf.mxu0
  %v3886 = vadd.f32 %v785, %v3885
  %v3887 = vpop.f32.mrf.mxu0
  %3888 = vdwg.mxu0
  %3889 = vmatpush.bf16.msra.mxu0 %v2457
  %3890 = vmatpush.bf16.msra.mxu0 %v2449
  %3891 = vmatpush.bf16.msra.mxu0 %v2441
  %3892 = vmatpush.bf16.msra.mxu0 %v2433
  %3893 = vmatpush.bf16.msra.mxu0 %v2425
  %3894 = vmatpush.bf16.msra.mxu0 %v2417
  %3895 = vmatpush.bf16.msra.mxu0 %v2409
  %3896 = vmatpush.bf16.msra.mxu0 %v2401
  %3897 = vmatmul.bf16.gmra.mxu0 %v259
  %v3898 = vpop.f32.mrf.mxu0
  %v3899 = vadd.f32 %v3886, %v3898
  %v3900 = vpop.f32.mrf.mxu0
  %3901 = vdwg.mxu0
  %3902 = vmatpush.bf16.msra.mxu0 %v2521
  %3903 = vmatpush.bf16.msra.mxu0 %v2513
  %3904 = vmatpush.bf16.msra.mxu0 %v2505
  %3905 = vmatpush.bf16.msra.mxu0 %v2497
  %3906 = vmatpush.bf16.msra.mxu0 %v2489
  %3907 = vmatpush.bf16.msra.mxu0 %v2481
  %3908 = vmatpush.bf16.msra.mxu0 %v2473
  %3909 = vmatpush.bf16.msra.mxu0 %v2465
  %3910 = vmatmul.bf16.gmra.mxu0 %v260
  %v3911 = vpop.f32.mrf.mxu0
  %v3912 = vadd.f32 %v3899, %v3911
  %v3913 = vpop.f32.mrf.mxu0
  %3914 = vdwg.mxu0
  %3915 = vmatpush.bf16.msra.mxu0 %v2585
  %3916 = vmatpush.bf16.msra.mxu0 %v2577
  %3917 = vmatpush.bf16.msra.mxu0 %v2569
  %3918 = vmatpush.bf16.msra.mxu0 %v2561
  %3919 = vmatpush.bf16.msra.mxu0 %v2553
  %3920 = vmatpush.bf16.msra.mxu0 %v2545
  %3921 = vmatpush.bf16.msra.mxu0 %v2537
  %3922 = vmatpush.bf16.msra.mxu0 %v2529
  %3923 = vmatmul.bf16.gmra.mxu0 %v261
  %v3924 = vpop.f32.mrf.mxu0
  %v3925 = vadd.f32 %v3912, %v3924
  %v3926 = vpop.f32.mrf.mxu0
  %3927 = vdwg.mxu0
  %3928 = vmatpush.bf16.msra.mxu0 %v2649
  %3929 = vmatpush.bf16.msra.mxu0 %v2641
  %3930 = vmatpush.bf16.msra.mxu0 %v2633
  %3931 = vmatpush.bf16.msra.mxu0 %v2625
  %3932 = vmatpush.bf16.msra.mxu0 %v2617
  %3933 = vmatpush.bf16.msra.mxu0 %v2609
  %3934 = vmatpush.bf16.msra.mxu0 %v2601
  %3935 = vmatpush.bf16.msra.mxu0 %v2593
  %3936 = vmatmul.bf16.gmra.mxu0 %v262
  %v3937 = vpop.f32.mrf.mxu0
  %v3938 = vadd.f32 %v3925, %v3937
  %v3939 = vpop.f32.mrf.mxu0
  %3940 = vdwg.mxu0
  %3941 = vmatpush.bf16.msra.mxu0 %v2713
  %3942 = vmatpush.bf16.msra.mxu0 %v2705
  %3943 = vmatpush.bf16.msra.mxu0 %v2697
  %3944 = vmatpush.bf16.msra.mxu0 %v2689
  %3945 = vmatpush.bf16.msra.mxu0 %v2681
  %3946 = vmatpush.bf16.msra.mxu0 %v2673
  %3947 = vmatpush.bf16.msra.mxu0 %v2665
  %3948 = vmatpush.bf16.msra.mxu0 %v2657
  %3949 = vmatmul.bf16.gmra.mxu0 %v263
  %v3950 = vpop.f32.mrf.mxu0
  %v3951 = vadd.f32 %v3938, %v3950
  %v3952 = vpop.f32.mrf.mxu0
  %3953 = vdwg.mxu0
  %3954 = vmatpush.bf16.msra.mxu0 %v2777
  %3955 = vmatpush.bf16.msra.mxu0 %v2769
  %3956 = vmatpush.bf16.msra.mxu0 %v2761
  %3957 = vmatpush.bf16.msra.mxu0 %v2753
  %3958 = vmatpush.bf16.msra.mxu0 %v2745
  %3959 = vmatpush.bf16.msra.mxu0 %v2737
  %3960 = vmatpush.bf16.msra.mxu0 %v2729
  %3961 = vmatpush.bf16.msra.mxu0 %v2721
  %3962 = vmatmul.bf16.gmra.mxu0 %v264
  %v3963 = vpop.f32.mrf.mxu0
  %v3964 = vadd.f32 %v3951, %v3963
  %v3965 = vpop.f32.mrf.mxu0
  %3966 = vdwg.mxu0
  %3967 = vmatpush.bf16.msra.mxu0 %v2841
  %3968 = vmatpush.bf16.msra.mxu0 %v2833
  %3969 = vmatpush.bf16.msra.mxu0 %v2825
  %3970 = vmatpush.bf16.msra.mxu0 %v2817
  %3971 = vmatpush.bf16.msra.mxu0 %v2809
  %3972 = vmatpush.bf16.msra.mxu0 %v2801
  %3973 = vmatpush.bf16.msra.mxu0 %v2793
  %3974 = vmatpush.bf16.msra.mxu0 %v2785
  %3975 = vmatmul.bf16.gmra.mxu0 %v265
  %v3976 = vpop.f32.mrf.mxu0
  %v3977 = vadd.f32 %v3964, %v3976
  %v3978 = vpop.f32.mrf.mxu0
  %3979 = vdwg.mxu0
  %3980 = vmatpush.bf16.msra.mxu0 %v2394
  %3981 = vmatpush.bf16.msra.mxu0 %v2386
  %3982 = vmatpush.bf16.msra.mxu0 %v2378
  %3983 = vmatpush.bf16.msra.mxu0 %v2370
  %3984 = vmatpush.bf16.msra.mxu0 %v2362
  %3985 = vmatpush.bf16.msra.mxu0 %v2354
  %3986 = vmatpush.bf16.msra.mxu0 %v2346
  %3987 = vmatpush.bf16.msra.mxu0 %v2338
  %3988 = vmatmul.bf16.gmra.mxu0 %v258
  %v3989 = vpop.f32.mrf.mxu0
  %v3990 = vadd.f32 %v786, %v3989
  %v3991 = vpop.f32.mrf.mxu0
  %3992 = vdwg.mxu0
  %3993 = vmatpush.bf16.msra.mxu0 %v2458
  %3994 = vmatpush.bf16.msra.mxu0 %v2450
  %3995 = vmatpush.bf16.msra.mxu0 %v2442
  %3996 = vmatpush.bf16.msra.mxu0 %v2434
  %3997 = vmatpush.bf16.msra.mxu0 %v2426
  %3998 = vmatpush.bf16.msra.mxu0 %v2418
  %3999 = vmatpush.bf16.msra.mxu0 %v2410
  %4000 = vmatpush.bf16.msra.mxu0 %v2402
  %4001 = vmatmul.bf16.gmra.mxu0 %v259
  %v4002 = vpop.f32.mrf.mxu0
  %v4003 = vadd.f32 %v3990, %v4002
  %v4004 = vpop.f32.mrf.mxu0
  %4005 = vdwg.mxu0
  %4006 = vmatpush.bf16.msra.mxu0 %v2522
  %4007 = vmatpush.bf16.msra.mxu0 %v2514
  %4008 = vmatpush.bf16.msra.mxu0 %v2506
  %4009 = vmatpush.bf16.msra.mxu0 %v2498
  %4010 = vmatpush.bf16.msra.mxu0 %v2490
  %4011 = vmatpush.bf16.msra.mxu0 %v2482
  %4012 = vmatpush.bf16.msra.mxu0 %v2474
  %4013 = vmatpush.bf16.msra.mxu0 %v2466
  %4014 = vmatmul.bf16.gmra.mxu0 %v260
  %v4015 = vpop.f32.mrf.mxu0
  %v4016 = vadd.f32 %v4003, %v4015
  %v4017 = vpop.f32.mrf.mxu0
  %4018 = vdwg.mxu0
  %4019 = vmatpush.bf16.msra.mxu0 %v2586
  %4020 = vmatpush.bf16.msra.mxu0 %v2578
  %4021 = vmatpush.bf16.msra.mxu0 %v2570
  %4022 = vmatpush.bf16.msra.mxu0 %v2562
  %4023 = vmatpush.bf16.msra.mxu0 %v2554
  %4024 = vmatpush.bf16.msra.mxu0 %v2546
  %4025 = vmatpush.bf16.msra.mxu0 %v2538
  %4026 = vmatpush.bf16.msra.mxu0 %v2530
  %4027 = vmatmul.bf16.gmra.mxu0 %v261
  %v4028 = vpop.f32.mrf.mxu0
  %v4029 = vadd.f32 %v4016, %v4028
  %v4030 = vpop.f32.mrf.mxu0
  %4031 = vdwg.mxu0
  %4032 = vmatpush.bf16.msra.mxu0 %v2650
  %4033 = vmatpush.bf16.msra.mxu0 %v2642
  %4034 = vmatpush.bf16.msra.mxu0 %v2634
  %4035 = vmatpush.bf16.msra.mxu0 %v2626
  %4036 = vmatpush.bf16.msra.mxu0 %v2618
  %4037 = vmatpush.bf16.msra.mxu0 %v2610
  %4038 = vmatpush.bf16.msra.mxu0 %v2602
  %4039 = vmatpush.bf16.msra.mxu0 %v2594
  %4040 = vmatmul.bf16.gmra.mxu0 %v262
  %v4041 = vpop.f32.mrf.mxu0
  %v4042 = vadd.f32 %v4029, %v4041
  %v4043 = vpop.f32.mrf.mxu0
  %4044 = vdwg.mxu0
  %4045 = vmatpush.bf16.msra.mxu0 %v2714
  %4046 = vmatpush.bf16.msra.mxu0 %v2706
  %4047 = vmatpush.bf16.msra.mxu0 %v2698
  %4048 = vmatpush.bf16.msra.mxu0 %v2690
  %4049 = vmatpush.bf16.msra.mxu0 %v2682
  %4050 = vmatpush.bf16.msra.mxu0 %v2674
  %4051 = vmatpush.bf16.msra.mxu0 %v2666
  %4052 = vmatpush.bf16.msra.mxu0 %v2658
  %4053 = vmatmul.bf16.gmra.mxu0 %v263
  %v4054 = vpop.f32.mrf.mxu0
  %v4055 = vadd.f32 %v4042, %v4054
  %v4056 = vpop.f32.mrf.mxu0
  %4057 = vdwg.mxu0
  %4058 = vmatpush.bf16.msra.mxu0 %v2778
  %4059 = vmatpush.bf16.msra.mxu0 %v2770
  %4060 = vmatpush.bf16.msra.mxu0 %v2762
  %4061 = vmatpush.bf16.msra.mxu0 %v2754
  %4062 = vmatpush.bf16.msra.mxu0 %v2746
  %4063 = vmatpush.bf16.msra.mxu0 %v2738
  %4064 = vmatpush.bf16.msra.mxu0 %v2730
  %4065 = vmatpush.bf16.msra.mxu0 %v2722
  %4066 = vmatmul.bf16.gmra.mxu0 %v264
  %v4067 = vpop.f32.mrf.mxu0
  %v4068 = vadd.f32 %v4055, %v4067
  %v4069 = vpop.f32.mrf.mxu0
  %4070 = vdwg.mxu0
  %4071 = vmatpush.bf16.msra.mxu0 %v2842
  %4072 = vmatpush.bf16.msra.mxu0 %v2834
  %4073 = vmatpush.bf16.msra.mxu0 %v2826
  %4074 = vmatpush.bf16.msra.mxu0 %v2818
  %4075 = vmatpush.bf16.msra.mxu0 %v2810
  %4076 = vmatpush.bf16.msra.mxu0 %v2802
  %4077 = vmatpush.bf16.msra.mxu0 %v2794
  %4078 = vmatpush.bf16.msra.mxu0 %v2786
  %4079 = vmatmul.bf16.gmra.mxu0 %v265
  %v4080 = vpop.f32.mrf.mxu0
  %v4081 = vadd.f32 %v4068, %v4080
  %v4082 = vpop.f32.mrf.mxu0
  %4083 = vdwg.mxu0
  %4084 = vmatpush.bf16.msra.mxu0 %v2395
  %4085 = vmatpush.bf16.msra.mxu0 %v2387
  %4086 = vmatpush.bf16.msra.mxu0 %v2379
  %4087 = vmatpush.bf16.msra.mxu0 %v2371
  %4088 = vmatpush.bf16.msra.mxu0 %v2363
  %4089 = vmatpush.bf16.msra.mxu0 %v2355
  %4090 = vmatpush.bf16.msra.mxu0 %v2347
  %4091 = vmatpush.bf16.msra.mxu0 %v2339
  %4092 = vmatmul.bf16.gmra.mxu0 %v258
  %v4093 = vpop.f32.mrf.mxu0
  %v4094 = vadd.f32 %v787, %v4093
  %v4095 = vpop.f32.mrf.mxu0
  %4096 = vdwg.mxu0
  %4097 = vmatpush.bf16.msra.mxu0 %v2459
  %4098 = vmatpush.bf16.msra.mxu0 %v2451
  %4099 = vmatpush.bf16.msra.mxu0 %v2443
  %4100 = vmatpush.bf16.msra.mxu0 %v2435
  %4101 = vmatpush.bf16.msra.mxu0 %v2427
  %4102 = vmatpush.bf16.msra.mxu0 %v2419
  %4103 = vmatpush.bf16.msra.mxu0 %v2411
  %4104 = vmatpush.bf16.msra.mxu0 %v2403
  %4105 = vmatmul.bf16.gmra.mxu0 %v259
  %v4106 = vpop.f32.mrf.mxu0
  %v4107 = vadd.f32 %v4094, %v4106
  %v4108 = vpop.f32.mrf.mxu0
  %4109 = vdwg.mxu0
  %4110 = vmatpush.bf16.msra.mxu0 %v2523
  %4111 = vmatpush.bf16.msra.mxu0 %v2515
  %4112 = vmatpush.bf16.msra.mxu0 %v2507
  %4113 = vmatpush.bf16.msra.mxu0 %v2499
  %4114 = vmatpush.bf16.msra.mxu0 %v2491
  %4115 = vmatpush.bf16.msra.mxu0 %v2483
  %4116 = vmatpush.bf16.msra.mxu0 %v2475
  %4117 = vmatpush.bf16.msra.mxu0 %v2467
  %4118 = vmatmul.bf16.gmra.mxu0 %v260
  %v4119 = vpop.f32.mrf.mxu0
  %v4120 = vadd.f32 %v4107, %v4119
  %v4121 = vpop.f32.mrf.mxu0
  %4122 = vdwg.mxu0
  %4123 = vmatpush.bf16.msra.mxu0 %v2587
  %4124 = vmatpush.bf16.msra.mxu0 %v2579
  %4125 = vmatpush.bf16.msra.mxu0 %v2571
  %4126 = vmatpush.bf16.msra.mxu0 %v2563
  %4127 = vmatpush.bf16.msra.mxu0 %v2555
  %4128 = vmatpush.bf16.msra.mxu0 %v2547
  %4129 = vmatpush.bf16.msra.mxu0 %v2539
  %4130 = vmatpush.bf16.msra.mxu0 %v2531
  %4131 = vmatmul.bf16.gmra.mxu0 %v261
  %v4132 = vpop.f32.mrf.mxu0
  %v4133 = vadd.f32 %v4120, %v4132
  %v4134 = vpop.f32.mrf.mxu0
  %4135 = vdwg.mxu0
  %4136 = vmatpush.bf16.msra.mxu0 %v2651
  %4137 = vmatpush.bf16.msra.mxu0 %v2643
  %4138 = vmatpush.bf16.msra.mxu0 %v2635
  %4139 = vmatpush.bf16.msra.mxu0 %v2627
  %4140 = vmatpush.bf16.msra.mxu0 %v2619
  %4141 = vmatpush.bf16.msra.mxu0 %v2611
  %4142 = vmatpush.bf16.msra.mxu0 %v2603
  %4143 = vmatpush.bf16.msra.mxu0 %v2595
  %4144 = vmatmul.bf16.gmra.mxu0 %v262
  %v4145 = vpop.f32.mrf.mxu0
  %v4146 = vadd.f32 %v4133, %v4145
  %v4147 = vpop.f32.mrf.mxu0
  %4148 = vdwg.mxu0
  %4149 = vmatpush.bf16.msra.mxu0 %v2715
  %4150 = vmatpush.bf16.msra.mxu0 %v2707
  %4151 = vmatpush.bf16.msra.mxu0 %v2699
  %4152 = vmatpush.bf16.msra.mxu0 %v2691
  %4153 = vmatpush.bf16.msra.mxu0 %v2683
  %4154 = vmatpush.bf16.msra.mxu0 %v2675
  %4155 = vmatpush.bf16.msra.mxu0 %v2667
  %4156 = vmatpush.bf16.msra.mxu0 %v2659
  %4157 = vmatmul.bf16.gmra.mxu0 %v263
  %v4158 = vpop.f32.mrf.mxu0
  %v4159 = vadd.f32 %v4146, %v4158
  %v4160 = vpop.f32.mrf.mxu0
  %4161 = vdwg.mxu0
  %4162 = vmatpush.bf16.msra.mxu0 %v2779
  %4163 = vmatpush.bf16.msra.mxu0 %v2771
  %4164 = vmatpush.bf16.msra.mxu0 %v2763
  %4165 = vmatpush.bf16.msra.mxu0 %v2755
  %4166 = vmatpush.bf16.msra.mxu0 %v2747
  %4167 = vmatpush.bf16.msra.mxu0 %v2739
  %4168 = vmatpush.bf16.msra.mxu0 %v2731
  %4169 = vmatpush.bf16.msra.mxu0 %v2723
  %4170 = vmatmul.bf16.gmra.mxu0 %v264
  %v4171 = vpop.f32.mrf.mxu0
  %v4172 = vadd.f32 %v4159, %v4171
  %v4173 = vpop.f32.mrf.mxu0
  %4174 = vdwg.mxu0
  %4175 = vmatpush.bf16.msra.mxu0 %v2843
  %4176 = vmatpush.bf16.msra.mxu0 %v2835
  %4177 = vmatpush.bf16.msra.mxu0 %v2827
  %4178 = vmatpush.bf16.msra.mxu0 %v2819
  %4179 = vmatpush.bf16.msra.mxu0 %v2811
  %4180 = vmatpush.bf16.msra.mxu0 %v2803
  %4181 = vmatpush.bf16.msra.mxu0 %v2795
  %4182 = vmatpush.bf16.msra.mxu0 %v2787
  %4183 = vmatmul.bf16.gmra.mxu0 %v265
  %v4184 = vpop.f32.mrf.mxu0
  %v4185 = vadd.f32 %v4172, %v4184
  %v4186 = vpop.f32.mrf.mxu0
  %4187 = vdwg.mxu0
  %v4188 = vmax.f32 %v3457, 0.0
  %v4189 = vmax.f32 %v3561, 0.0
  %v4190 = vmax.f32 %v3665, 0.0
  %v4191 = vmax.f32 %v3769, 0.0
  %v4192 = vmax.f32 %v3873, 0.0
  %v4193 = vmax.f32 %v3977, 0.0
  %v4194 = vmax.f32 %v4081, 0.0
  %v4195 = vmax.f32 %v4185, 0.0
  %v4196 = vpack.c.bf16 %v4188, %v4188
  %v4197 = vpack.c.bf16 %v4189, %v4189
  %v4198 = vpack.c.bf16 %v4190, %v4190
  %v4199 = vpack.c.bf16 %v4191, %v4191
  %v4200 = vpack.c.bf16 %v4192, %v4192
  %v4201 = vpack.c.bf16 %v4193, %v4193
  %v4202 = vpack.c.bf16 %v4194, %v4194
  %v4203 = vpack.c.bf16 %v4195, %v4195
  %v4204 = vld [vmem:[%s5] sm:$0xf]
  %v4205 = vld [vmem:[%s5 + $0x4] sm:$0xf]
  %v4206 = vld [vmem:[%s5 + $0x8] sm:$0xf]
  %v4207 = vld [vmem:[%s5 + $0xc] sm:$0xf]
  %v4208 = vld [vmem:[%s5 + $0x10] sm:$0xf]
  %v4209 = vld [vmem:[%s5 + $0x14] sm:$0xf]
  %v4210 = vld [vmem:[%s5 + $0x18] sm:$0xf]
  %v4211 = vld [vmem:[%s5 + $0x1c] sm:$0xf]
  %v4212 = vld [vmem:[%s5 + $0x20] sm:$0xf]
  %v4213 = vld [vmem:[%s5 + $0x24] sm:$0xf]
  %v4214 = vld [vmem:[%s5 + $0x28] sm:$0xf]
  %v4215 = vld [vmem:[%s5 + $0x2c] sm:$0xf]
  %v4216 = vld [vmem:[%s5 + $0x30] sm:$0xf]
  %v4217 = vld [vmem:[%s5 + $0x34] sm:$0xf]
  %v4218 = vld [vmem:[%s5 + $0x38] sm:$0xf]
  %v4219 = vld [vmem:[%s5 + $0x3c] sm:$0xf]
  %v4220 = vld [vmem:[%s5 + $0x40] sm:$0xf]
  %v4221 = vld [vmem:[%s5 + $0x44] sm:$0xf]
  %v4222 = vld [vmem:[%s5 + $0x48] sm:$0xf]
  %v4223 = vld [vmem:[%s5 + $0x4c] sm:$0xf]
  %v4224 = vld [vmem:[%s5 + $0x50] sm:$0xf]
  %v4225 = vld [vmem:[%s5 + $0x54] sm:$0xf]
  %v4226 = vld [vmem:[%s5 + $0x58] sm:$0xf]
  %v4227 = vld [vmem:[%s5 + $0x5c] sm:$0xf]
  %v4228 = vld [vmem:[%s5 + $0x60] sm:$0xf]
  %v4229 = vld [vmem:[%s5 + $0x64] sm:$0xf]
  %v4230 = vld [vmem:[%s5 + $0x68] sm:$0xf]
  %v4231 = vld [vmem:[%s5 + $0x6c] sm:$0xf]
  %v4232 = vld [vmem:[%s5 + $0x70] sm:$0xf]
  %v4233 = vld [vmem:[%s5 + $0x74] sm:$0xf]
  %v4234 = vld [vmem:[%s5 + $0x78] sm:$0xf]
  %v4235 = vld [vmem:[%s5 + $0x7c] sm:$0xf]
  %v4236 = vld [vmem:[%s5 + $0x80] sm:$0xf]
  %v4237 = vld [vmem:[%s5 + $0x84] sm:$0xf]
  %v4238 = vld [vmem:[%s5 + $0x88] sm:$0xf]
  %v4239 = vld [vmem:[%s5 + $0x8c] sm:$0xf]
  %v4240 = vld [vmem:[%s5 + $0x90] sm:$0xf]
  %v4241 = vld [vmem:[%s5 + $0x94] sm:$0xf]
  %v4242 = vld [vmem:[%s5 + $0x98] sm:$0xf]
  %v4243 = vld [vmem:[%s5 + $0x9c] sm:$0xf]
  %v4244 = vld [vmem:[%s5 + $0xa0] sm:$0xf]
  %v4245 = vld [vmem:[%s5 + $0xa4] sm:$0xf]
  %v4246 = vld [vmem:[%s5 + $0xa8] sm:$0xf]
  %v4247 = vld [vmem:[%s5 + $0xac] sm:$0xf]
  %v4248 = vld [vmem:[%s5 + $0xb0] sm:$0xf]
  %v4249 = vld [vmem:[%s5 + $0xb4] sm:$0xf]
  %v4250 = vld [vmem:[%s5 + $0xb8] sm:$0xf]
  %v4251 = vld [vmem:[%s5 + $0xbc] sm:$0xf]
  %v4252 = vld [vmem:[%s5 + $0xc0] sm:$0xf]
  %v4253 = vld [vmem:[%s5 + $0xc4] sm:$0xf]
  %v4254 = vld [vmem:[%s5 + $0xc8] sm:$0xf]
  %v4255 = vld [vmem:[%s5 + $0xcc] sm:$0xf]
  %v4256 = vld [vmem:[%s5 + $0xd0] sm:$0xf]
  %v4257 = vld [vmem:[%s5 + $0xd4] sm:$0xf]
  %v4258 = vld [vmem:[%s5 + $0xd8] sm:$0xf]
  %v4259 = vld [vmem:[%s5 + $0xdc] sm:$0xf]
  %v4260 = vld [vmem:[%s5 + $0xe0] sm:$0xf]
  %v4261 = vld [vmem:[%s5 + $0xe4] sm:$0xf]
  %v4262 = vld [vmem:[%s5 + $0xe8] sm:$0xf]
  %v4263 = vld [vmem:[%s5 + $0xec] sm:$0xf]
  %v4264 = vld [vmem:[%s5 + $0xf0] sm:$0xf]
  %v4265 = vld [vmem:[%s5 + $0xf4] sm:$0xf]
  %v4266 = vld [vmem:[%s5 + $0xf8] sm:$0xf]
  %v4267 = vld [vmem:[%s5 + $0xfc] sm:$0xf]
  %v4268 = vld [vmem:[%s5 + $0x100] sm:$0xf]
  %v4269 = vld [vmem:[%s5 + $0x104] sm:$0xf]
  %v4270 = vld [vmem:[%s5 + $0x108] sm:$0xf]
  %v4271 = vld [vmem:[%s5 + $0x10c] sm:$0xf]
  %v4272 = vld [vmem:[%s5 + $0x110] sm:$0xf]
  %v4273 = vld [vmem:[%s5 + $0x114] sm:$0xf]
  %v4274 = vld [vmem:[%s5 + $0x118] sm:$0xf]
  %v4275 = vld [vmem:[%s5 + $0x11c] sm:$0xf]
  %v4276 = vld [vmem:[%s5 + $0x120] sm:$0xf]
  %v4277 = vld [vmem:[%s5 + $0x124] sm:$0xf]
  %v4278 = vld [vmem:[%s5 + $0x128] sm:$0xf]
  %v4279 = vld [vmem:[%s5 + $0x12c] sm:$0xf]
  %v4280 = vld [vmem:[%s5 + $0x130] sm:$0xf]
  %v4281 = vld [vmem:[%s5 + $0x134] sm:$0xf]
  %v4282 = vld [vmem:[%s5 + $0x138] sm:$0xf]
  %v4283 = vld [vmem:[%s5 + $0x13c] sm:$0xf]
  %v4284 = vld [vmem:[%s5 + $0x140] sm:$0xf]
  %v4285 = vld [vmem:[%s5 + $0x144] sm:$0xf]
  %v4286 = vld [vmem:[%s5 + $0x148] sm:$0xf]
  %v4287 = vld [vmem:[%s5 + $0x14c] sm:$0xf]
  %v4288 = vld [vmem:[%s5 + $0x150] sm:$0xf]
  %v4289 = vld [vmem:[%s5 + $0x154] sm:$0xf]
  %v4290 = vld [vmem:[%s5 + $0x158] sm:$0xf]
  %v4291 = vld [vmem:[%s5 + $0x15c] sm:$0xf]
  %v4292 = vld [vmem:[%s5 + $0x160] sm:$0xf]
  %v4293 = vld [vmem:[%s5 + $0x164] sm:$0xf]
  %v4294 = vld [vmem:[%s5 + $0x168] sm:$0xf]
  %v4295 = vld [vmem:[%s5 + $0x16c] sm:$0xf]
  %v4296 = vld [vmem:[%s5 + $0x170] sm:$0xf]
  %v4297 = vld [vmem:[%s5 + $0x174] sm:$0xf]
  %v4298 = vld [vmem:[%s5 + $0x178] sm:$0xf]
  %v4299 = vld [vmem:[%s5 + $0x17c] sm:$0xf]
  %v4300 = vld [vmem:[%s5 + $0x180] sm:$0xf]
  %v4301 = vld [vmem:[%s5 + $0x184] sm:$0xf]
  %v4302 = vld [vmem:[%s5 + $0x188] sm:$0xf]
  %v4303 = vld [vmem:[%s5 + $0x18c] sm:$0xf]
  %v4304 = vld [vmem:[%s5 + $0x190] sm:$0xf]
  %v4305 = vld [vmem:[%s5 + $0x194] sm:$0xf]
  %v4306 = vld [vmem:[%s5 + $0x198] sm:$0xf]
  %v4307 = vld [vmem:[%s5 + $0x19c] sm:$0xf]
  %v4308 = vld [vmem:[%s5 + $0x1a0] sm:$0xf]
  %v4309 = vld [vmem:[%s5 + $0x1a4] sm:$0xf]
  %v4310 = vld [vmem:[%s5 + $0x1a8] sm:$0xf]
  %v4311 = vld [vmem:[%s5 + $0x1ac] sm:$0xf]
  %v4312 = vld [vmem:[%s5 + $0x1b0] sm:$0xf]
  %v4313 = vld [vmem:[%s5 + $0x1b4] sm:$0xf]
  %v4314 = vld [vmem:[%s5 + $0x1b8] sm:$0xf]
  %v4315 = vld [vmem:[%s5 + $0x1bc] sm:$0xf]
  %v4316 = vld [vmem:[%s5 + $0x1c0] sm:$0xf]
  %v4317 = vld [vmem:[%s5 + $0x1c4] sm:$0xf]
  %v4318 = vld [vmem:[%s5 + $0x1c8] sm:$0xf]
  %v4319 = vld [vmem:[%s5 + $0x1cc] sm:$0xf]
  %v4320 = vld [vmem:[%s5 + $0x1d0] sm:$0xf]
  %v4321 = vld [vmem:[%s5 + $0x1d4] sm:$0xf]
  %v4322 = vld [vmem:[%s5 + $0x1d8] sm:$0xf]
  %v4323 = vld [vmem:[%s5 + $0x1dc] sm:$0xf]
  %v4324 = vld [vmem:[%s5 + $0x1e0] sm:$0xf]
  %v4325 = vld [vmem:[%s5 + $0x1e4] sm:$0xf]
  %v4326 = vld [vmem:[%s5 + $0x1e8] sm:$0xf]
  %v4327 = vld [vmem:[%s5 + $0x1ec] sm:$0xf]
  %v4328 = vld [vmem:[%s5 + $0x1f0] sm:$0xf]
  %v4329 = vld [vmem:[%s5 + $0x1f4] sm:$0xf]
  %v4330 = vld [vmem:[%s5 + $0x1f8] sm:$0xf]
  %v4331 = vld [vmem:[%s5 + $0x1fc] sm:$0xf]
  %v4332 = vld [vmem:[%s6] sm:$0x1]
  %v4334 = vperm.slane %v4332, 0
  %v4464 = vunpack.c.l.b16 %v4204
  %v4465 = vunpack.c.l.b16 %v4205
  %v4466 = vunpack.c.l.b16 %v4206
  %v4467 = vunpack.c.l.b16 %v4207
  %v4468 = vunpack.c.l.b16 %v4208
  %v4469 = vunpack.c.l.b16 %v4209
  %v4470 = vunpack.c.l.b16 %v4210
  %v4471 = vunpack.c.l.b16 %v4211
  %v4472 = vunpack.c.l.b16 %v4212
  %v4473 = vunpack.c.l.b16 %v4213
  %v4474 = vunpack.c.l.b16 %v4214
  %v4475 = vunpack.c.l.b16 %v4215
  %v4476 = vunpack.c.l.b16 %v4216
  %v4477 = vunpack.c.l.b16 %v4217
  %v4478 = vunpack.c.l.b16 %v4218
  %v4479 = vunpack.c.l.b16 %v4219
  %v4480 = vunpack.c.l.b16 %v4220
  %v4481 = vunpack.c.l.b16 %v4221
  %v4482 = vunpack.c.l.b16 %v4222
  %v4483 = vunpack.c.l.b16 %v4223
  %v4484 = vunpack.c.l.b16 %v4224
  %v4485 = vunpack.c.l.b16 %v4225
  %v4486 = vunpack.c.l.b16 %v4226
  %v4487 = vunpack.c.l.b16 %v4227
  %v4488 = vunpack.c.l.b16 %v4228
  %v4489 = vunpack.c.l.b16 %v4229
  %v4490 = vunpack.c.l.b16 %v4230
  %v4491 = vunpack.c.l.b16 %v4231
  %v4492 = vunpack.c.l.b16 %v4232
  %v4493 = vunpack.c.l.b16 %v4233
  %v4494 = vunpack.c.l.b16 %v4234
  %v4495 = vunpack.c.l.b16 %v4235
  %v4496 = vunpack.c.l.b16 %v4236
  %v4497 = vunpack.c.l.b16 %v4237
  %v4498 = vunpack.c.l.b16 %v4238
  %v4499 = vunpack.c.l.b16 %v4239
  %v4500 = vunpack.c.l.b16 %v4240
  %v4501 = vunpack.c.l.b16 %v4241
  %v4502 = vunpack.c.l.b16 %v4242
  %v4503 = vunpack.c.l.b16 %v4243
  %v4504 = vunpack.c.l.b16 %v4244
  %v4505 = vunpack.c.l.b16 %v4245
  %v4506 = vunpack.c.l.b16 %v4246
  %v4507 = vunpack.c.l.b16 %v4247
  %v4508 = vunpack.c.l.b16 %v4248
  %v4509 = vunpack.c.l.b16 %v4249
  %v4510 = vunpack.c.l.b16 %v4250
  %v4511 = vunpack.c.l.b16 %v4251
  %v4512 = vunpack.c.l.b16 %v4252
  %v4513 = vunpack.c.l.b16 %v4253
  %v4514 = vunpack.c.l.b16 %v4254
  %v4515 = vunpack.c.l.b16 %v4255
  %v4516 = vunpack.c.l.b16 %v4256
  %v4517 = vunpack.c.l.b16 %v4257
  %v4518 = vunpack.c.l.b16 %v4258
  %v4519 = vunpack.c.l.b16 %v4259
  %v4520 = vunpack.c.l.b16 %v4260
  %v4521 = vunpack.c.l.b16 %v4261
  %v4522 = vunpack.c.l.b16 %v4262
  %v4523 = vunpack.c.l.b16 %v4263
  %v4524 = vunpack.c.l.b16 %v4264
  %v4525 = vunpack.c.l.b16 %v4265
  %v4526 = vunpack.c.l.b16 %v4266
  %v4527 = vunpack.c.l.b16 %v4267
  %v4528 = vunpack.c.l.b16 %v4268
  %v4529 = vunpack.c.l.b16 %v4269
  %v4530 = vunpack.c.l.b16 %v4270
  %v4531 = vunpack.c.l.b16 %v4271
  %v4532 = vunpack.c.l.b16 %v4272
  %v4533 = vunpack.c.l.b16 %v4273
  %v4534 = vunpack.c.l.b16 %v4274
  %v4535 = vunpack.c.l.b16 %v4275
  %v4536 = vunpack.c.l.b16 %v4276
  %v4537 = vunpack.c.l.b16 %v4277
  %v4538 = vunpack.c.l.b16 %v4278
  %v4539 = vunpack.c.l.b16 %v4279
  %v4540 = vunpack.c.l.b16 %v4280
  %v4541 = vunpack.c.l.b16 %v4281
  %v4542 = vunpack.c.l.b16 %v4282
  %v4543 = vunpack.c.l.b16 %v4283
  %v4544 = vunpack.c.l.b16 %v4284
  %v4545 = vunpack.c.l.b16 %v4285
  %v4546 = vunpack.c.l.b16 %v4286
  %v4547 = vunpack.c.l.b16 %v4287
  %v4548 = vunpack.c.l.b16 %v4288
  %v4549 = vunpack.c.l.b16 %v4289
  %v4550 = vunpack.c.l.b16 %v4290
  %v4551 = vunpack.c.l.b16 %v4291
  %v4552 = vunpack.c.l.b16 %v4292
  %v4553 = vunpack.c.l.b16 %v4293
  %v4554 = vunpack.c.l.b16 %v4294
  %v4555 = vunpack.c.l.b16 %v4295
  %v4556 = vunpack.c.l.b16 %v4296
  %v4557 = vunpack.c.l.b16 %v4297
  %v4558 = vunpack.c.l.b16 %v4298
  %v4559 = vunpack.c.l.b16 %v4299
  %v4560 = vunpack.c.l.b16 %v4300
  %v4561 = vunpack.c.l.b16 %v4301
  %v4562 = vunpack.c.l.b16 %v4302
  %v4563 = vunpack.c.l.b16 %v4303
  %v4564 = vunpack.c.l.b16 %v4304
  %v4565 = vunpack.c.l.b16 %v4305
  %v4566 = vunpack.c.l.b16 %v4306
  %v4567 = vunpack.c.l.b16 %v4307
  %v4568 = vunpack.c.l.b16 %v4308
  %v4569 = vunpack.c.l.b16 %v4309
  %v4570 = vunpack.c.l.b16 %v4310
  %v4571 = vunpack.c.l.b16 %v4311
  %v4572 = vunpack.c.l.b16 %v4312
  %v4573 = vunpack.c.l.b16 %v4313
  %v4574 = vunpack.c.l.b16 %v4314
  %v4575 = vunpack.c.l.b16 %v4315
  %v4576 = vunpack.c.l.b16 %v4316
  %v4577 = vunpack.c.l.b16 %v4317
  %v4578 = vunpack.c.l.b16 %v4318
  %v4579 = vunpack.c.l.b16 %v4319
  %v4580 = vunpack.c.l.b16 %v4320
  %v4581 = vunpack.c.l.b16 %v4321
  %v4582 = vunpack.c.l.b16 %v4322
  %v4583 = vunpack.c.l.b16 %v4323
  %v4584 = vunpack.c.l.b16 %v4324
  %v4585 = vunpack.c.l.b16 %v4325
  %v4586 = vunpack.c.l.b16 %v4326
  %v4587 = vunpack.c.l.b16 %v4327
  %v4588 = vunpack.c.l.b16 %v4328
  %v4589 = vunpack.c.l.b16 %v4329
  %v4590 = vunpack.c.l.b16 %v4330
  %v4591 = vunpack.c.l.b16 %v4331
  %v4592 = vpack.c.b16 %v4465, %v4464
  %v4593 = vpack.c.b16 %v4467, %v4466
  %v4594 = vpack.c.b16 %v4469, %v4468
  %v4595 = vpack.c.b16 %v4471, %v4470
  %v4596 = vpack.c.b16 %v4473, %v4472
  %v4597 = vpack.c.b16 %v4475, %v4474
  %v4598 = vpack.c.b16 %v4477, %v4476
  %v4599 = vpack.c.b16 %v4479, %v4478
  %v4600 = vpack.c.b16 %v4481, %v4480
  %v4601 = vpack.c.b16 %v4483, %v4482
  %v4602 = vpack.c.b16 %v4485, %v4484
  %v4603 = vpack.c.b16 %v4487, %v4486
  %v4604 = vpack.c.b16 %v4489, %v4488
  %v4605 = vpack.c.b16 %v4491, %v4490
  %v4606 = vpack.c.b16 %v4493, %v4492
  %v4607 = vpack.c.b16 %v4495, %v4494
  %v4608 = vpack.c.b16 %v4497, %v4496
  %v4609 = vpack.c.b16 %v4499, %v4498
  %v4610 = vpack.c.b16 %v4501, %v4500
  %v4611 = vpack.c.b16 %v4503, %v4502
  %v4612 = vpack.c.b16 %v4505, %v4504
  %v4613 = vpack.c.b16 %v4507, %v4506
  %v4614 = vpack.c.b16 %v4509, %v4508
  %v4615 = vpack.c.b16 %v4511, %v4510
  %v4616 = vpack.c.b16 %v4513, %v4512
  %v4617 = vpack.c.b16 %v4515, %v4514
  %v4618 = vpack.c.b16 %v4517, %v4516
  %v4619 = vpack.c.b16 %v4519, %v4518
  %v4620 = vpack.c.b16 %v4521, %v4520
  %v4621 = vpack.c.b16 %v4523, %v4522
  %v4622 = vpack.c.b16 %v4525, %v4524
  %v4623 = vpack.c.b16 %v4527, %v4526
  %v4624 = vpack.c.b16 %v4529, %v4528
  %v4625 = vpack.c.b16 %v4531, %v4530
  %v4626 = vpack.c.b16 %v4533, %v4532
  %v4627 = vpack.c.b16 %v4535, %v4534
  %v4628 = vpack.c.b16 %v4537, %v4536
  %v4629 = vpack.c.b16 %v4539, %v4538
  %v4630 = vpack.c.b16 %v4541, %v4540
  %v4631 = vpack.c.b16 %v4543, %v4542
  %v4632 = vpack.c.b16 %v4545, %v4544
  %v4633 = vpack.c.b16 %v4547, %v4546
  %v4634 = vpack.c.b16 %v4549, %v4548
  %v4635 = vpack.c.b16 %v4551, %v4550
  %v4636 = vpack.c.b16 %v4553, %v4552
  %v4637 = vpack.c.b16 %v4555, %v4554
  %v4638 = vpack.c.b16 %v4557, %v4556
  %v4639 = vpack.c.b16 %v4559, %v4558
  %v4640 = vpack.c.b16 %v4561, %v4560
  %v4641 = vpack.c.b16 %v4563, %v4562
  %v4642 = vpack.c.b16 %v4565, %v4564
  %v4643 = vpack.c.b16 %v4567, %v4566
  %v4644 = vpack.c.b16 %v4569, %v4568
  %v4645 = vpack.c.b16 %v4571, %v4570
  %v4646 = vpack.c.b16 %v4573, %v4572
  %v4647 = vpack.c.b16 %v4575, %v4574
  %v4648 = vpack.c.b16 %v4577, %v4576
  %v4649 = vpack.c.b16 %v4579, %v4578
  %v4650 = vpack.c.b16 %v4581, %v4580
  %v4651 = vpack.c.b16 %v4583, %v4582
  %v4652 = vpack.c.b16 %v4585, %v4584
  %v4653 = vpack.c.b16 %v4587, %v4586
  %v4654 = vpack.c.b16 %v4589, %v4588
  %v4655 = vpack.c.b16 %v4591, %v4590
  %4720 = vmatpush.bf16.msra.mxu0 %v4599
  %4721 = vmatpush.bf16.msra.mxu0 %v4598
  %4722 = vmatpush.bf16.msra.mxu0 %v4597
  %4723 = vmatpush.bf16.msra.mxu0 %v4596
  %4724 = vmatpush.bf16.msra.mxu0 %v4595
  %4725 = vmatpush.bf16.msra.mxu0 %v4594
  %4726 = vmatpush.bf16.msra.mxu0 %v4593
  %4727 = vmatpush.bf16.msra.mxu0 %v4592
  %4728 = vmatmul.bf16.gmra.mxu0 %v4196
  %v4729 = vpop.f32.mrf.mxu0
  %v4730 = vadd.f32 %v4334, %v4729
  %v4731 = vpop.f32.mrf.mxu0
  %4732 = vdwg.mxu0
  %4733 = vmatpush.bf16.msra.mxu0 %v4607
  %4734 = vmatpush.bf16.msra.mxu0 %v4606
  %4735 = vmatpush.bf16.msra.mxu0 %v4605
  %4736 = vmatpush.bf16.msra.mxu0 %v4604
  %4737 = vmatpush.bf16.msra.mxu0 %v4603
  %4738 = vmatpush.bf16.msra.mxu0 %v4602
  %4739 = vmatpush.bf16.msra.mxu0 %v4601
  %4740 = vmatpush.bf16.msra.mxu0 %v4600
  %4741 = vmatmul.bf16.gmra.mxu0 %v4197
  %v4742 = vpop.f32.mrf.mxu0
  %v4743 = vadd.f32 %v4730, %v4742
  %v4744 = vpop.f32.mrf.mxu0
  %4745 = vdwg.mxu0
  %4746 = vmatpush.bf16.msra.mxu0 %v4615
  %4747 = vmatpush.bf16.msra.mxu0 %v4614
  %4748 = vmatpush.bf16.msra.mxu0 %v4613
  %4749 = vmatpush.bf16.msra.mxu0 %v4612
  %4750 = vmatpush.bf16.msra.mxu0 %v4611
  %4751 = vmatpush.bf16.msra.mxu0 %v4610
  %4752 = vmatpush.bf16.msra.mxu0 %v4609
  %4753 = vmatpush.bf16.msra.mxu0 %v4608
  %4754 = vmatmul.bf16.gmra.mxu0 %v4198
  %v4755 = vpop.f32.mrf.mxu0
  %v4756 = vadd.f32 %v4743, %v4755
  %v4757 = vpop.f32.mrf.mxu0
  %4758 = vdwg.mxu0
  %4759 = vmatpush.bf16.msra.mxu0 %v4623
  %4760 = vmatpush.bf16.msra.mxu0 %v4622
  %4761 = vmatpush.bf16.msra.mxu0 %v4621
  %4762 = vmatpush.bf16.msra.mxu0 %v4620
  %4763 = vmatpush.bf16.msra.mxu0 %v4619
  %4764 = vmatpush.bf16.msra.mxu0 %v4618
  %4765 = vmatpush.bf16.msra.mxu0 %v4617
  %4766 = vmatpush.bf16.msra.mxu0 %v4616
  %4767 = vmatmul.bf16.gmra.mxu0 %v4199
  %v4768 = vpop.f32.mrf.mxu0
  %v4769 = vadd.f32 %v4756, %v4768
  %v4770 = vpop.f32.mrf.mxu0
  %4771 = vdwg.mxu0
  %4772 = vmatpush.bf16.msra.mxu0 %v4631
  %4773 = vmatpush.bf16.msra.mxu0 %v4630
  %4774 = vmatpush.bf16.msra.mxu0 %v4629
  %4775 = vmatpush.bf16.msra.mxu0 %v4628
  %4776 = vmatpush.bf16.msra.mxu0 %v4627
  %4777 = vmatpush.bf16.msra.mxu0 %v4626
  %4778 = vmatpush.bf16.msra.mxu0 %v4625
  %4779 = vmatpush.bf16.msra.mxu0 %v4624
  %4780 = vmatmul.bf16.gmra.mxu0 %v4200
  %v4781 = vpop.f32.mrf.mxu0
  %v4782 = vadd.f32 %v4769, %v4781
  %v4783 = vpop.f32.mrf.mxu0
  %4784 = vdwg.mxu0
  %4785 = vmatpush.bf16.msra.mxu0 %v4639
  %4786 = vmatpush.bf16.msra.mxu0 %v4638
  %4787 = vmatpush.bf16.msra.mxu0 %v4637
  %4788 = vmatpush.bf16.msra.mxu0 %v4636
  %4789 = vmatpush.bf16.msra.mxu0 %v4635
  %4790 = vmatpush.bf16.msra.mxu0 %v4634
  %4791 = vmatpush.bf16.msra.mxu0 %v4633
  %4792 = vmatpush.bf16.msra.mxu0 %v4632
  %4793 = vmatmul.bf16.gmra.mxu0 %v4201
  %v4794 = vpop.f32.mrf.mxu0
  %v4795 = vadd.f32 %v4782, %v4794
  %v4796 = vpop.f32.mrf.mxu0
  %4797 = vdwg.mxu0
  %4798 = vmatpush.bf16.msra.mxu0 %v4647
  %4799 = vmatpush.bf16.msra.mxu0 %v4646
  %4800 = vmatpush.bf16.msra.mxu0 %v4645
  %4801 = vmatpush.bf16.msra.mxu0 %v4644
  %4802 = vmatpush.bf16.msra.mxu0 %v4643
  %4803 = vmatpush.bf16.msra.mxu0 %v4642
  %4804 = vmatpush.bf16.msra.mxu0 %v4641
  %4805 = vmatpush.bf16.msra.mxu0 %v4640
  %4806 = vmatmul.bf16.gmra.mxu0 %v4202
  %v4807 = vpop.f32.mrf.mxu0
  %v4808 = vadd.f32 %v4795, %v4807
  %v4809 = vpop.f32.mrf.mxu0
  %4810 = vdwg.mxu0
  %4811 = vmatpush.bf16.msra.mxu0 %v4655
  %4812 = vmatpush.bf16.msra.mxu0 %v4654
  %4813 = vmatpush.bf16.msra.mxu0 %v4653
  %4814 = vmatpush.bf16.msra.mxu0 %v4652
  %4815 = vmatpush.bf16.msra.mxu0 %v4651
  %4816 = vmatpush.bf16.msra.mxu0 %v4650
  %4817 = vmatpush.bf16.msra.mxu0 %v4649
  %4818 = vmatpush.bf16.msra.mxu0 %v4648
  %4819 = vmatmul.bf16.gmra.mxu0 %v4203
  %v4820 = vpop.f32.mrf.mxu0
  %v4821 = vadd.f32 %v4808, %v4820
  %v4822 = vpop.f32.mrf.mxu0
  %4823 = vdwg.mxu0
  %4824 = vmax.xlane.f32.xlu0 %v4821
  %v4825 = vpop.xlane.xlu0 %4824
  %v4826 = vmax.f32 %v4825, 0.0
  %v4827 = vsub.f32 %v4821, %v4826
  %v4828 = vmul.f32 %v4827, 1.442695
  %v4829 = vpow.pop %v4828
  %4830 = vadd.xlane.f32.xlu0 %v4829
  %v4831 = vpop.xlane.xlu0 %4830
  %v4832 = vsub.f32 0.0, %v4826
  %v4833 = vmul.f32 %v4832, 1.442695
  %v4834 = vpow.pop %v4833
  %v4835 = vmul.f32 %v4834, 16.0
  %v4836 = vadd.f32 %v4831, %v4835
  %v4837 = vrcp.pop %v4836
  %v4838 = vmul.f32 %v4829, %v4837
  %4839 = vst [vmem:[%s7] sm:$0xff] %v4838
  // Predicated region
  $region30: #{classifier_auxiliary_forward.1} parent=0 // pred_check
    _
  $region31: #{classifier_auxiliary_forward.1} parent=0 // pred_check_branch
    %4841 = sbr.rel (0) target = $region33
  $region32: #{classifier_auxiliary_forward.1} parent=0 // pred_region
    _
  $region33: #{classifier_auxiliary_forward.1} parent=0 // pred_fallthru
    _
  // Predicated region
  $region34: #{classifier_auxiliary_forward.1} parent=0 // pred_check
    _
  $region35: #{classifier_auxiliary_forward.1} parent=0 // pred_check_branch
    %4843 = sbr.rel (0) target = $region37
  $region36: #{classifier_auxiliary_forward.1} parent=0 // pred_region
    _
  $region37: #{classifier_auxiliary_forward.1} parent=0 // pred_fallthru
    _

</llo_original>
